<compile_context>
chip_gen: v7x
topology: tpu7x:2x2x1
jax: 0.10.0
libtpu: 0.0.40
codegen_flags: <defaults>
</compile_context>

<pallas_src>
import functools
import math

import jax
import jax.numpy as jnp
from jax import lax
from jax.experimental import pallas as pl
from jax.experimental.pallas import tpu as pltpu

num_v = int(1558 / 2)   # 779
VOXEL = 0.005


def _round_up(x, m):
    return (x + m - 1) // m * m


# ----------------------------------------------------------------------------------
# Pallas kernel 1: plane-windowed dense 3x3x3 convolution, padding=1, no bias,
# channel-last.  The wrapper packs the 3 depth taps into the channel dim (K=3*Cin)
# and the kernel accumulates the 9 in-plane taps (static row offsets) into a local
# f32 accumulator, storing each output plane exactly once.
# ----------------------------------------------------------------------------------
def _conv_plane_kernel(x_ref, w_ref, o_ref, *, taps, out_rows):
    acc = jnp.zeros(o_ref.shape, jnp.float32)
    for t, off in enumerate(taps):
        a = x_ref[off:off + out_rows, :]                       # (out_rows, 3*Cin) bf16
        acc = acc + jnp.dot(a, w_ref[t], preferred_element_type=jnp.float32)
    o_ref[...] = acc                                           # single store per tile


def conv3d_plane(x, w9, stride=1):
    """Dense 3-D conv, kernel 3, padding 1, no bias.

    x:  (D, H, W, Cin) float, channel-last.
    w9: (9, 3*Cin, Cout) bf16 with w9[kh*3+kw, kd*Cin+ci, co] = w_torch[co,ci,kd,kh,kw].
    Returns y: (Do, Ho, Wo, Cout) f32 (Do=ceil(D/stride) etc.).
    """
    D, H, W, cin = (int(s) for s in x.shape)
    cout = int(w9.shape[-1])
    s = stride
    Do, Ho, Wo = (-(-D // s), -(-H // s), -(-W // s))
    Dp, Hp, Wp = D + 2, H + 2, W + 2
    hpwp = Hp * Wp
    out_rows = _round_up(s * Ho * Wp, 16)
    ppl = _round_up(out_rows + 2 * Wp + 2, 16)

    # bf16 padded volume; pack kd taps into the channel dim (one entry per output plane)
    xp = jnp.pad(x.astype(jnp.bfloat16), ((1, 1), (1, 1), (1, 1), (0, 0)))
    xq = xp.reshape(Dp, hpwp, cin)
    xe = jnp.concatenate(
        [xq[kd: kd + s * (Do - 1) + 1: s] for kd in range(3)], axis=-1)   # (Do, HpWp, 3Cin)
    xe = jnp.pad(xe, ((0, 0), (0, ppl - hpwp), (0, 0)))

    taps = tuple(kh * Wp + kw for kh in range(3) for kw in range(3))

    y = pl.pallas_call(
        functools.partial(_conv_plane_kernel, taps=taps, out_rows=out_rows),
        out_shape=jax.ShapeDtypeStruct((Do, out_rows, cout), jnp.float32),
        grid_spec=pltpu.PrefetchScalarGridSpec(
            num_scalar_prefetch=0,
            grid=(Do,),
            in_specs=[
                pl.BlockSpec((None, ppl, 3 * cin), lambda d: (d, 0, 0)),
                pl.BlockSpec((9, 3 * cin, cout), lambda d: (0, 0, 0)),
            ],
            out_specs=pl.BlockSpec((None, out_rows, cout), lambda d: (d, 0, 0)),
        ),
        compiler_params=pltpu.CompilerParams(
            dimension_semantics=("parallel",)),
    )(xe, w9)

    # crop dense corner rows to the valid (strided) output lattice
    yv = y[:, :s * Ho * Wp, :].reshape(Do, s * Ho, Wp, cout)
    yv = yv[:, ::s, ::s, :][:, :, :Wo, :]
    return yv


# ----------------------------------------------------------------------------------
# spconv emulation glue: active-voxel masking + BatchNorm over active voxels + ReLU
# ----------------------------------------------------------------------------------
def downsample_mask(mask):
    # SparseConv3d(k=3, stride=2, pad=1): output site active if any input in window.
    m = lax.reduce_window(mask[..., 0], -jnp.inf, lax.max,
                          window_dimensions=(3, 3, 3), window_strides=(2, 2, 2),
                          padding=((1, 1), (1, 1), (1, 1)))
    return (m > 0.5).astype(jnp.float32)[..., None]


def bn_relu_masked(y, mask, gamma, beta, eps=1e-3):
    # TODO(synk): training-mode BatchNorm1d batch statistics over active voxels;
    # eval-mode running statistics are not modeled.
    n = jnp.maximum(jnp.sum(mask), 1.0)
    mean = jnp.sum(y * mask, axis=(0, 1, 2)) / n
    var = jnp.sum(mask * jnp.square(y - mean), axis=(0, 1, 2)) / n
    out = (y - mean) * lax.rsqrt(var + eps) * gamma + beta
    return jnp.maximum(out, 0.0) * mask


# ----------------------------------------------------------------------------------
# Pallas kernel 2: row/col tiled matmul + bias (+ optional fused activation), bf16 MXU
# ----------------------------------------------------------------------------------
def _mm_kernel(a_ref, w_ref, b_ref, o_ref, *, act):
    acc = jnp.dot(a_ref[...], w_ref[...], preferred_element_type=jnp.float32)
    acc = acc + b_ref[...]
    if act == "relu":
        acc = jnp.maximum(acc, 0.0)
    elif act == "sigmoid":
        acc = jax.nn.sigmoid(acc)
    o_ref[...] = acc


def pallas_matmul(a, w, b=None, act=None):
    """a:(M,K) @ w:(K,N) + b on the MXU (bf16 inputs, f32 accumulation)."""
    a = a.astype(jnp.bfloat16)
    w = w.astype(jnp.bfloat16)
    M, K = a.shape
    K2, N = w.shape
    assert K == K2
    if b is None:
        b = jnp.zeros((N,), jnp.float32)
    b = b.astype(jnp.float32)

    TM = min(1024, _round_up(M, 8))
    Mp = _round_up(M, TM)
    if N <= 256:
        TN, Np = N, N                      # full-width N block: no dead-lane HBM writes
    else:
        TN, Np = 128, _round_up(N, 128)

    a_p = a if Mp == M else jnp.pad(a, ((0, Mp - M), (0, 0)))
    w_p = w if Np == N else jnp.pad(w, ((0, 0), (0, Np - N)))
    b_p = b.reshape(1, N)
    if Np != N:
        b_p = jnp.pad(b_p, ((0, 0), (0, Np - N)))

    out = pl.pallas_call(
        functools.partial(_mm_kernel, act=act),
        out_shape=jax.ShapeDtypeStruct((Mp, Np), jnp.float32),
        grid_spec=pltpu.PrefetchScalarGridSpec(
            num_scalar_prefetch=0,
            grid=(Mp // TM, Np // TN),
            in_specs=[
                pl.BlockSpec((TM, K), lambda i, j: (i, 0)),
                pl.BlockSpec((K, TN), lambda i, j: (0, j)),
                pl.BlockSpec((1, TN), lambda i, j: (0, j)),
            ],
            out_specs=pl.BlockSpec((TM, TN), lambda i, j: (i, j)),
        ),
        compiler_params=pltpu.CompilerParams(
            dimension_semantics=("parallel", "parallel")),
    )(a_p, w_p, b_p)
    if Mp != M or Np != N:
        out = out[:M, :N]
    return out


# ----------------------------------------------------------------------------------
# Pallas kernel 3: row-wise LayerNorm over the last dim (+ affine, optional ReLU)
# ----------------------------------------------------------------------------------
def _ln_kernel(x_ref, g_ref, b_ref, o_ref, *, eps, relu):
    x = x_ref[...]
    mu = jnp.mean(x, axis=-1, keepdims=True)
    xc = x - mu
    var = jnp.mean(xc * xc, axis=-1, keepdims=True)
    y = xc * lax.rsqrt(var + eps) * g_ref[...] + b_ref[...]
    if relu:
        y = jnp.maximum(y, 0.0)
    o_ref[...] = y


def pallas_layernorm(x, gamma, beta, eps=1e-6, relu=False):
    x = x.astype(jnp.float32)
    R, F = x.shape
    if F >= 8192:
        TR = 8
    elif R >= 256:
        TR = 256
    else:
        TR = _round_up(R, 8)
    Rp = _round_up(R, TR)
    x_p = x if Rp == R else jnp.pad(x, ((0, Rp - R), (0, 0)))
    g = gamma.reshape(1, F).astype(jnp.float32)
    b = beta.reshape(1, F).astype(jnp.float32)

    out = pl.pallas_call(
        functools.partial(_ln_kernel, eps=eps, relu=relu),
        out_shape=jax.ShapeDtypeStruct((Rp, F), jnp.float32),
        grid_spec=pltpu.PrefetchScalarGridSpec(
            num_scalar_prefetch=0,
            grid=(Rp // TR,),
            in_specs=[
                pl.BlockSpec((TR, F), lambda i: (i, 0)),
                pl.BlockSpec((1, F), lambda i: (0, 0)),
                pl.BlockSpec((1, F), lambda i: (0, 0)),
            ],
            out_specs=pl.BlockSpec((TR, F), lambda i: (i, 0)),
        ),
        compiler_params=pltpu.CompilerParams(dimension_semantics=("parallel",)),
    )(x_p, g, b)
    return out[:R]


# ----------------------------------------------------------------------------------
# Pallas kernel 4: 1-nearest-neighbour (KNN with K=1) over vertices
# ----------------------------------------------------------------------------------
def _knn_kernel(q_ref, vt_ref, o_ref):
    q = q_ref[...]          # (TQ, 3)
    vt = vt_ref[...]        # (3, Mp)
    d = jnp.zeros((q.shape[0], vt.shape[1]), jnp.float32)
    for c in range(3):
        diff = q[:, c:c + 1] - vt[c:c + 1, :]
        d = d + diff * diff
    mind = jnp.min(d, axis=-1, keepdims=True)
    ii = lax.broadcasted_iota(jnp.int32, d.shape, 1)
    idx = jnp.min(jnp.where(d <= mind, ii, jnp.int32(2 ** 30)), axis=-1)
    o_ref[...] = idx[:, None]


def pallas_knn1(query, verts):
    Nq = query.shape[0]
    Nv = verts.shape[0]
    TQ = 256 if Nq >= 256 else _round_up(Nq, 8)
    Nqp = _round_up(Nq, TQ)
    Mp = _round_up(Nv, 128)
    q_p = jnp.pad(query.astype(jnp.float32), ((0, Nqp - Nq), (0, 0)))
    v_p = jnp.full((Mp, 3), 1e6, jnp.float32).at[:Nv].set(verts.astype(jnp.float32))
    vt = v_p.T

    out = pl.pallas_call(
        _knn_kernel,
        out_shape=jax.ShapeDtypeStruct((Nqp, 1), jnp.int32),
        grid_spec=pltpu.PrefetchScalarGridSpec(
            num_scalar_prefetch=0,
            grid=(Nqp // TQ,),
            in_specs=[
                pl.BlockSpec((TQ, 3), lambda i: (i, 0)),
                pl.BlockSpec((3, Mp), lambda i: (0, 0)),
            ],
            out_specs=pl.BlockSpec((TQ, 1), lambda i: (i, 0)),
        ),
        compiler_params=pltpu.CompilerParams(dimension_semantics=("parallel",)),
    )(q_p, vt)
    return out[:Nq, 0]


# ----------------------------------------------------------------------------------
# Small convolutions as im2col (bf16) + Pallas matmul
# ----------------------------------------------------------------------------------
def conv2d_3x3(x, w_mat, b, act=None):
    # TODO(synk): could be fused into a 2-D flat-conv Pallas kernel to avoid the im2col.
    B, Cin, H, W = x.shape
    Cout = w_mat.shape[1]
    xp = jnp.pad(x.astype(jnp.bfloat16), ((0, 0), (0, 0), (1, 1), (1, 1)))
    cols = jnp.stack([xp[:, :, kh:kh + H, kw:kw + W]
                      for kh in range(3) for kw in range(3)], axis=-1)
    cols = cols.transpose(0, 2, 3, 1, 4).reshape(B * H * W, Cin * 9)
    out = pallas_matmul(cols, w_mat, b, act=act)
    return out.reshape(B, H, W, Cout).transpose(0, 3, 1, 2)


def conv1d_3(x, w_mat, b, act=None):
    B, Cin, L = x.shape
    Cout = w_mat.shape[1]
    xp = jnp.pad(x.astype(jnp.bfloat16), ((0, 0), (0, 0), (1, 1)))
    cols = jnp.stack([xp[:, :, k:k + L] for k in range(3)], axis=-1)
    cols = cols.transpose(0, 2, 1, 3).reshape(B * L, Cin * 3)
    out = pallas_matmul(cols, w_mat, b, act=act)
    return out.reshape(B, L, Cout).transpose(0, 2, 1)


# ----------------------------------------------------------------------------------
# Sampling / pooling glue (gather-heavy, plain JAX)
# ----------------------------------------------------------------------------------
def feat_sample(fmap, xy):
    # TODO(synk): external `feat_sample` reproduced as bilinear grid_sample
    # (align_corners=True, zeros padding), returning (B, N, C).
    B, C, H, W = fmap.shape

    def one(fm, uv):
        x = (uv[:, 0] + 1.0) * 0.5 * (W - 1)
        y = (uv[:, 1] + 1.0) * 0.5 * (H - 1)
        x0 = jnp.floor(x)
        y0 = jnp.floor(y)
        wx1 = x - x0
        wy1 = y - y0
        wx0 = 1.0 - wx1
        wy0 = 1.0 - wy1

        def gather(yy, xx):
            inb = (yy >= 0) & (yy <= H - 1) & (xx >= 0) & (xx <= W - 1)
            yc = jnp.clip(yy, 0, H - 1).astype(jnp.int32)
            xc = jnp.clip(xx, 0, W - 1).astype(jnp.int32)
            return fm[:, yc, xc] * inb.astype(fm.dtype)[None, :]

        out = (gather(y0, x0) * (wy0 * wx0)[None]
               + gather(y0, x0 + 1) * (wy0 * wx1)[None]
               + gather(y0 + 1, x0) * (wy1 * wx0)[None]
               + gather(y0 + 1, x0 + 1) * (wy1 * wx1)[None])
        return out.T

    return jax.vmap(one)(fmap, xy)


def grid_sample_3d_points(vol, g):
    # vol (D,H,W,C) channel-last; g (N,3) xyz in [-1,1]; align_corners=True, zeros pad
    D, H, W, C = vol.shape
    x = (g[:, 0] + 1.0) * 0.5 * (W - 1)
    y = (g[:, 1] + 1.0) * 0.5 * (H - 1)
    z = (g[:, 2] + 1.0) * 0.5 * (D - 1)
    x0, y0, z0 = jnp.floor(x), jnp.floor(y), jnp.floor(z)

    def gather(zz, yy, xx):
        inb = ((zz >= 0) & (zz <= D - 1) & (yy >= 0) & (yy <= H - 1)
               & (xx >= 0) & (xx <= W - 1))
        zc = jnp.clip(zz, 0, D - 1).astype(jnp.int32)
        yc = jnp.clip(yy, 0, H - 1).astype(jnp.int32)
        xc = jnp.clip(xx, 0, W - 1).astype(jnp.int32)
        return vol[zc, yc, xc] * inb.astype(vol.dtype)[:, None]

    out = jnp.zeros((g.shape[0], C), jnp.float32)
    for dz in (0, 1):
        wz = (z - z0) if dz else (1.0 - (z - z0))
        for dy in (0, 1):
            wy = (y - y0) if dy else (1.0 - (y - y0))
            for dx in (0, 1):
                wx = (x - x0) if dx else (1.0 - (x - x0))
                out = out + gather(z0 + dz, y0 + dy, x0 + dx) * (wz * wy * wx)[:, None]
    return out  # (N, C)


def adaptive_avg_pool_3(x):
    B, C, H, W = x.shape

    def bins(S):
        return [(int(math.floor(i * S / 3)), int(math.ceil((i + 1) * S / 3)))
                for i in range(3)]

    hb, wb = bins(H), bins(W)
    rows = []
    for (h0, h1) in hb:
        row = [jnp.mean(x[:, :, h0:h1, w0:w1], axis=(2, 3)) for (w0, w1) in wb]
        rows.append(jnp.stack(row, axis=-1))
    return jnp.stack(rows, axis=-2)  # (B, C, 3, 3)


def get_grid_coords(pts, bounds, out_sh):
    dhw = pts[..., jnp.array([2, 1, 0])]
    min_dhw = bounds[:, 0][:, jnp.array([2, 1, 0])]
    dhw = dhw - min_dhw[:, None, :]
    dhw = dhw / VOXEL
    dhw = dhw / jnp.array(out_sh, jnp.float32) * 2.0 - 1.0
    return dhw[..., jnp.array([2, 1, 0])]


# ----------------------------------------------------------------------------------
# SparseConvNet: dense masked emulation of spconv SubMConv3d / SparseConv3d
# ----------------------------------------------------------------------------------
def sparse_conv_net(p, feats, coord, out_sh, v, bounds):
    # TODO(synk): spconv rulebook gather/scatter emulated by dense convs with an
    # active-voxel mask (outputs restricted to the active set; BN uses active stats).
    D, H, W = out_sh
    C = feats.shape[1]
    vol = jnp.zeros((D, H, W, C), jnp.float32)
    vol = vol.at[coord[:, 1], coord[:, 2], coord[:, 3], :].set(feats)
    mask = jnp.zeros((D, H, W, 1), jnp.float32)
    mask = mask.at[coord[:, 1], coord[:, 2], coord[:, 3], :].set(1.0)

    def sub(x, m, convs):
        for (w, g, b) in convs:
            x = bn_relu_masked(conv3d_plane(x, w, stride=1), m, g, b)
        return x

    def down(x, m, conv):
        w, g, b = conv
        m2 = downsample_mask(m)
        return bn_relu_masked(conv3d_plane(x, w, stride=2), m2, g, b), m2

    net = sub(vol, mask, p['conv0'])
    net, mask = down(net, mask, p['down0'])
    net = sub(net, mask, p['conv1'])
    net1 = net
    net, mask = down(net, mask, p['down1'])
    net = sub(net, mask, p['conv2'])
    net2 = net
    net, mask = down(net, mask, p['down2'])
    net = sub(net, mask, p['conv3'])
    net3 = net
    net, mask = down(net, mask, p['down3'])
    net = sub(net, mask, p['conv4'])
    net4 = net

    grid = get_grid_coords(v, bounds, out_sh)  # (B, Nq, 3)
    feats_list = []
    for vk in (net1, net2, net3, net4):
        f = jax.vmap(lambda g, _vk=vk: grid_sample_3d_points(_vk, g))(grid)  # (B,Nq,Ck)
        feats_list.append(f)
    return jnp.concatenate(feats_list, axis=-1)  # (B, Nq, 122)


# ----------------------------------------------------------------------------------
# Heads
# ----------------------------------------------------------------------------------
def mlp_head(pm, x2d, out_act):
    h = pallas_matmul(x2d, pm['w1'], pm['b1'])
    h = pallas_layernorm(h, pm['g'], pm['be'], eps=1e-6, relu=True)
    return pallas_matmul(h, pm['w2'], pm['b2'], act=out_act)


def conv_ln_relu_2d(x, w, b, g, be):
    h = conv2d_3x3(x, w, b)
    B, C, H, W = h.shape
    h = pallas_layernorm(h.reshape(B * C, H * W), g, be, eps=1e-6, relu=True)
    return h.reshape(B, C, H, W)


# ----------------------------------------------------------------------------------
# Full forward
# ----------------------------------------------------------------------------------
def tex_vis_fusion_forward(params, vert_xy, ft1, ft_xy, vert, v, vert_vis, query_vis,
                           img_xy, img_fmap, latent_fused, coord, out_sh, bounds):
    B = vert_xy.shape[0]

    vert_feat = feat_sample(ft1, vert_xy)
    vert_img_feat = feat_sample(img_fmap, vert_xy)
    vert_feat = jnp.concatenate([vert_img_feat, vert_feat], axis=2)

    p = params['fconv3']
    h = conv_ln_relu_2d(ft1, p['w1'], p['b1'], p['g1'], p['be1'])
    h = conv_ln_relu_2d(h, p['w2'], p['b2'], p['g2'], p['be2'])
    gf = adaptive_avg_pool_3(h).reshape(B, 42, -1)            # (B, 42, 9)

    p = params['fconv4']
    h = conv_ln_relu_2d(img_fmap, p['w1'], p['b1'], p['g1'], p['be1'])
    h = conv_ln_relu_2d(h, p['w2'], p['b2'], p['g2'], p['be2'])
    gf_img = adaptive_avg_pool_3(h).reshape(B, 42, -1)        # (B, 42, 9)

    gf = jnp.concatenate([gf_img, gf], axis=-1)               # (B, 42, 18)

    p = params['fconv_gt']
    h = conv1d_3(gf, p['w1'], p['b1'])                        # (B, 779, 18)
    Bc, Cc, L = h.shape
    h = pallas_layernorm(h.reshape(Bc * Cc, L), p['g1'], p['be1'], 1e-6, True).reshape(Bc, Cc, L)
    h = conv1d_3(h, p['w2'], p['b2'])                         # (B, 1558, 18)
    Bc, Cc, L = h.shape
    gf_vert_feat = pallas_layernorm(h.reshape(Bc * Cc, L), p['g2'], p['be2'], 1e-6,
                                    True).reshape(Bc, Cc, L)

    vert_feat = jnp.concatenate([vert_feat, gf_vert_feat], axis=2)   # (B, 1558, 29)

    xyzc_feature = sparse_conv_net(params['xyzc'], vert_feat[0], coord, out_sh, v, bounds)
    # (B, Nq, 122)

    nn_idx = pallas_knn1(v[0], vert[0])
    vert_feat_toh = jnp.concatenate([vert_feat[:, num_v:], vert_feat[:, :num_v]], axis=1)
    vert_vis_toh = jnp.concatenate([vert_vis[:, num_v:], vert_vis[:, :num_v]], axis=1)
    vert_feat_knn = vert_feat[:, nn_idx]
    vert_feat_knn_toh = vert_feat_toh[:, nn_idx]
    vert_vis_th = vert_vis[:, nn_idx]
    vert_vis_toh_knn = vert_vis_toh[:, nn_idx]

    vert_feat_knn_gf = vert_feat_knn[:, :, 11:]
    vert_feat_knn_toh_gf = vert_feat_knn_toh[:, :, 11:]
    vert_feat_knn = vert_feat_knn[:, :, :11]
    vert_feat_knn_toh = vert_feat_knn_toh[:, :, :11]

    query_feat = jnp.concatenate([img_xy, ft_xy], axis=2)     # (B, Nq, 11)
    y_feat = jnp.concatenate([query_feat, vert_feat_knn, vert_feat_knn_toh,
                              vert_feat_knn_gf, vert_feat_knn_toh_gf,
                              xyzc_feature, latent_fused], axis=2)        # (B, Nq, 215)
    vis_feat = jnp.concatenate([query_vis, vert_vis_th, vert_vis_toh_knn], axis=2)

    Bn, Nq, _ = y_feat.shape
    y_at = mlp_head(params['linear_at'], y_feat.reshape(Bn * Nq, -1), 'sigmoid').reshape(Bn, Nq, 7)
    vis_at = mlp_head(params['linear_vis_at'],
                      vis_feat.reshape(Bn * Nq, -1).astype(jnp.float32),
                      'sigmoid').reshape(Bn, Nq, 7)
    y_at = y_at * vis_at

    y_ated = jnp.concatenate([
        query_feat * y_at[:, :, 0:1],
        vert_feat_knn * y_at[:, :, 1:2],
        vert_feat_knn_toh * y_at[:, :, 2:3],
        vert_feat_knn_gf * y_at[:, :, 3:4],
        vert_feat_knn_toh_gf * y_at[:, :, 4:5],
        xyzc_feature * y_at[:, :, 5:6],
        latent_fused * y_at[:, :, 6:7]], axis=2)
    y_ated = jnp.concatenate([y_ated, query_vis, vert_vis_th, vert_vis_toh_knn], axis=2)

    out = mlp_head(params['linear'], y_ated.reshape(Bn * Nq, -1), None).reshape(Bn, Nq, -1)
    return out  # (B, Nq, 40)


# ----------------------------------------------------------------------------------
# Deterministic parameter init (PyTorch layouts) + one-time kernel-layout preparation
# ----------------------------------------------------------------------------------
def init_params(key):
    keys = iter(jax.random.split(key, 256))

    def nk():
        return next(keys)

    def linear_p(cin, cout):
        s = 1.0 / math.sqrt(cin)
        return (jax.random.uniform(nk(), (cin, cout), jnp.float32, -s, s),
                jax.random.uniform(nk(), (cout,), jnp.float32, -s, s))

    def conv_p(cout, cin, *ksz):
        fan = cin
        for k in ksz:
            fan *= k
        s = 1.0 / math.sqrt(fan)
        return (jax.random.uniform(nk(), (cout, cin) + tuple(ksz), jnp.float32, -s, s),
                jax.random.uniform(nk(), (cout,), jnp.float32, -s, s))

    def head(cin, hid, cout):
        w1, b1 = linear_p(cin, hid)
        w2, b2 = linear_p(hid, cout)
        return dict(w1=w1, b1=b1, g=jnp.ones((hid,), jnp.float32),
                    be=jnp.zeros((hid,), jnp.float32), w2=w2, b2=b2)

    params = {
        'linear': head(215 + 3, 96, 40),
        'linear_at': head(215, 96, 7),
        'linear_vis_at': head(3, 10, 7),
    }

    w1, b1 = conv_p(num_v, 42, 3)
    w2, b2 = conv_p(2 * num_v, num_v, 3)
    params['fconv_gt'] = dict(w1=w1, b1=b1, g1=jnp.ones((18,), jnp.float32),
                              be1=jnp.zeros((18,), jnp.float32),
                              w2=w2, b2=b2, g2=jnp.ones((18,), jnp.float32),
                              be2=jnp.zeros((18,), jnp.float32))

    w1, b1 = conv_p(21, 8, 3, 3)
    w2, b2 = conv_p(42, 21, 3, 3)
    params['fconv3'] = dict(w1=w1, b1=b1, g1=jnp.ones((64 * 64,), jnp.float32),
                            be1=jnp.zeros((64 * 64,), jnp.float32),
                            w2=w2, b2=b2, g2=jnp.ones((64 * 64,), jnp.float32),
                            be2=jnp.zeros((64 * 64,), jnp.float32))

    w1, b1 = conv_p(21, 3, 3, 3)
    w2, b2 = conv_p(42, 21, 3, 3)
    params['fconv4'] = dict(w1=w1, b1=b1, g1=jnp.ones((256 * 256,), jnp.float32),
                            be1=jnp.zeros((256 * 256,), jnp.float32),
                            w2=w2, b2=b2, g2=jnp.ones((256 * 256,), jnp.float32),
                            be2=jnp.zeros((256 * 256,), jnp.float32))

    def conv3d_bnrelu(cin, cout):
        w, _ = conv_p(cout, cin, 3, 3, 3)
        return (w, jnp.ones((cout,), jnp.float32), jnp.zeros((cout,), jnp.float32))

    def sub_stage(n, cin, cout):
        blocks, c = [], cin
        for _ in range(n):
            blocks.append(conv3d_bnrelu(c, cout))
            c = cout
        return blocks

    params['xyzc'] = dict(
        conv0=sub_stage(2, 29, 29), down0=conv3d_bnrelu(29, 29),
        conv1=sub_stage(2, 29, 29), down1=conv3d_bnrelu(29, 29),
        conv2=sub_stage(3, 29, 29), down2=conv3d_bnrelu(29, 32),
        conv3=sub_stage(3, 32, 32), down3=conv3d_bnrelu(32, 32),
        conv4=sub_stage(3, 32, 32),
    )
    return params


def prepare_params(p):
    """One-time conversion of PyTorch-layout weights into kernel-ready layouts."""
    def conv3d_w9(w):    # (Cout,Cin,3,3,3) -> (9, 3*Cin, Cout) bf16; kd packed into K
        cout, cin = int(w.shape[0]), int(w.shape[1])
        return jnp.transpose(w, (3, 4, 2, 1, 0)).reshape(9, 3 * cin, cout).astype(jnp.bfloat16)

    def conv_mat(w):     # (Cout, Cin, *k) -> (Cin*prod(k), Cout) bf16
        cout = w.shape[0]
        return jnp.transpose(w.reshape(cout, -1), (1, 0)).astype(jnp.bfloat16)

    q = {k: p[k] for k in ('linear', 'linear_at', 'linear_vis_at')}

    fg = p['fconv_gt']
    q['fconv_gt'] = dict(w1=conv_mat(fg['w1']), b1=fg['b1'], g1=fg['g1'], be1=fg['be1'],
                         w2=conv_mat(fg['w2']), b2=fg['b2'], g2=fg['g2'], be2=fg['be2'])
    for name in ('fconv3', 'fconv4'):
        f = p[name]
        q[name] = dict(w1=conv_mat(f['w1']), b1=f['b1'], g1=f['g1'], be1=f['be1'],
                       w2=conv_mat(f['w2']), b2=f['b2'], g2=f['g2'], be2=f['be2'])

    qx = {}
    for key, val in p['xyzc'].items():
        if isinstance(val, list):
            qx[key] = [(conv3d_w9(w), g, b) for (w, g, b) in val]
        else:
            w, g, b = val
            qx[key] = (conv3d_w9(w), g, b)
    q['xyzc'] = qx
    return q


# ----------------------------------------------------------------------------------
if __name__ == "__main__":
    key = jax.random.PRNGKey(0)
    kp, kd = jax.random.split(key)
    params = prepare_params(init_params(kp))

    B, Nq, Nv = 1, 256, 2 * num_v            # 1 batch, 256 query points, 1558 vertices
    out_sh = (32, 32, 32)                    # small voxel grid: 32 * 0.005 = 0.16m
    ks = jax.random.split(kd, 16)

    vert_xy = jax.random.uniform(ks[0], (B, Nv, 2), jnp.float32, -1.0, 1.0)
    ft1 = jax.random.normal(ks[1], (B, 8, 64, 64), jnp.float32)
    ft_xy = jax.random.normal(ks[2], (B, Nq, 8), jnp.float32)
    bounds = jnp.array([[[0.0, 0.0, 0.0], [0.16, 0.16, 0.16]]], jnp.float32)
    vert = jax.random.uniform(ks[3], (B, Nv, 3), jnp.float32, 0.0, 0.155)
    v = jax.random.uniform(ks[4], (B, Nq, 3), jnp.float32, 0.0, 0.155)
    vert_vis = (jax.random.uniform(ks[5], (B, Nv, 1)) > 0.5).astype(jnp.float32)
    query_vis = (jax.random.uniform(ks[6], (B, Nq, 1)) > 0.5).astype(jnp.float32)
    img_xy = jax.random.normal(ks[7], (B, Nq, 3), jnp.float32)
    img_fmap = jax.random.normal(ks[8], (B, 3, 256, 256), jnp.float32)
    latent_fused = jax.random.normal(ks[9], (B, Nq, 24), jnp.float32)

    # voxel coordinates (batch, d, h, w) for every vertex
    vert_dhw = vert[0][:, jnp.array([2, 1, 0])] - bounds[0, 0][jnp.array([2, 1, 0])]
    coord_dhw = jnp.clip(jnp.floor(vert_dhw / VOXEL), 0,
                         jnp.array(out_sh, jnp.float32) - 1).astype(jnp.int32)
    coord = jnp.concatenate([jnp.zeros((Nv, 1), jnp.int32), coord_dhw], axis=1)

    fwd = jax.jit(tex_vis_fusion_forward, static_argnums=(12,))
    out = fwd(params, vert_xy, ft1, ft_xy, vert, v, vert_vis, query_vis,
              img_xy, img_fmap, latent_fused, coord, out_sh, bounds)
    out = jax.block_until_ready(out)
    assert out.shape == (B, Nq, 40), out.shape
    assert bool(jnp.all(jnp.isfinite(out)))
    print("KERNEL_OK")
</pallas_src>

<mosaic_0001>
module attributes {stable_mosaic.version = 11 : i64} {
  func.func @_mm_kernel(%arg0: i32, %arg1: i32, %arg2: memref<1024x27xbf16, #tpu.memory_space<vmem>>, %arg3: memref<27x21xbf16, #tpu.memory_space<vmem>>, %arg4: memref<1x21xf32, #tpu.memory_space<vmem>>, %arg5: memref<1024x21xf32, #tpu.memory_space<vmem>>) attributes {dimension_semantics = [#tpu.dimension_semantics<parallel>, #tpu.dimension_semantics<parallel>], iteration_bounds = array<i64: 64, 1>, scalar_prefetch = 0 : i64, scratch_operands = 0 : i64, tpu.core_type = #tpu.core_type<tc>, window_params = [{transform_indices = @transform_0, window_bounds = array<i64: 1024, 27>}, {transform_indices = @transform_1, window_bounds = array<i64: 27, 21>}, {transform_indices = @transform_2, window_bounds = array<i64: 1, 21>}, {transform_indices = @transform_3, window_bounds = array<i64: 1024, 21>}]} {
    %c0 = arith.constant 0 : index
    %c0_0 = arith.constant 0 : index
    %0 = vector.load %arg2[%c0, %c0_0] : memref<1024x27xbf16, #tpu.memory_space<vmem>>, vector<1024x27xbf16>
    %c0_1 = arith.constant 0 : index
    %c0_2 = arith.constant 0 : index
    %1 = vector.load %arg3[%c0_1, %c0_2] : memref<27x21xbf16, #tpu.memory_space<vmem>>, vector<27x21xbf16>
    %cst = arith.constant dense<0.000000e+00> : vector<1024x21xf32>
    %2 = tpu.matmul %0, %1, %cst {dimension_numbers = #tpu.dot_dimension_numbers<[1], [0], [0], [1], [0, 0, 1, 1], [], []>} : vector<1024x27xbf16>, vector<27x21xbf16>, vector<1024x21xf32> -> vector<1024x21xf32>
    %c0_3 = arith.constant 0 : index
    %c0_4 = arith.constant 0 : index
    %3 = vector.load %arg4[%c0_3, %c0_4] : memref<1x21xf32, #tpu.memory_space<vmem>>, vector<1x21xf32>
    %4 = vector.broadcast %3 : vector<1x21xf32> to vector<1024x21xf32>
    %5 = arith.addf %2, %4 : vector<1024x21xf32>
    %c0_5 = arith.constant 0 : index
    %c0_6 = arith.constant 0 : index
    %6 = vector.load %arg5[%c0_5, %c0_6] : memref<1024x21xf32, #tpu.memory_space<vmem>>, vector<1024x21xf32>
    tpu.vector_store %arg5[%c0_5, %c0_6], %5 {strides = array<i32>} : memref<1024x21xf32, #tpu.memory_space<vmem>>, vector<1024x21xf32>,
    return
  }
  func.func @transform_0(%arg0: i32, %arg1: i32) -> (i32, i32) {
    %c0_i32 = arith.constant 0 : i32
    %c0_i32_0 = arith.constant 0 : i32
    return %arg0, %c0_i32 : i32, i32
  }
  func.func @transform_1(%arg0: i32, %arg1: i32) -> (i32, i32) {
    %c0_i32 = arith.constant 0 : i32
    %c0_i32_0 = arith.constant 0 : i32
    return %c0_i32, %arg1 : i32, i32
  }
  func.func @transform_2(%arg0: i32, %arg1: i32) -> (i32, i32) {
    %c0_i32 = arith.constant 0 : i32
    %c0_i32_0 = arith.constant 0 : i32
    return %c0_i32, %arg1 : i32, i32
  }
  func.func @transform_3(%arg0: i32, %arg1: i32) -> (i32, i32) {
    %c0_i32 = arith.constant 0 : i32
    return %arg0, %arg1 : i32, i32
  }
}

module attributes {stable_mosaic.version = 11 : i64} {
  func.func @_ln_kernel(%arg0: i32, %arg1: memref<8x65536xf32, #tpu.memory_space<vmem>>, %arg2: memref<1x65536xf32, #tpu.memory_space<vmem>>, %arg3: memref<1x65536xf32, #tpu.memory_space<vmem>>, %arg4: memref<8x65536xf32, #tpu.memory_space<vmem>>) attributes {dimension_semantics = [#tpu.dimension_semantics<parallel>], iteration_bounds = array<i64: 3>, scalar_prefetch = 0 : i64, scratch_operands = 0 : i64, tpu.core_type = #tpu.core_type<tc>, window_params = [{transform_indices = @transform_0, window_bounds = array<i64: 8, 65536>}, {pipeline_mode = #tpu.pipeline_mode<synchronous>, transform_indices = @transform_1, window_bounds = array<i64: 1, 65536>}, {pipeline_mode = #tpu.pipeline_mode<synchronous>, transform_indices = @transform_2, window_bounds = array<i64: 1, 65536>}, {transform_indices = @transform_3, window_bounds = array<i64: 8, 65536>}]} {
    %c0 = arith.constant 0 : index
    %c0_0 = arith.constant 0 : index
    %0 = vector.load %arg1[%c0, %c0_0] : memref<8x65536xf32, #tpu.memory_space<vmem>>, vector<8x65536xf32>
    %cst = arith.constant dense<0.000000e+00> : vector<8xf32>
    %1 = vector.multi_reduction <add>, %0, %cst [1] : vector<8x65536xf32> to vector<8xf32>
    %2 = vector.shape_cast %1 : vector<8xf32> to vector<8x1xf32>
    %cst_1 = arith.constant 6.553600e+04 : f32
    %3 = vector.broadcast %cst_1 : f32 to vector<8x1xf32>
    %4 = arith.divf %2, %3 : vector<8x1xf32>
    %5 = vector.broadcast %4 : vector<8x1xf32> to vector<8x65536xf32>
    %6 = arith.subf %0, %5 : vector<8x65536xf32>
    %7 = arith.mulf %6, %6 : vector<8x65536xf32>
    %cst_2 = arith.constant dense<0.000000e+00> : vector<8xf32>
    %8 = vector.multi_reduction <add>, %7, %cst_2 [1] : vector<8x65536xf32> to vector<8xf32>
    %9 = vector.shape_cast %8 : vector<8xf32> to vector<8x1xf32>
    %cst_3 = arith.constant 6.553600e+04 : f32
    %10 = vector.broadcast %cst_3 : f32 to vector<8x1xf32>
    %11 = arith.divf %9, %10 : vector<8x1xf32>
    %cst_4 = arith.constant 9.99999997E-7 : f32
    %12 = vector.broadcast %cst_4 : f32 to vector<8x1xf32>
    %13 = arith.addf %11, %12 : vector<8x1xf32>
    %14 = math.rsqrt %13 : vector<8x1xf32>
    %15 = vector.broadcast %14 : vector<8x1xf32> to vector<8x65536xf32>
    %16 = arith.mulf %6, %15 : vector<8x65536xf32>
    %c0_5 = arith.constant 0 : index
    %c0_6 = arith.constant 0 : index
    %17 = vector.load %arg2[%c0_5, %c0_6] : memref<1x65536xf32, #tpu.memory_space<vmem>>, vector<1x65536xf32>
    %18 = vector.broadcast %17 : vector<1x65536xf32> to vector<8x65536xf32>
    %19 = arith.mulf %16, %18 : vector<8x65536xf32>
    %c0_7 = arith.constant 0 : index
    %c0_8 = arith.constant 0 : index
    %20 = vector.load %arg3[%c0_7, %c0_8] : memref<1x65536xf32, #tpu.memory_space<vmem>>, vector<1x65536xf32>
    %21 = vector.broadcast %20 : vector<1x65536xf32> to vector<8x65536xf32>
    %22 = arith.addf %19, %21 : vector<8x65536xf32>
    %cst_9 = arith.constant 0.000000e+00 : f32
    %23 = vector.broadcast %cst_9 : f32 to vector<8x65536xf32>
    %24 = arith.maximumf %22, %23 : vector<8x65536xf32>
    %c0_10 = arith.constant 0 : index
    %c0_11 = arith.constant 0 : index
    %25 = vector.load %arg4[%c0_10, %c0_11] : memref<8x65536xf32, #tpu.memory_space<vmem>>, vector<8x65536xf32>
    tpu.vector_store %arg4[%c0_10, %c0_11], %24 {strides = array<i32>} : memref<8x65536xf32, #tpu.memory_space<vmem>>, vector<8x65536xf32>,
    return
  }
  func.func @transform_0(%arg0: i32) -> (i32, i32) {
    %c0_i32 = arith.constant 0 : i32
    %c0_i32_0 = arith.constant 0 : i32
    return %arg0, %c0_i32 : i32, i32
  }
  func.func @transform_1(%arg0: i32) -> (i32, i32) {
    %c0_i32 = arith.constant 0 : i32
    %c0_i32_0 = arith.constant 0 : i32
    %c0_i32_1 = arith.constant 0 : i32
    return %c0_i32, %c0_i32_0 : i32, i32
  }
  func.func @transform_2(%arg0: i32) -> (i32, i32) {
    %c0_i32 = arith.constant 0 : i32
    %c0_i32_0 = arith.constant 0 : i32
    %c0_i32_1 = arith.constant 0 : i32
    return %c0_i32, %c0_i32_0 : i32, i32
  }
  func.func @transform_3(%arg0: i32) -> (i32, i32) {
    %c0_i32 = arith.constant 0 : i32
    %c0_i32_0 = arith.constant 0 : i32
    return %arg0, %c0_i32 : i32, i32
  }
}

module attributes {stable_mosaic.version = 11 : i64} {
  func.func @_mm_kernel(%arg0: i32, %arg1: i32, %arg2: memref<1024x189xbf16, #tpu.memory_space<vmem>>, %arg3: memref<189x42xbf16, #tpu.memory_space<vmem>>, %arg4: memref<1x42xf32, #tpu.memory_space<vmem>>, %arg5: memref<1024x42xf32, #tpu.memory_space<vmem>>) attributes {dimension_semantics = [#tpu.dimension_semantics<parallel>, #tpu.dimension_semantics<parallel>], iteration_bounds = array<i64: 64, 1>, scalar_prefetch = 0 : i64, scratch_operands = 0 : i64, tpu.core_type = #tpu.core_type<tc>, window_params = [{transform_indices = @transform_0, window_bounds = array<i64: 1024, 189>}, {transform_indices = @transform_1, window_bounds = array<i64: 189, 42>}, {transform_indices = @transform_2, window_bounds = array<i64: 1, 42>}, {transform_indices = @transform_3, window_bounds = array<i64: 1024, 42>}]} {
    %c0 = arith.constant 0 : index
    %c0_0 = arith.constant 0 : index
    %0 = vector.load %arg2[%c0, %c0_0] : memref<1024x189xbf16, #tpu.memory_space<vmem>>, vector<1024x189xbf16>
    %c0_1 = arith.constant 0 : index
    %c0_2 = arith.constant 0 : index
    %1 = vector.load %arg3[%c0_1, %c0_2] : memref<189x42xbf16, #tpu.memory_space<vmem>>, vector<189x42xbf16>
    %cst = arith.constant dense<0.000000e+00> : vector<1024x42xf32>
    %2 = tpu.matmul %0, %1, %cst {dimension_numbers = #tpu.dot_dimension_numbers<[1], [0], [0], [1], [0, 0, 1, 1], [], []>} : vector<1024x189xbf16>, vector<189x42xbf16>, vector<1024x42xf32> -> vector<1024x42xf32>
    %c0_3 = arith.constant 0 : index
    %c0_4 = arith.constant 0 : index
    %3 = vector.load %arg4[%c0_3, %c0_4] : memref<1x42xf32, #tpu.memory_space<vmem>>, vector<1x42xf32>
    %4 = vector.broadcast %3 : vector<1x42xf32> to vector<1024x42xf32>
    %5 = arith.addf %2, %4 : vector<1024x42xf32>
    %c0_5 = arith.constant 0 : index
    %c0_6 = arith.constant 0 : index
    %6 = vector.load %arg5[%c0_5, %c0_6] : memref<1024x42xf32, #tpu.memory_space<vmem>>, vector<1024x42xf32>
    tpu.vector_store %arg5[%c0_5, %c0_6], %5 {strides = array<i32>} : memref<1024x42xf32, #tpu.memory_space<vmem>>, vector<1024x42xf32>,
    return
  }
  func.func @transform_0(%arg0: i32, %arg1: i32) -> (i32, i32) {
    %c0_i32 = arith.constant 0 : i32
    %c0_i32_0 = arith.constant 0 : i32
    return %arg0, %c0_i32 : i32, i32
  }
  func.func @transform_1(%arg0: i32, %arg1: i32) -> (i32, i32) {
    %c0_i32 = arith.constant 0 : i32
    %c0_i32_0 = arith.constant 0 : i32
    return %c0_i32, %arg1 : i32, i32
  }
  func.func @transform_2(%arg0: i32, %arg1: i32) -> (i32, i32) {
    %c0_i32 = arith.constant 0 : i32
    %c0_i32_0 = arith.constant 0 : i32
    return %c0_i32, %arg1 : i32, i32
  }
  func.func @transform_3(%arg0: i32, %arg1: i32) -> (i32, i32) {
    %c0_i32 = arith.constant 0 : i32
    return %arg0, %arg1 : i32, i32
  }
}

module attributes {stable_mosaic.version = 11 : i64} {
  func.func @_ln_kernel(%arg0: i32, %arg1: memref<8x65536xf32, #tpu.memory_space<vmem>>, %arg2: memref<1x65536xf32, #tpu.memory_space<vmem>>, %arg3: memref<1x65536xf32, #tpu.memory_space<vmem>>, %arg4: memref<8x65536xf32, #tpu.memory_space<vmem>>) attributes {dimension_semantics = [#tpu.dimension_semantics<parallel>], iteration_bounds = array<i64: 6>, scalar_prefetch = 0 : i64, scratch_operands = 0 : i64, tpu.core_type = #tpu.core_type<tc>, window_params = [{transform_indices = @transform_0, window_bounds = array<i64: 8, 65536>}, {pipeline_mode = #tpu.pipeline_mode<synchronous>, transform_indices = @transform_1, window_bounds = array<i64: 1, 65536>}, {pipeline_mode = #tpu.pipeline_mode<synchronous>, transform_indices = @transform_2, window_bounds = array<i64: 1, 65536>}, {transform_indices = @transform_3, window_bounds = array<i64: 8, 65536>}]} {
    %c0 = arith.constant 0 : index
    %c0_0 = arith.constant 0 : index
    %0 = vector.load %arg1[%c0, %c0_0] : memref<8x65536xf32, #tpu.memory_space<vmem>>, vector<8x65536xf32>
    %cst = arith.constant dense<0.000000e+00> : vector<8xf32>
    %1 = vector.multi_reduction <add>, %0, %cst [1] : vector<8x65536xf32> to vector<8xf32>
    %2 = vector.shape_cast %1 : vector<8xf32> to vector<8x1xf32>
    %cst_1 = arith.constant 6.553600e+04 : f32
    %3 = vector.broadcast %cst_1 : f32 to vector<8x1xf32>
    %4 = arith.divf %2, %3 : vector<8x1xf32>
    %5 = vector.broadcast %4 : vector<8x1xf32> to vector<8x65536xf32>
    %6 = arith.subf %0, %5 : vector<8x65536xf32>
    %7 = arith.mulf %6, %6 : vector<8x65536xf32>
    %cst_2 = arith.constant dense<0.000000e+00> : vector<8xf32>
    %8 = vector.multi_reduction <add>, %7, %cst_2 [1] : vector<8x65536xf32> to vector<8xf32>
    %9 = vector.shape_cast %8 : vector<8xf32> to vector<8x1xf32>
    %cst_3 = arith.constant 6.553600e+04 : f32
    %10 = vector.broadcast %cst_3 : f32 to vector<8x1xf32>
    %11 = arith.divf %9, %10 : vector<8x1xf32>
    %cst_4 = arith.constant 9.99999997E-7 : f32
    %12 = vector.broadcast %cst_4 : f32 to vector<8x1xf32>
    %13 = arith.addf %11, %12 : vector<8x1xf32>
    %14 = math.rsqrt %13 : vector<8x1xf32>
    %15 = vector.broadcast %14 : vector<8x1xf32> to vector<8x65536xf32>
    %16 = arith.mulf %6, %15 : vector<8x65536xf32>
    %c0_5 = arith.constant 0 : index
    %c0_6 = arith.constant 0 : index
    %17 = vector.load %arg2[%c0_5, %c0_6] : memref<1x65536xf32, #tpu.memory_space<vmem>>, vector<1x65536xf32>
    %18 = vector.broadcast %17 : vector<1x65536xf32> to vector<8x65536xf32>
    %19 = arith.mulf %16, %18 : vector<8x65536xf32>
    %c0_7 = arith.constant 0 : index
    %c0_8 = arith.constant 0 : index
    %20 = vector.load %arg3[%c0_7, %c0_8] : memref<1x65536xf32, #tpu.memory_space<vmem>>, vector<1x65536xf32>
    %21 = vector.broadcast %20 : vector<1x65536xf32> to vector<8x65536xf32>
    %22 = arith.addf %19, %21 : vector<8x65536xf32>
    %cst_9 = arith.constant 0.000000e+00 : f32
    %23 = vector.broadcast %cst_9 : f32 to vector<8x65536xf32>
    %24 = arith.maximumf %22, %23 : vector<8x65536xf32>
    %c0_10 = arith.constant 0 : index
    %c0_11 = arith.constant 0 : index
    %25 = vector.load %arg4[%c0_10, %c0_11] : memref<8x65536xf32, #tpu.memory_space<vmem>>, vector<8x65536xf32>
    tpu.vector_store %arg4[%c0_10, %c0_11], %24 {strides = array<i32>} : memref<8x65536xf32, #tpu.memory_space<vmem>>, vector<8x65536xf32>,
    return
  }
  func.func @transform_0(%arg0: i32) -> (i32, i32) {
    %c0_i32 = arith.constant 0 : i32
    %c0_i32_0 = arith.constant 0 : i32
    return %arg0, %c0_i32 : i32, i32
  }
  func.func @transform_1(%arg0: i32) -> (i32, i32) {
    %c0_i32 = arith.constant 0 : i32
    %c0_i32_0 = arith.constant 0 : i32
    %c0_i32_1 = arith.constant 0 : i32
    return %c0_i32, %c0_i32_0 : i32, i32
  }
  func.func @transform_2(%arg0: i32) -> (i32, i32) {
    %c0_i32 = arith.constant 0 : i32
    %c0_i32_0 = arith.constant 0 : i32
    %c0_i32_1 = arith.constant 0 : i32
    return %c0_i32, %c0_i32_0 : i32, i32
  }
  func.func @transform_3(%arg0: i32) -> (i32, i32) {
    %c0_i32 = arith.constant 0 : i32
    %c0_i32_0 = arith.constant 0 : i32
    return %arg0, %c0_i32 : i32, i32
  }
}

module attributes {stable_mosaic.version = 11 : i64} {
  func.func @_mm_kernel(%arg0: i32, %arg1: i32, %arg2: memref<1024x72xbf16, #tpu.memory_space<vmem>>, %arg3: memref<72x21xbf16, #tpu.memory_space<vmem>>, %arg4: memref<1x21xf32, #tpu.memory_space<vmem>>, %arg5: memref<1024x21xf32, #tpu.memory_space<vmem>>) attributes {dimension_semantics = [#tpu.dimension_semantics<parallel>, #tpu.dimension_semantics<parallel>], iteration_bounds = array<i64: 4, 1>, scalar_prefetch = 0 : i64, scratch_operands = 0 : i64, tpu.core_type = #tpu.core_type<tc>, window_params = [{transform_indices = @transform_0, window_bounds = array<i64: 1024, 72>}, {transform_indices = @transform_1, window_bounds = array<i64: 72, 21>}, {transform_indices = @transform_2, window_bounds = array<i64: 1, 21>}, {transform_indices = @transform_3, window_bounds = array<i64: 1024, 21>}]} {
    %c0 = arith.constant 0 : index
    %c0_0 = arith.constant 0 : index
    %0 = vector.load %arg2[%c0, %c0_0] : memref<1024x72xbf16, #tpu.memory_space<vmem>>, vector<1024x72xbf16>
    %c0_1 = arith.constant 0 : index
    %c0_2 = arith.constant 0 : index
    %1 = vector.load %arg3[%c0_1, %c0_2] : memref<72x21xbf16, #tpu.memory_space<vmem>>, vector<72x21xbf16>
    %cst = arith.constant dense<0.000000e+00> : vector<1024x21xf32>
    %2 = tpu.matmul %0, %1, %cst {dimension_numbers = #tpu.dot_dimension_numbers<[1], [0], [0], [1], [0, 0, 1, 1], [], []>} : vector<1024x72xbf16>, vector<72x21xbf16>, vector<1024x21xf32> -> vector<1024x21xf32>
    %c0_3 = arith.constant 0 : index
    %c0_4 = arith.constant 0 : index
    %3 = vector.load %arg4[%c0_3, %c0_4] : memref<1x21xf32, #tpu.memory_space<vmem>>, vector<1x21xf32>
    %4 = vector.broadcast %3 : vector<1x21xf32> to vector<1024x21xf32>
    %5 = arith.addf %2, %4 : vector<1024x21xf32>
    %c0_5 = arith.constant 0 : index
    %c0_6 = arith.constant 0 : index
    %6 = vector.load %arg5[%c0_5, %c0_6] : memref<1024x21xf32, #tpu.memory_space<vmem>>, vector<1024x21xf32>
    tpu.vector_store %arg5[%c0_5, %c0_6], %5 {strides = array<i32>} : memref<1024x21xf32, #tpu.memory_space<vmem>>, vector<1024x21xf32>,
    return
  }
  func.func @transform_0(%arg0: i32, %arg1: i32) -> (i32, i32) {
    %c0_i32 = arith.constant 0 : i32
    %c0_i32_0 = arith.constant 0 : i32
    return %arg0, %c0_i32 : i32, i32
  }
  func.func @transform_1(%arg0: i32, %arg1: i32) -> (i32, i32) {
    %c0_i32 = arith.constant 0 : i32
    %c0_i32_0 = arith.constant 0 : i32
    return %c0_i32, %arg1 : i32, i32
  }
  func.func @transform_2(%arg0: i32, %arg1: i32) -> (i32, i32) {
    %c0_i32 = arith.constant 0 : i32
    %c0_i32_0 = arith.constant 0 : i32
    return %c0_i32, %arg1 : i32, i32
  }
  func.func @transform_3(%arg0: i32, %arg1: i32) -> (i32, i32) {
    %c0_i32 = arith.constant 0 : i32
    return %arg0, %arg1 : i32, i32
  }
}

module attributes {stable_mosaic.version = 11 : i64} {
  func.func @_ln_kernel(%arg0: i32, %arg1: memref<24x4096xf32, #tpu.memory_space<vmem>>, %arg2: memref<1x4096xf32, #tpu.memory_space<vmem>>, %arg3: memref<1x4096xf32, #tpu.memory_space<vmem>>, %arg4: memref<24x4096xf32, #tpu.memory_space<vmem>>) attributes {dimension_semantics = [#tpu.dimension_semantics<parallel>], iteration_bounds = array<i64: 1>, scalar_prefetch = 0 : i64, scratch_operands = 0 : i64, tpu.core_type = #tpu.core_type<tc>, window_params = [{transform_indices = @transform_0, window_bounds = array<i64: 24, 4096>}, {pipeline_mode = #tpu.pipeline_mode<synchronous>, transform_indices = @transform_1, window_bounds = array<i64: 1, 4096>}, {pipeline_mode = #tpu.pipeline_mode<synchronous>, transform_indices = @transform_2, window_bounds = array<i64: 1, 4096>}, {transform_indices = @transform_3, window_bounds = array<i64: 24, 4096>}]} {
    %c0 = arith.constant 0 : index
    %c0_0 = arith.constant 0 : index
    %0 = vector.load %arg1[%c0, %c0_0] : memref<24x4096xf32, #tpu.memory_space<vmem>>, vector<24x4096xf32>
    %cst = arith.constant dense<0.000000e+00> : vector<24xf32>
    %1 = vector.multi_reduction <add>, %0, %cst [1] : vector<24x4096xf32> to vector<24xf32>
    %2 = vector.shape_cast %1 : vector<24xf32> to vector<24x1xf32>
    %cst_1 = arith.constant 4.096000e+03 : f32
    %3 = vector.broadcast %cst_1 : f32 to vector<24x1xf32>
    %4 = arith.divf %2, %3 : vector<24x1xf32>
    %5 = vector.broadcast %4 : vector<24x1xf32> to vector<24x4096xf32>
    %6 = arith.subf %0, %5 : vector<24x4096xf32>
    %7 = arith.mulf %6, %6 : vector<24x4096xf32>
    %cst_2 = arith.constant dense<0.000000e+00> : vector<24xf32>
    %8 = vector.multi_reduction <add>, %7, %cst_2 [1] : vector<24x4096xf32> to vector<24xf32>
    %9 = vector.shape_cast %8 : vector<24xf32> to vector<24x1xf32>
    %cst_3 = arith.constant 4.096000e+03 : f32
    %10 = vector.broadcast %cst_3 : f32 to vector<24x1xf32>
    %11 = arith.divf %9, %10 : vector<24x1xf32>
    %cst_4 = arith.constant 9.99999997E-7 : f32
    %12 = vector.broadcast %cst_4 : f32 to vector<24x1xf32>
    %13 = arith.addf %11, %12 : vector<24x1xf32>
    %14 = math.rsqrt %13 : vector<24x1xf32>
    %15 = vector.broadcast %14 : vector<24x1xf32> to vector<24x4096xf32>
    %16 = arith.mulf %6, %15 : vector<24x4096xf32>
    %c0_5 = arith.constant 0 : index
    %c0_6 = arith.constant 0 : index
    %17 = vector.load %arg2[%c0_5, %c0_6] : memref<1x4096xf32, #tpu.memory_space<vmem>>, vector<1x4096xf32>
    %18 = vector.broadcast %17 : vector<1x4096xf32> to vector<24x4096xf32>
    %19 = arith.mulf %16, %18 : vector<24x4096xf32>
    %c0_7 = arith.constant 0 : index
    %c0_8 = arith.constant 0 : index
    %20 = vector.load %arg3[%c0_7, %c0_8] : memref<1x4096xf32, #tpu.memory_space<vmem>>, vector<1x4096xf32>
    %21 = vector.broadcast %20 : vector<1x4096xf32> to vector<24x4096xf32>
    %22 = arith.addf %19, %21 : vector<24x4096xf32>
    %cst_9 = arith.constant 0.000000e+00 : f32
    %23 = vector.broadcast %cst_9 : f32 to vector<24x4096xf32>
    %24 = arith.maximumf %22, %23 : vector<24x4096xf32>
    %c0_10 = arith.constant 0 : index
    %c0_11 = arith.constant 0 : index
    %25 = vector.load %arg4[%c0_10, %c0_11] : memref<24x4096xf32, #tpu.memory_space<vmem>>, vector<24x4096xf32>
    tpu.vector_store %arg4[%c0_10, %c0_11], %24 {strides = array<i32>} : memref<24x4096xf32, #tpu.memory_space<vmem>>, vector<24x4096xf32>,
    return
  }
  func.func @transform_0(%arg0: i32) -> (i32, i32) {
    %c0_i32 = arith.constant 0 : i32
    %c0_i32_0 = arith.constant 0 : i32
    return %arg0, %c0_i32 : i32, i32
  }
  func.func @transform_1(%arg0: i32) -> (i32, i32) {
    %c0_i32 = arith.constant 0 : i32
    %c0_i32_0 = arith.constant 0 : i32
    %c0_i32_1 = arith.constant 0 : i32
    return %c0_i32, %c0_i32_0 : i32, i32
  }
  func.func @transform_2(%arg0: i32) -> (i32, i32) {
    %c0_i32 = arith.constant 0 : i32
    %c0_i32_0 = arith.constant 0 : i32
    %c0_i32_1 = arith.constant 0 : i32
    return %c0_i32, %c0_i32_0 : i32, i32
  }
  func.func @transform_3(%arg0: i32) -> (i32, i32) {
    %c0_i32 = arith.constant 0 : i32
    %c0_i32_0 = arith.constant 0 : i32
    return %arg0, %c0_i32 : i32, i32
  }
}

module attributes {stable_mosaic.version = 11 : i64} {
  func.func @_mm_kernel(%arg0: i32, %arg1: i32, %arg2: memref<1024x189xbf16, #tpu.memory_space<vmem>>, %arg3: memref<189x42xbf16, #tpu.memory_space<vmem>>, %arg4: memref<1x42xf32, #tpu.memory_space<vmem>>, %arg5: memref<1024x42xf32, #tpu.memory_space<vmem>>) attributes {dimension_semantics = [#tpu.dimension_semantics<parallel>, #tpu.dimension_semantics<parallel>], iteration_bounds = array<i64: 4, 1>, scalar_prefetch = 0 : i64, scratch_operands = 0 : i64, tpu.core_type = #tpu.core_type<tc>, window_params = [{transform_indices = @transform_0, window_bounds = array<i64: 1024, 189>}, {transform_indices = @transform_1, window_bounds = array<i64: 189, 42>}, {transform_indices = @transform_2, window_bounds = array<i64: 1, 42>}, {transform_indices = @transform_3, window_bounds = array<i64: 1024, 42>}]} {
    %c0 = arith.constant 0 : index
    %c0_0 = arith.constant 0 : index
    %0 = vector.load %arg2[%c0, %c0_0] : memref<1024x189xbf16, #tpu.memory_space<vmem>>, vector<1024x189xbf16>
    %c0_1 = arith.constant 0 : index
    %c0_2 = arith.constant 0 : index
    %1 = vector.load %arg3[%c0_1, %c0_2] : memref<189x42xbf16, #tpu.memory_space<vmem>>, vector<189x42xbf16>
    %cst = arith.constant dense<0.000000e+00> : vector<1024x42xf32>
    %2 = tpu.matmul %0, %1, %cst {dimension_numbers = #tpu.dot_dimension_numbers<[1], [0], [0], [1], [0, 0, 1, 1], [], []>} : vector<1024x189xbf16>, vector<189x42xbf16>, vector<1024x42xf32> -> vector<1024x42xf32>
    %c0_3 = arith.constant 0 : index
    %c0_4 = arith.constant 0 : index
    %3 = vector.load %arg4[%c0_3, %c0_4] : memref<1x42xf32, #tpu.memory_space<vmem>>, vector<1x42xf32>
    %4 = vector.broadcast %3 : vector<1x42xf32> to vector<1024x42xf32>
    %5 = arith.addf %2, %4 : vector<1024x42xf32>
    %c0_5 = arith.constant 0 : index
    %c0_6 = arith.constant 0 : index
    %6 = vector.load %arg5[%c0_5, %c0_6] : memref<1024x42xf32, #tpu.memory_space<vmem>>, vector<1024x42xf32>
    tpu.vector_store %arg5[%c0_5, %c0_6], %5 {strides = array<i32>} : memref<1024x42xf32, #tpu.memory_space<vmem>>, vector<1024x42xf32>,
    return
  }
  func.func @transform_0(%arg0: i32, %arg1: i32) -> (i32, i32) {
    %c0_i32 = arith.constant 0 : i32
    %c0_i32_0 = arith.constant 0 : i32
    return %arg0, %c0_i32 : i32, i32
  }
  func.func @transform_1(%arg0: i32, %arg1: i32) -> (i32, i32) {
    %c0_i32 = arith.constant 0 : i32
    %c0_i32_0 = arith.constant 0 : i32
    return %c0_i32, %arg1 : i32, i32
  }
  func.func @transform_2(%arg0: i32, %arg1: i32) -> (i32, i32) {
    %c0_i32 = arith.constant 0 : i32
    %c0_i32_0 = arith.constant 0 : i32
    return %c0_i32, %arg1 : i32, i32
  }
  func.func @transform_3(%arg0: i32, %arg1: i32) -> (i32, i32) {
    %c0_i32 = arith.constant 0 : i32
    return %arg0, %arg1 : i32, i32
  }
}

module attributes {stable_mosaic.version = 11 : i64} {
  func.func @_ln_kernel(%arg0: i32, %arg1: memref<48x4096xf32, #tpu.memory_space<vmem>>, %arg2: memref<1x4096xf32, #tpu.memory_space<vmem>>, %arg3: memref<1x4096xf32, #tpu.memory_space<vmem>>, %arg4: memref<48x4096xf32, #tpu.memory_space<vmem>>) attributes {dimension_semantics = [#tpu.dimension_semantics<parallel>], iteration_bounds = array<i64: 1>, scalar_prefetch = 0 : i64, scratch_operands = 0 : i64, tpu.core_type = #tpu.core_type<tc>, window_params = [{transform_indices = @transform_0, window_bounds = array<i64: 48, 4096>}, {pipeline_mode = #tpu.pipeline_mode<synchronous>, transform_indices = @transform_1, window_bounds = array<i64: 1, 4096>}, {pipeline_mode = #tpu.pipeline_mode<synchronous>, transform_indices = @transform_2, window_bounds = array<i64: 1, 4096>}, {transform_indices = @transform_3, window_bounds = array<i64: 48, 4096>}]} {
    %c0 = arith.constant 0 : index
    %c0_0 = arith.constant 0 : index
    %0 = vector.load %arg1[%c0, %c0_0] : memref<48x4096xf32, #tpu.memory_space<vmem>>, vector<48x4096xf32>
    %cst = arith.constant dense<0.000000e+00> : vector<48xf32>
    %1 = vector.multi_reduction <add>, %0, %cst [1] : vector<48x4096xf32> to vector<48xf32>
    %2 = vector.shape_cast %1 : vector<48xf32> to vector<48x1xf32>
    %cst_1 = arith.constant 4.096000e+03 : f32
    %3 = vector.broadcast %cst_1 : f32 to vector<48x1xf32>
    %4 = arith.divf %2, %3 : vector<48x1xf32>
    %5 = vector.broadcast %4 : vector<48x1xf32> to vector<48x4096xf32>
    %6 = arith.subf %0, %5 : vector<48x4096xf32>
    %7 = arith.mulf %6, %6 : vector<48x4096xf32>
    %cst_2 = arith.constant dense<0.000000e+00> : vector<48xf32>
    %8 = vector.multi_reduction <add>, %7, %cst_2 [1] : vector<48x4096xf32> to vector<48xf32>
    %9 = vector.shape_cast %8 : vector<48xf32> to vector<48x1xf32>
    %cst_3 = arith.constant 4.096000e+03 : f32
    %10 = vector.broadcast %cst_3 : f32 to vector<48x1xf32>
    %11 = arith.divf %9, %10 : vector<48x1xf32>
    %cst_4 = arith.constant 9.99999997E-7 : f32
    %12 = vector.broadcast %cst_4 : f32 to vector<48x1xf32>
    %13 = arith.addf %11, %12 : vector<48x1xf32>
    %14 = math.rsqrt %13 : vector<48x1xf32>
    %15 = vector.broadcast %14 : vector<48x1xf32> to vector<48x4096xf32>
    %16 = arith.mulf %6, %15 : vector<48x4096xf32>
    %c0_5 = arith.constant 0 : index
    %c0_6 = arith.constant 0 : index
    %17 = vector.load %arg2[%c0_5, %c0_6] : memref<1x4096xf32, #tpu.memory_space<vmem>>, vector<1x4096xf32>
    %18 = vector.broadcast %17 : vector<1x4096xf32> to vector<48x4096xf32>
    %19 = arith.mulf %16, %18 : vector<48x4096xf32>
    %c0_7 = arith.constant 0 : index
    %c0_8 = arith.constant 0 : index
    %20 = vector.load %arg3[%c0_7, %c0_8] : memref<1x4096xf32, #tpu.memory_space<vmem>>, vector<1x4096xf32>
    %21 = vector.broadcast %20 : vector<1x4096xf32> to vector<48x4096xf32>
    %22 = arith.addf %19, %21 : vector<48x4096xf32>
    %cst_9 = arith.constant 0.000000e+00 : f32
    %23 = vector.broadcast %cst_9 : f32 to vector<48x4096xf32>
    %24 = arith.maximumf %22, %23 : vector<48x4096xf32>
    %c0_10 = arith.constant 0 : index
    %c0_11 = arith.constant 0 : index
    %25 = vector.load %arg4[%c0_10, %c0_11] : memref<48x4096xf32, #tpu.memory_space<vmem>>, vector<48x4096xf32>
    tpu.vector_store %arg4[%c0_10, %c0_11], %24 {strides = array<i32>} : memref<48x4096xf32, #tpu.memory_space<vmem>>, vector<48x4096xf32>,
    return
  }
  func.func @transform_0(%arg0: i32) -> (i32, i32) {
    %c0_i32 = arith.constant 0 : i32
    %c0_i32_0 = arith.constant 0 : i32
    return %arg0, %c0_i32 : i32, i32
  }
  func.func @transform_1(%arg0: i32) -> (i32, i32) {
    %c0_i32 = arith.constant 0 : i32
    %c0_i32_0 = arith.constant 0 : i32
    %c0_i32_1 = arith.constant 0 : i32
    return %c0_i32, %c0_i32_0 : i32, i32
  }
  func.func @transform_2(%arg0: i32) -> (i32, i32) {
    %c0_i32 = arith.constant 0 : i32
    %c0_i32_0 = arith.constant 0 : i32
    %c0_i32_1 = arith.constant 0 : i32
    return %c0_i32, %c0_i32_0 : i32, i32
  }
  func.func @transform_3(%arg0: i32) -> (i32, i32) {
    %c0_i32 = arith.constant 0 : i32
    %c0_i32_0 = arith.constant 0 : i32
    return %arg0, %c0_i32 : i32, i32
  }
}

module attributes {stable_mosaic.version = 11 : i64} {
  func.func @_mm_kernel(%arg0: i32, %arg1: i32, %arg2: memref<24x126xbf16, #tpu.memory_space<vmem>>, %arg3: memref<126x128xbf16, #tpu.memory_space<vmem>>, %arg4: memref<1x128xf32, #tpu.memory_space<vmem>>, %arg5: memref<24x128xf32, #tpu.memory_space<vmem>>) attributes {dimension_semantics = [#tpu.dimension_semantics<parallel>, #tpu.dimension_semantics<parallel>], iteration_bounds = array<i64: 1, 7>, scalar_prefetch = 0 : i64, scratch_operands = 0 : i64, tpu.core_type = #tpu.core_type<tc>, window_params = [{transform_indices = @transform_0, window_bounds = array<i64: 24, 126>}, {transform_indices = @transform_1, window_bounds = array<i64: 126, 128>}, {transform_indices = @transform_2, window_bounds = array<i64: 1, 128>}, {transform_indices = @transform_3, window_bounds = array<i64: 24, 128>}]} {
    %c0 = arith.constant 0 : index
    %c0_0 = arith.constant 0 : index
    %0 = vector.load %arg2[%c0, %c0_0] : memref<24x126xbf16, #tpu.memory_space<vmem>>, vector<24x126xbf16>
    %c0_1 = arith.constant 0 : index
    %c0_2 = arith.constant 0 : index
    %1 = vector.load %arg3[%c0_1, %c0_2] : memref<126x128xbf16, #tpu.memory_space<vmem>>, vector<126x128xbf16>
    %cst = arith.constant dense<0.000000e+00> : vector<24x128xf32>
    %2 = tpu.matmul %0, %1, %cst {dimension_numbers = #tpu.dot_dimension_numbers<[1], [0], [0], [1], [0, 0, 1, 1], [], []>} : vector<24x126xbf16>, vector<126x128xbf16>, vector<24x128xf32> -> vector<24x128xf32>
    %c0_3 = arith.constant 0 : index
    %c0_4 = arith.constant 0 : index
    %3 = vector.load %arg4[%c0_3, %c0_4] : memref<1x128xf32, #tpu.memory_space<vmem>>, vector<1x128xf32>
    %4 = vector.broadcast %3 : vector<1x128xf32> to vector<24x128xf32>
    %5 = arith.addf %2, %4 : vector<24x128xf32>
    %c0_5 = arith.constant 0 : index
    %c0_6 = arith.constant 0 : index
    %6 = vector.load %arg5[%c0_5, %c0_6] : memref<24x128xf32, #tpu.memory_space<vmem>>, vector<24x128xf32>
    tpu.vector_store %arg5[%c0_5, %c0_6], %5 {strides = array<i32>} : memref<24x128xf32, #tpu.memory_space<vmem>>, vector<24x128xf32>,
    return
  }
  func.func @transform_0(%arg0: i32, %arg1: i32) -> (i32, i32) {
    %c0_i32 = arith.constant 0 : i32
    %c0_i32_0 = arith.constant 0 : i32
    return %arg0, %c0_i32 : i32, i32
  }
  func.func @transform_1(%arg0: i32, %arg1: i32) -> (i32, i32) {
    %c0_i32 = arith.constant 0 : i32
    %c0_i32_0 = arith.constant 0 : i32
    return %c0_i32, %arg1 : i32, i32
  }
  func.func @transform_2(%arg0: i32, %arg1: i32) -> (i32, i32) {
    %c0_i32 = arith.constant 0 : i32
    %c0_i32_0 = arith.constant 0 : i32
    return %c0_i32, %arg1 : i32, i32
  }
  func.func @transform_3(%arg0: i32, %arg1: i32) -> (i32, i32) {
    %c0_i32 = arith.constant 0 : i32
    return %arg0, %arg1 : i32, i32
  }
}

module attributes {stable_mosaic.version = 11 : i64} {
  func.func @_ln_kernel(%arg0: i32, %arg1: memref<256x18xf32, #tpu.memory_space<vmem>>, %arg2: memref<1x18xf32, #tpu.memory_space<vmem>>, %arg3: memref<1x18xf32, #tpu.memory_space<vmem>>, %arg4: memref<256x18xf32, #tpu.memory_space<vmem>>) attributes {dimension_semantics = [#tpu.dimension_semantics<parallel>], iteration_bounds = array<i64: 4>, scalar_prefetch = 0 : i64, scratch_operands = 0 : i64, tpu.core_type = #tpu.core_type<tc>, window_params = [{transform_indices = @transform_0, window_bounds = array<i64: 256, 18>}, {pipeline_mode = #tpu.pipeline_mode<synchronous>, transform_indices = @transform_1, window_bounds = array<i64: 1, 18>}, {pipeline_mode = #tpu.pipeline_mode<synchronous>, transform_indices = @transform_2, window_bounds = array<i64: 1, 18>}, {transform_indices = @transform_3, window_bounds = array<i64: 256, 18>}]} {
    %c0 = arith.constant 0 : index
    %c0_0 = arith.constant 0 : index
    %0 = vector.load %arg1[%c0, %c0_0] : memref<256x18xf32, #tpu.memory_space<vmem>>, vector<256x18xf32>
    %cst = arith.constant dense<0.000000e+00> : vector<256xf32>
    %1 = vector.multi_reduction <add>, %0, %cst [1] : vector<256x18xf32> to vector<256xf32>
    %2 = vector.shape_cast %1 : vector<256xf32> to vector<256x1xf32>
    %cst_1 = arith.constant 1.800000e+01 : f32
    %3 = vector.broadcast %cst_1 : f32 to vector<256x1xf32>
    %4 = arith.divf %2, %3 : vector<256x1xf32>
    %5 = vector.broadcast %4 : vector<256x1xf32> to vector<256x18xf32>
    %6 = arith.subf %0, %5 : vector<256x18xf32>
    %7 = arith.mulf %6, %6 : vector<256x18xf32>
    %cst_2 = arith.constant dense<0.000000e+00> : vector<256xf32>
    %8 = vector.multi_reduction <add>, %7, %cst_2 [1] : vector<256x18xf32> to vector<256xf32>
    %9 = vector.shape_cast %8 : vector<256xf32> to vector<256x1xf32>
    %cst_3 = arith.constant 1.800000e+01 : f32
    %10 = vector.broadcast %cst_3 : f32 to vector<256x1xf32>
    %11 = arith.divf %9, %10 : vector<256x1xf32>
    %cst_4 = arith.constant 9.99999997E-7 : f32
    %12 = vector.broadcast %cst_4 : f32 to vector<256x1xf32>
    %13 = arith.addf %11, %12 : vector<256x1xf32>
    %14 = math.rsqrt %13 : vector<256x1xf32>
    %15 = vector.broadcast %14 : vector<256x1xf32> to vector<256x18xf32>
    %16 = arith.mulf %6, %15 : vector<256x18xf32>
    %c0_5 = arith.constant 0 : index
    %c0_6 = arith.constant 0 : index
    %17 = vector.load %arg2[%c0_5, %c0_6] : memref<1x18xf32, #tpu.memory_space<vmem>>, vector<1x18xf32>
    %18 = vector.broadcast %17 : vector<1x18xf32> to vector<256x18xf32>
    %19 = arith.mulf %16, %18 : vector<256x18xf32>
    %c0_7 = arith.constant 0 : index
    %c0_8 = arith.constant 0 : index
    %20 = vector.load %arg3[%c0_7, %c0_8] : memref<1x18xf32, #tpu.memory_space<vmem>>, vector<1x18xf32>
    %21 = vector.broadcast %20 : vector<1x18xf32> to vector<256x18xf32>
    %22 = arith.addf %19, %21 : vector<256x18xf32>
    %cst_9 = arith.constant 0.000000e+00 : f32
    %23 = vector.broadcast %cst_9 : f32 to vector<256x18xf32>
    %24 = arith.maximumf %22, %23 : vector<256x18xf32>
    %c0_10 = arith.constant 0 : index
    %c0_11 = arith.constant 0 : index
    %25 = vector.load %arg4[%c0_10, %c0_11] : memref<256x18xf32, #tpu.memory_space<vmem>>, vector<256x18xf32>
    tpu.vector_store %arg4[%c0_10, %c0_11], %24 {strides = array<i32>} : memref<256x18xf32, #tpu.memory_space<vmem>>, vector<256x18xf32>,
    return
  }
  func.func @transform_0(%arg0: i32) -> (i32, i32) {
    %c0_i32 = arith.constant 0 : i32
    %c0_i32_0 = arith.constant 0 : i32
    return %arg0, %c0_i32 : i32, i32
  }
  func.func @transform_1(%arg0: i32) -> (i32, i32) {
    %c0_i32 = arith.constant 0 : i32
    %c0_i32_0 = arith.constant 0 : i32
    %c0_i32_1 = arith.constant 0 : i32
    return %c0_i32, %c0_i32_0 : i32, i32
  }
  func.func @transform_2(%arg0: i32) -> (i32, i32) {
    %c0_i32 = arith.constant 0 : i32
    %c0_i32_0 = arith.constant 0 : i32
    %c0_i32_1 = arith.constant 0 : i32
    return %c0_i32, %c0_i32_0 : i32, i32
  }
  func.func @transform_3(%arg0: i32) -> (i32, i32) {
    %c0_i32 = arith.constant 0 : i32
    %c0_i32_0 = arith.constant 0 : i32
    return %arg0, %c0_i32 : i32, i32
  }
}

module attributes {stable_mosaic.version = 11 : i64} {
  func.func @_mm_kernel(%arg0: i32, %arg1: i32, %arg2: memref<24x2337xbf16, #tpu.memory_space<vmem>>, %arg3: memref<2337x128xbf16, #tpu.memory_space<vmem>>, %arg4: memref<1x128xf32, #tpu.memory_space<vmem>>, %arg5: memref<24x128xf32, #tpu.memory_space<vmem>>) attributes {dimension_semantics = [#tpu.dimension_semantics<parallel>, #tpu.dimension_semantics<parallel>], iteration_bounds = array<i64: 1, 13>, scalar_prefetch = 0 : i64, scratch_operands = 0 : i64, tpu.core_type = #tpu.core_type<tc>, window_params = [{transform_indices = @transform_0, window_bounds = array<i64: 24, 2337>}, {transform_indices = @transform_1, window_bounds = array<i64: 2337, 128>}, {transform_indices = @transform_2, window_bounds = array<i64: 1, 128>}, {transform_indices = @transform_3, window_bounds = array<i64: 24, 128>}]} {
    %c0 = arith.constant 0 : index
    %c0_0 = arith.constant 0 : index
    %0 = vector.load %arg2[%c0, %c0_0] : memref<24x2337xbf16, #tpu.memory_space<vmem>>, vector<24x2337xbf16>
    %c0_1 = arith.constant 0 : index
    %c0_2 = arith.constant 0 : index
    %1 = vector.load %arg3[%c0_1, %c0_2] : memref<2337x128xbf16, #tpu.memory_space<vmem>>, vector<2337x128xbf16>
    %cst = arith.constant dense<0.000000e+00> : vector<24x128xf32>
    %2 = tpu.matmul %0, %1, %cst {dimension_numbers = #tpu.dot_dimension_numbers<[1], [0], [0], [1], [0, 0, 1, 1], [], []>} : vector<24x2337xbf16>, vector<2337x128xbf16>, vector<24x128xf32> -> vector<24x128xf32>
    %c0_3 = arith.constant 0 : index
    %c0_4 = arith.constant 0 : index
    %3 = vector.load %arg4[%c0_3, %c0_4] : memref<1x128xf32, #tpu.memory_space<vmem>>, vector<1x128xf32>
    %4 = vector.broadcast %3 : vector<1x128xf32> to vector<24x128xf32>
    %5 = arith.addf %2, %4 : vector<24x128xf32>
    %c0_5 = arith.constant 0 : index
    %c0_6 = arith.constant 0 : index
    %6 = vector.load %arg5[%c0_5, %c0_6] : memref<24x128xf32, #tpu.memory_space<vmem>>, vector<24x128xf32>
    tpu.vector_store %arg5[%c0_5, %c0_6], %5 {strides = array<i32>} : memref<24x128xf32, #tpu.memory_space<vmem>>, vector<24x128xf32>,
    return
  }
  func.func @transform_0(%arg0: i32, %arg1: i32) -> (i32, i32) {
    %c0_i32 = arith.constant 0 : i32
    %c0_i32_0 = arith.constant 0 : i32
    return %arg0, %c0_i32 : i32, i32
  }
  func.func @transform_1(%arg0: i32, %arg1: i32) -> (i32, i32) {
    %c0_i32 = arith.constant 0 : i32
    %c0_i32_0 = arith.constant 0 : i32
    return %c0_i32, %arg1 : i32, i32
  }
  func.func @transform_2(%arg0: i32, %arg1: i32) -> (i32, i32) {
    %c0_i32 = arith.constant 0 : i32
    %c0_i32_0 = arith.constant 0 : i32
    return %c0_i32, %arg1 : i32, i32
  }
  func.func @transform_3(%arg0: i32, %arg1: i32) -> (i32, i32) {
    %c0_i32 = arith.constant 0 : i32
    return %arg0, %arg1 : i32, i32
  }
}

module attributes {stable_mosaic.version = 11 : i64} {
  func.func @_ln_kernel(%arg0: i32, %arg1: memref<256x18xf32, #tpu.memory_space<vmem>>, %arg2: memref<1x18xf32, #tpu.memory_space<vmem>>, %arg3: memref<1x18xf32, #tpu.memory_space<vmem>>, %arg4: memref<256x18xf32, #tpu.memory_space<vmem>>) attributes {dimension_semantics = [#tpu.dimension_semantics<parallel>], iteration_bounds = array<i64: 7>, scalar_prefetch = 0 : i64, scratch_operands = 0 : i64, tpu.core_type = #tpu.core_type<tc>, window_params = [{transform_indices = @transform_0, window_bounds = array<i64: 256, 18>}, {pipeline_mode = #tpu.pipeline_mode<synchronous>, transform_indices = @transform_1, window_bounds = array<i64: 1, 18>}, {pipeline_mode = #tpu.pipeline_mode<synchronous>, transform_indices = @transform_2, window_bounds = array<i64: 1, 18>}, {transform_indices = @transform_3, window_bounds = array<i64: 256, 18>}]} {
    %c0 = arith.constant 0 : index
    %c0_0 = arith.constant 0 : index
    %0 = vector.load %arg1[%c0, %c0_0] : memref<256x18xf32, #tpu.memory_space<vmem>>, vector<256x18xf32>
    %cst = arith.constant dense<0.000000e+00> : vector<256xf32>
    %1 = vector.multi_reduction <add>, %0, %cst [1] : vector<256x18xf32> to vector<256xf32>
    %2 = vector.shape_cast %1 : vector<256xf32> to vector<256x1xf32>
    %cst_1 = arith.constant 1.800000e+01 : f32
    %3 = vector.broadcast %cst_1 : f32 to vector<256x1xf32>
    %4 = arith.divf %2, %3 : vector<256x1xf32>
    %5 = vector.broadcast %4 : vector<256x1xf32> to vector<256x18xf32>
    %6 = arith.subf %0, %5 : vector<256x18xf32>
    %7 = arith.mulf %6, %6 : vector<256x18xf32>
    %cst_2 = arith.constant dense<0.000000e+00> : vector<256xf32>
    %8 = vector.multi_reduction <add>, %7, %cst_2 [1] : vector<256x18xf32> to vector<256xf32>
    %9 = vector.shape_cast %8 : vector<256xf32> to vector<256x1xf32>
    %cst_3 = arith.constant 1.800000e+01 : f32
    %10 = vector.broadcast %cst_3 : f32 to vector<256x1xf32>
    %11 = arith.divf %9, %10 : vector<256x1xf32>
    %cst_4 = arith.constant 9.99999997E-7 : f32
    %12 = vector.broadcast %cst_4 : f32 to vector<256x1xf32>
    %13 = arith.addf %11, %12 : vector<256x1xf32>
    %14 = math.rsqrt %13 : vector<256x1xf32>
    %15 = vector.broadcast %14 : vector<256x1xf32> to vector<256x18xf32>
    %16 = arith.mulf %6, %15 : vector<256x18xf32>
    %c0_5 = arith.constant 0 : index
    %c0_6 = arith.constant 0 : index
    %17 = vector.load %arg2[%c0_5, %c0_6] : memref<1x18xf32, #tpu.memory_space<vmem>>, vector<1x18xf32>
    %18 = vector.broadcast %17 : vector<1x18xf32> to vector<256x18xf32>
    %19 = arith.mulf %16, %18 : vector<256x18xf32>
    %c0_7 = arith.constant 0 : index
    %c0_8 = arith.constant 0 : index
    %20 = vector.load %arg3[%c0_7, %c0_8] : memref<1x18xf32, #tpu.memory_space<vmem>>, vector<1x18xf32>
    %21 = vector.broadcast %20 : vector<1x18xf32> to vector<256x18xf32>
    %22 = arith.addf %19, %21 : vector<256x18xf32>
    %cst_9 = arith.constant 0.000000e+00 : f32
    %23 = vector.broadcast %cst_9 : f32 to vector<256x18xf32>
    %24 = arith.maximumf %22, %23 : vector<256x18xf32>
    %c0_10 = arith.constant 0 : index
    %c0_11 = arith.constant 0 : index
    %25 = vector.load %arg4[%c0_10, %c0_11] : memref<256x18xf32, #tpu.memory_space<vmem>>, vector<256x18xf32>
    tpu.vector_store %arg4[%c0_10, %c0_11], %24 {strides = array<i32>} : memref<256x18xf32, #tpu.memory_space<vmem>>, vector<256x18xf32>,
    return
  }
  func.func @transform_0(%arg0: i32) -> (i32, i32) {
    %c0_i32 = arith.constant 0 : i32
    %c0_i32_0 = arith.constant 0 : i32
    return %arg0, %c0_i32 : i32, i32
  }
  func.func @transform_1(%arg0: i32) -> (i32, i32) {
    %c0_i32 = arith.constant 0 : i32
    %c0_i32_0 = arith.constant 0 : i32
    %c0_i32_1 = arith.constant 0 : i32
    return %c0_i32, %c0_i32_0 : i32, i32
  }
  func.func @transform_2(%arg0: i32) -> (i32, i32) {
    %c0_i32 = arith.constant 0 : i32
    %c0_i32_0 = arith.constant 0 : i32
    %c0_i32_1 = arith.constant 0 : i32
    return %c0_i32, %c0_i32_0 : i32, i32
  }
  func.func @transform_3(%arg0: i32) -> (i32, i32) {
    %c0_i32 = arith.constant 0 : i32
    %c0_i32_0 = arith.constant 0 : i32
    return %arg0, %c0_i32 : i32, i32
  }
}

module attributes {stable_mosaic.version = 11 : i64} {
  func.func @_conv_plane_kernel(%arg0: i32, %arg1: memref<1x1168x87xbf16, #tpu.memory_space<vmem>>, %arg2: memref<9x87x29xbf16, #tpu.memory_space<vmem>>, %arg3: memref<1x1088x29xf32, #tpu.memory_space<vmem>>) attributes {dimension_semantics = [#tpu.dimension_semantics<parallel>], iteration_bounds = array<i64: 32>, scalar_prefetch = 0 : i64, scratch_operands = 0 : i64, tpu.core_type = #tpu.core_type<tc>, window_params = [{transform_indices = @transform_0, window_bounds = array<i64: 1, 1168, 87>}, {pipeline_mode = #tpu.pipeline_mode<synchronous>, transform_indices = @transform_1, window_bounds = array<i64: 9, 87, 29>}, {transform_indices = @transform_2, window_bounds = array<i64: 1, 1088, 29>}]} {
    %cst = arith.constant 0.000000e+00 : f32
    %0 = vector.broadcast %cst : f32 to vector<1088x29xf32>
    %c0 = arith.constant 0 : index
    %c0_0 = arith.constant 0 : index
    %c0_1 = arith.constant 0 : index
    %1 = vector.load %arg1[%c0, %c0_0, %c0_1] : memref<1x1168x87xbf16, #tpu.memory_space<vmem>>, vector<1x1088x87xbf16>
    %2 = vector.shape_cast %1 : vector<1x1088x87xbf16> to vector<1088x87xbf16>
    %c0_2 = arith.constant 0 : index
    %c0_3 = arith.constant 0 : index
    %c0_4 = arith.constant 0 : index
    %3 = vector.load %arg2[%c0_2, %c0_3, %c0_4] : memref<9x87x29xbf16, #tpu.memory_space<vmem>>, vector<1x87x29xbf16>
    %4 = vector.shape_cast %3 : vector<1x87x29xbf16> to vector<87x29xbf16>
    %cst_5 = arith.constant dense<0.000000e+00> : vector<1088x29xf32>
    %5 = tpu.matmul %2, %4, %cst_5 {dimension_numbers = #tpu.dot_dimension_numbers<[1], [0], [0], [1], [0, 0, 1, 1], [], []>} : vector<1088x87xbf16>, vector<87x29xbf16>, vector<1088x29xf32> -> vector<1088x29xf32>
    %6 = arith.addf %0, %5 : vector<1088x29xf32>
    %c0_6 = arith.constant 0 : index
    %c1 = arith.constant 1 : index
    %c0_7 = arith.constant 0 : index
    %7 = vector.load %arg1[%c0_6, %c1, %c0_7] : memref<1x1168x87xbf16, #tpu.memory_space<vmem>>, vector<1x1088x87xbf16>
    %8 = vector.shape_cast %7 : vector<1x1088x87xbf16> to vector<1088x87xbf16>
    %c1_8 = arith.constant 1 : index
    %c0_9 = arith.constant 0 : index
    %c0_10 = arith.constant 0 : index
    %9 = vector.load %arg2[%c1_8, %c0_9, %c0_10] : memref<9x87x29xbf16, #tpu.memory_space<vmem>>, vector<1x87x29xbf16>
    %10 = vector.shape_cast %9 : vector<1x87x29xbf16> to vector<87x29xbf16>
    %cst_11 = arith.constant dense<0.000000e+00> : vector<1088x29xf32>
    %11 = tpu.matmul %8, %10, %cst_11 {dimension_numbers = #tpu.dot_dimension_numbers<[1], [0], [0], [1], [0, 0, 1, 1], [], []>} : vector<1088x87xbf16>, vector<87x29xbf16>, vector<1088x29xf32> -> vector<1088x29xf32>
    %12 = arith.addf %6, %11 : vector<1088x29xf32>
    %c0_12 = arith.constant 0 : index
    %c2 = arith.constant 2 : index
    %c0_13 = arith.constant 0 : index
    %13 = vector.load %arg1[%c0_12, %c2, %c0_13] : memref<1x1168x87xbf16, #tpu.memory_space<vmem>>, vector<1x1088x87xbf16>
    %14 = vector.shape_cast %13 : vector<1x1088x87xbf16> to vector<1088x87xbf16>
    %c2_14 = arith.constant 2 : index
    %c0_15 = arith.constant 0 : index
    %c0_16 = arith.constant 0 : index
    %15 = vector.load %arg2[%c2_14, %c0_15, %c0_16] : memref<9x87x29xbf16, #tpu.memory_space<vmem>>, vector<1x87x29xbf16>
    %16 = vector.shape_cast %15 : vector<1x87x29xbf16> to vector<87x29xbf16>
    %cst_17 = arith.constant dense<0.000000e+00> : vector<1088x29xf32>
    %17 = tpu.matmul %14, %16, %cst_17 {dimension_numbers = #tpu.dot_dimension_numbers<[1], [0], [0], [1], [0, 0, 1, 1], [], []>} : vector<1088x87xbf16>, vector<87x29xbf16>, vector<1088x29xf32> -> vector<1088x29xf32>
    %18 = arith.addf %12, %17 : vector<1088x29xf32>
    %c0_18 = arith.constant 0 : index
    %c34 = arith.constant 34 : index
    %c0_19 = arith.constant 0 : index
    %19 = vector.load %arg1[%c0_18, %c34, %c0_19] : memref<1x1168x87xbf16, #tpu.memory_space<vmem>>, vector<1x1088x87xbf16>
    %20 = vector.shape_cast %19 : vector<1x1088x87xbf16> to vector<1088x87xbf16>
    %c3 = arith.constant 3 : index
    %c0_20 = arith.constant 0 : index
    %c0_21 = arith.constant 0 : index
    %21 = vector.load %arg2[%c3, %c0_20, %c0_21] : memref<9x87x29xbf16, #tpu.memory_space<vmem>>, vector<1x87x29xbf16>
    %22 = vector.shape_cast %21 : vector<1x87x29xbf16> to vector<87x29xbf16>
    %cst_22 = arith.constant dense<0.000000e+00> : vector<1088x29xf32>
    %23 = tpu.matmul %20, %22, %cst_22 {dimension_numbers = #tpu.dot_dimension_numbers<[1], [0], [0], [1], [0, 0, 1, 1], [], []>} : vector<1088x87xbf16>, vector<87x29xbf16>, vector<1088x29xf32> -> vector<1088x29xf32>
    %24 = arith.addf %18, %23 : vector<1088x29xf32>
    %c0_23 = arith.constant 0 : index
    %c35 = arith.constant 35 : index
    %c0_24 = arith.constant 0 : index
    %25 = vector.load %arg1[%c0_23, %c35, %c0_24] : memref<1x1168x87xbf16, #tpu.memory_space<vmem>>, vector<1x1088x87xbf16>
    %26 = vector.shape_cast %25 : vector<1x1088x87xbf16> to vector<1088x87xbf16>
    %c4 = arith.constant 4 : index
    %c0_25 = arith.constant 0 : index
    %c0_26 = arith.constant 0 : index
    %27 = vector.load %arg2[%c4, %c0_25, %c0_26] : memref<9x87x29xbf16, #tpu.memory_space<vmem>>, vector<1x87x29xbf16>
    %28 = vector.shape_cast %27 : vector<1x87x29xbf16> to vector<87x29xbf16>
    %cst_27 = arith.constant dense<0.000000e+00> : vector<1088x29xf32>
    %29 = tpu.matmul %26, %28, %cst_27 {dimension_numbers = #tpu.dot_dimension_numbers<[1], [0], [0], [1], [0, 0, 1, 1], [], []>} : vector<1088x87xbf16>, vector<87x29xbf16>, vector<1088x29xf32> -> vector<1088x29xf32>
    %30 = arith.addf %24, %29 : vector<1088x29xf32>
    %c0_28 = arith.constant 0 : index
    %c36 = arith.constant 36 : index
    %c0_29 = arith.constant 0 : index
    %31 = vector.load %arg1[%c0_28, %c36, %c0_29] : memref<1x1168x87xbf16, #tpu.memory_space<vmem>>, vector<1x1088x87xbf16>
    %32 = vector.shape_cast %31 : vector<1x1088x87xbf16> to vector<1088x87xbf16>
    %c5 = arith.constant 5 : index
    %c0_30 = arith.constant 0 : index
    %c0_31 = arith.constant 0 : index
    %33 = vector.load %arg2[%c5, %c0_30, %c0_31] : memref<9x87x29xbf16, #tpu.memory_space<vmem>>, vector<1x87x29xbf16>
    %34 = vector.shape_cast %33 : vector<1x87x29xbf16> to vector<87x29xbf16>
    %cst_32 = arith.constant dense<0.000000e+00> : vector<1088x29xf32>
    %35 = tpu.matmul %32, %34, %cst_32 {dimension_numbers = #tpu.dot_dimension_numbers<[1], [0], [0], [1], [0, 0, 1, 1], [], []>} : vector<1088x87xbf16>, vector<87x29xbf16>, vector<1088x29xf32> -> vector<1088x29xf32>
    %36 = arith.addf %30, %35 : vector<1088x29xf32>
    %c0_33 = arith.constant 0 : index
    %c68 = arith.constant 68 : index
    %c0_34 = arith.constant 0 : index
    %37 = vector.load %arg1[%c0_33, %c68, %c0_34] : memref<1x1168x87xbf16, #tpu.memory_space<vmem>>, vector<1x1088x87xbf16>
    %38 = vector.shape_cast %37 : vector<1x1088x87xbf16> to vector<1088x87xbf16>
    %c6 = arith.constant 6 : index
    %c0_35 = arith.constant 0 : index
    %c0_36 = arith.constant 0 : index
    %39 = vector.load %arg2[%c6, %c0_35, %c0_36] : memref<9x87x29xbf16, #tpu.memory_space<vmem>>, vector<1x87x29xbf16>
    %40 = vector.shape_cast %39 : vector<1x87x29xbf16> to vector<87x29xbf16>
    %cst_37 = arith.constant dense<0.000000e+00> : vector<1088x29xf32>
    %41 = tpu.matmul %38, %40, %cst_37 {dimension_numbers = #tpu.dot_dimension_numbers<[1], [0], [0], [1], [0, 0, 1, 1], [], []>} : vector<1088x87xbf16>, vector<87x29xbf16>, vector<1088x29xf32> -> vector<1088x29xf32>
    %42 = arith.addf %36, %41 : vector<1088x29xf32>
    %c0_38 = arith.constant 0 : index
    %c69 = arith.constant 69 : index
    %c0_39 = arith.constant 0 : index
    %43 = vector.load %arg1[%c0_38, %c69, %c0_39] : memref<1x1168x87xbf16, #tpu.memory_space<vmem>>, vector<1x1088x87xbf16>
    %44 = vector.shape_cast %43 : vector<1x1088x87xbf16> to vector<1088x87xbf16>
    %c7 = arith.constant 7 : index
    %c0_40 = arith.constant 0 : index
    %c0_41 = arith.constant 0 : index
    %45 = vector.load %arg2[%c7, %c0_40, %c0_41] : memref<9x87x29xbf16, #tpu.memory_space<vmem>>, vector<1x87x29xbf16>
    %46 = vector.shape_cast %45 : vector<1x87x29xbf16> to vector<87x29xbf16>
    %cst_42 = arith.constant dense<0.000000e+00> : vector<1088x29xf32>
    %47 = tpu.matmul %44, %46, %cst_42 {dimension_numbers = #tpu.dot_dimension_numbers<[1], [0], [0], [1], [0, 0, 1, 1], [], []>} : vector<1088x87xbf16>, vector<87x29xbf16>, vector<1088x29xf32> -> vector<1088x29xf32>
    %48 = arith.addf %42, %47 : vector<1088x29xf32>
    %c0_43 = arith.constant 0 : index
    %c70 = arith.constant 70 : index
    %c0_44 = arith.constant 0 : index
    %49 = vector.load %arg1[%c0_43, %c70, %c0_44] : memref<1x1168x87xbf16, #tpu.memory_space<vmem>>, vector<1x1088x87xbf16>
    %50 = vector.shape_cast %49 : vector<1x1088x87xbf16> to vector<1088x87xbf16>
    %c8 = arith.constant 8 : index
    %c0_45 = arith.constant 0 : index
    %c0_46 = arith.constant 0 : index
    %51 = vector.load %arg2[%c8, %c0_45, %c0_46] : memref<9x87x29xbf16, #tpu.memory_space<vmem>>, vector<1x87x29xbf16>
    %52 = vector.shape_cast %51 : vector<1x87x29xbf16> to vector<87x29xbf16>
    %cst_47 = arith.constant dense<0.000000e+00> : vector<1088x29xf32>
    %53 = tpu.matmul %50, %52, %cst_47 {dimension_numbers = #tpu.dot_dimension_numbers<[1], [0], [0], [1], [0, 0, 1, 1], [], []>} : vector<1088x87xbf16>, vector<87x29xbf16>, vector<1088x29xf32> -> vector<1088x29xf32>
    %54 = arith.addf %48, %53 : vector<1088x29xf32>
    %c0_48 = arith.constant 0 : index
    %c0_49 = arith.constant 0 : index
    %c0_50 = arith.constant 0 : index
    %55 = vector.load %arg3[%c0_48, %c0_49, %c0_50] : memref<1x1088x29xf32, #tpu.memory_space<vmem>>, vector<1x1088x29xf32>
    %56 = vector.shape_cast %55 : vector<1x1088x29xf32> to vector<1088x29xf32>
    %57 = vector.shape_cast %54 : vector<1088x29xf32> to vector<1x1088x29xf32>
    tpu.vector_store %arg3[%c0_48, %c0_49, %c0_50], %57 {strides = array<i32>} : memref<1x1088x29xf32, #tpu.memory_space<vmem>>, vector<1x1088x29xf32>,
    return
  }
  func.func @transform_0(%arg0: i32) -> (i32, i32, i32) {
    %c0_i32 = arith.constant 0 : i32
    %c0_i32_0 = arith.constant 0 : i32
    %c0_i32_1 = arith.constant 0 : i32
    return %arg0, %c0_i32, %c0_i32_0 : i32, i32, i32
  }
  func.func @transform_1(%arg0: i32) -> (i32, i32, i32) {
    %c0_i32 = arith.constant 0 : i32
    %c0_i32_0 = arith.constant 0 : i32
    %c0_i32_1 = arith.constant 0 : i32
    %c0_i32_2 = arith.constant 0 : i32
    return %c0_i32, %c0_i32_0, %c0_i32_1 : i32, i32, i32
  }
  func.func @transform_2(%arg0: i32) -> (i32, i32, i32) {
    %c0_i32 = arith.constant 0 : i32
    %c0_i32_0 = arith.constant 0 : i32
    %c0_i32_1 = arith.constant 0 : i32
    return %arg0, %c0_i32, %c0_i32_0 : i32, i32, i32
  }
}

module attributes {stable_mosaic.version = 11 : i64} {
  func.func @_conv_plane_kernel(%arg0: i32, %arg1: memref<1x1168x87xbf16, #tpu.memory_space<vmem>>, %arg2: memref<9x87x29xbf16, #tpu.memory_space<vmem>>, %arg3: memref<1x1088x29xf32, #tpu.memory_space<vmem>>) attributes {dimension_semantics = [#tpu.dimension_semantics<parallel>], iteration_bounds = array<i64: 16>, scalar_prefetch = 0 : i64, scratch_operands = 0 : i64, tpu.core_type = #tpu.core_type<tc>, window_params = [{transform_indices = @transform_0, window_bounds = array<i64: 1, 1168, 87>}, {pipeline_mode = #tpu.pipeline_mode<synchronous>, transform_indices = @transform_1, window_bounds = array<i64: 9, 87, 29>}, {transform_indices = @transform_2, window_bounds = array<i64: 1, 1088, 29>}]} {
    %cst = arith.constant 0.000000e+00 : f32
    %0 = vector.broadcast %cst : f32 to vector<1088x29xf32>
    %c0 = arith.constant 0 : index
    %c0_0 = arith.constant 0 : index
    %c0_1 = arith.constant 0 : index
    %1 = vector.load %arg1[%c0, %c0_0, %c0_1] : memref<1x1168x87xbf16, #tpu.memory_space<vmem>>, vector<1x1088x87xbf16>
    %2 = vector.shape_cast %1 : vector<1x1088x87xbf16> to vector<1088x87xbf16>
    %c0_2 = arith.constant 0 : index
    %c0_3 = arith.constant 0 : index
    %c0_4 = arith.constant 0 : index
    %3 = vector.load %arg2[%c0_2, %c0_3, %c0_4] : memref<9x87x29xbf16, #tpu.memory_space<vmem>>, vector<1x87x29xbf16>
    %4 = vector.shape_cast %3 : vector<1x87x29xbf16> to vector<87x29xbf16>
    %cst_5 = arith.constant dense<0.000000e+00> : vector<1088x29xf32>
    %5 = tpu.matmul %2, %4, %cst_5 {dimension_numbers = #tpu.dot_dimension_numbers<[1], [0], [0], [1], [0, 0, 1, 1], [], []>} : vector<1088x87xbf16>, vector<87x29xbf16>, vector<1088x29xf32> -> vector<1088x29xf32>
    %6 = arith.addf %0, %5 : vector<1088x29xf32>
    %c0_6 = arith.constant 0 : index
    %c1 = arith.constant 1 : index
    %c0_7 = arith.constant 0 : index
    %7 = vector.load %arg1[%c0_6, %c1, %c0_7] : memref<1x1168x87xbf16, #tpu.memory_space<vmem>>, vector<1x1088x87xbf16>
    %8 = vector.shape_cast %7 : vector<1x1088x87xbf16> to vector<1088x87xbf16>
    %c1_8 = arith.constant 1 : index
    %c0_9 = arith.constant 0 : index
    %c0_10 = arith.constant 0 : index
    %9 = vector.load %arg2[%c1_8, %c0_9, %c0_10] : memref<9x87x29xbf16, #tpu.memory_space<vmem>>, vector<1x87x29xbf16>
    %10 = vector.shape_cast %9 : vector<1x87x29xbf16> to vector<87x29xbf16>
    %cst_11 = arith.constant dense<0.000000e+00> : vector<1088x29xf32>
    %11 = tpu.matmul %8, %10, %cst_11 {dimension_numbers = #tpu.dot_dimension_numbers<[1], [0], [0], [1], [0, 0, 1, 1], [], []>} : vector<1088x87xbf16>, vector<87x29xbf16>, vector<1088x29xf32> -> vector<1088x29xf32>
    %12 = arith.addf %6, %11 : vector<1088x29xf32>
    %c0_12 = arith.constant 0 : index
    %c2 = arith.constant 2 : index
    %c0_13 = arith.constant 0 : index
    %13 = vector.load %arg1[%c0_12, %c2, %c0_13] : memref<1x1168x87xbf16, #tpu.memory_space<vmem>>, vector<1x1088x87xbf16>
    %14 = vector.shape_cast %13 : vector<1x1088x87xbf16> to vector<1088x87xbf16>
    %c2_14 = arith.constant 2 : index
    %c0_15 = arith.constant 0 : index
    %c0_16 = arith.constant 0 : index
    %15 = vector.load %arg2[%c2_14, %c0_15, %c0_16] : memref<9x87x29xbf16, #tpu.memory_space<vmem>>, vector<1x87x29xbf16>
    %16 = vector.shape_cast %15 : vector<1x87x29xbf16> to vector<87x29xbf16>
    %cst_17 = arith.constant dense<0.000000e+00> : vector<1088x29xf32>
    %17 = tpu.matmul %14, %16, %cst_17 {dimension_numbers = #tpu.dot_dimension_numbers<[1], [0], [0], [1], [0, 0, 1, 1], [], []>} : vector<1088x87xbf16>, vector<87x29xbf16>, vector<1088x29xf32> -> vector<1088x29xf32>
    %18 = arith.addf %12, %17 : vector<1088x29xf32>
    %c0_18 = arith.constant 0 : index
    %c34 = arith.constant 34 : index
    %c0_19 = arith.constant 0 : index
    %19 = vector.load %arg1[%c0_18, %c34, %c0_19] : memref<1x1168x87xbf16, #tpu.memory_space<vmem>>, vector<1x1088x87xbf16>
    %20 = vector.shape_cast %19 : vector<1x1088x87xbf16> to vector<1088x87xbf16>
    %c3 = arith.constant 3 : index
    %c0_20 = arith.constant 0 : index
    %c0_21 = arith.constant 0 : index
    %21 = vector.load %arg2[%c3, %c0_20, %c0_21] : memref<9x87x29xbf16, #tpu.memory_space<vmem>>, vector<1x87x29xbf16>
    %22 = vector.shape_cast %21 : vector<1x87x29xbf16> to vector<87x29xbf16>
    %cst_22 = arith.constant dense<0.000000e+00> : vector<1088x29xf32>
    %23 = tpu.matmul %20, %22, %cst_22 {dimension_numbers = #tpu.dot_dimension_numbers<[1], [0], [0], [1], [0, 0, 1, 1], [], []>} : vector<1088x87xbf16>, vector<87x29xbf16>, vector<1088x29xf32> -> vector<1088x29xf32>
    %24 = arith.addf %18, %23 : vector<1088x29xf32>
    %c0_23 = arith.constant 0 : index
    %c35 = arith.constant 35 : index
    %c0_24 = arith.constant 0 : index
    %25 = vector.load %arg1[%c0_23, %c35, %c0_24] : memref<1x1168x87xbf16, #tpu.memory_space<vmem>>, vector<1x1088x87xbf16>
    %26 = vector.shape_cast %25 : vector<1x1088x87xbf16> to vector<1088x87xbf16>
    %c4 = arith.constant 4 : index
    %c0_25 = arith.constant 0 : index
    %c0_26 = arith.constant 0 : index
    %27 = vector.load %arg2[%c4, %c0_25, %c0_26] : memref<9x87x29xbf16, #tpu.memory_space<vmem>>, vector<1x87x29xbf16>
    %28 = vector.shape_cast %27 : vector<1x87x29xbf16> to vector<87x29xbf16>
    %cst_27 = arith.constant dense<0.000000e+00> : vector<1088x29xf32>
    %29 = tpu.matmul %26, %28, %cst_27 {dimension_numbers = #tpu.dot_dimension_numbers<[1], [0], [0], [1], [0, 0, 1, 1], [], []>} : vector<1088x87xbf16>, vector<87x29xbf16>, vector<1088x29xf32> -> vector<1088x29xf32>
    %30 = arith.addf %24, %29 : vector<1088x29xf32>
    %c0_28 = arith.constant 0 : index
    %c36 = arith.constant 36 : index
    %c0_29 = arith.constant 0 : index
    %31 = vector.load %arg1[%c0_28, %c36, %c0_29] : memref<1x1168x87xbf16, #tpu.memory_space<vmem>>, vector<1x1088x87xbf16>
    %32 = vector.shape_cast %31 : vector<1x1088x87xbf16> to vector<1088x87xbf16>
    %c5 = arith.constant 5 : index
    %c0_30 = arith.constant 0 : index
    %c0_31 = arith.constant 0 : index
    %33 = vector.load %arg2[%c5, %c0_30, %c0_31] : memref<9x87x29xbf16, #tpu.memory_space<vmem>>, vector<1x87x29xbf16>
    %34 = vector.shape_cast %33 : vector<1x87x29xbf16> to vector<87x29xbf16>
    %cst_32 = arith.constant dense<0.000000e+00> : vector<1088x29xf32>
    %35 = tpu.matmul %32, %34, %cst_32 {dimension_numbers = #tpu.dot_dimension_numbers<[1], [0], [0], [1], [0, 0, 1, 1], [], []>} : vector<1088x87xbf16>, vector<87x29xbf16>, vector<1088x29xf32> -> vector<1088x29xf32>
    %36 = arith.addf %30, %35 : vector<1088x29xf32>
    %c0_33 = arith.constant 0 : index
    %c68 = arith.constant 68 : index
    %c0_34 = arith.constant 0 : index
    %37 = vector.load %arg1[%c0_33, %c68, %c0_34] : memref<1x1168x87xbf16, #tpu.memory_space<vmem>>, vector<1x1088x87xbf16>
    %38 = vector.shape_cast %37 : vector<1x1088x87xbf16> to vector<1088x87xbf16>
    %c6 = arith.constant 6 : index
    %c0_35 = arith.constant 0 : index
    %c0_36 = arith.constant 0 : index
    %39 = vector.load %arg2[%c6, %c0_35, %c0_36] : memref<9x87x29xbf16, #tpu.memory_space<vmem>>, vector<1x87x29xbf16>
    %40 = vector.shape_cast %39 : vector<1x87x29xbf16> to vector<87x29xbf16>
    %cst_37 = arith.constant dense<0.000000e+00> : vector<1088x29xf32>
    %41 = tpu.matmul %38, %40, %cst_37 {dimension_numbers = #tpu.dot_dimension_numbers<[1], [0], [0], [1], [0, 0, 1, 1], [], []>} : vector<1088x87xbf16>, vector<87x29xbf16>, vector<1088x29xf32> -> vector<1088x29xf32>
    %42 = arith.addf %36, %41 : vector<1088x29xf32>
    %c0_38 = arith.constant 0 : index
    %c69 = arith.constant 69 : index
    %c0_39 = arith.constant 0 : index
    %43 = vector.load %arg1[%c0_38, %c69, %c0_39] : memref<1x1168x87xbf16, #tpu.memory_space<vmem>>, vector<1x1088x87xbf16>
    %44 = vector.shape_cast %43 : vector<1x1088x87xbf16> to vector<1088x87xbf16>
    %c7 = arith.constant 7 : index
    %c0_40 = arith.constant 0 : index
    %c0_41 = arith.constant 0 : index
    %45 = vector.load %arg2[%c7, %c0_40, %c0_41] : memref<9x87x29xbf16, #tpu.memory_space<vmem>>, vector<1x87x29xbf16>
    %46 = vector.shape_cast %45 : vector<1x87x29xbf16> to vector<87x29xbf16>
    %cst_42 = arith.constant dense<0.000000e+00> : vector<1088x29xf32>
    %47 = tpu.matmul %44, %46, %cst_42 {dimension_numbers = #tpu.dot_dimension_numbers<[1], [0], [0], [1], [0, 0, 1, 1], [], []>} : vector<1088x87xbf16>, vector<87x29xbf16>, vector<1088x29xf32> -> vector<1088x29xf32>
    %48 = arith.addf %42, %47 : vector<1088x29xf32>
    %c0_43 = arith.constant 0 : index
    %c70 = arith.constant 70 : index
    %c0_44 = arith.constant 0 : index
    %49 = vector.load %arg1[%c0_43, %c70, %c0_44] : memref<1x1168x87xbf16, #tpu.memory_space<vmem>>, vector<1x1088x87xbf16>
    %50 = vector.shape_cast %49 : vector<1x1088x87xbf16> to vector<1088x87xbf16>
    %c8 = arith.constant 8 : index
    %c0_45 = arith.constant 0 : index
    %c0_46 = arith.constant 0 : index
    %51 = vector.load %arg2[%c8, %c0_45, %c0_46] : memref<9x87x29xbf16, #tpu.memory_space<vmem>>, vector<1x87x29xbf16>
    %52 = vector.shape_cast %51 : vector<1x87x29xbf16> to vector<87x29xbf16>
    %cst_47 = arith.constant dense<0.000000e+00> : vector<1088x29xf32>
    %53 = tpu.matmul %50, %52, %cst_47 {dimension_numbers = #tpu.dot_dimension_numbers<[1], [0], [0], [1], [0, 0, 1, 1], [], []>} : vector<1088x87xbf16>, vector<87x29xbf16>, vector<1088x29xf32> -> vector<1088x29xf32>
    %54 = arith.addf %48, %53 : vector<1088x29xf32>
    %c0_48 = arith.constant 0 : index
    %c0_49 = arith.constant 0 : index
    %c0_50 = arith.constant 0 : index
    %55 = vector.load %arg3[%c0_48, %c0_49, %c0_50] : memref<1x1088x29xf32, #tpu.memory_space<vmem>>, vector<1x1088x29xf32>
    %56 = vector.shape_cast %55 : vector<1x1088x29xf32> to vector<1088x29xf32>
    %57 = vector.shape_cast %54 : vector<1088x29xf32> to vector<1x1088x29xf32>
    tpu.vector_store %arg3[%c0_48, %c0_49, %c0_50], %57 {strides = array<i32>} : memref<1x1088x29xf32, #tpu.memory_space<vmem>>, vector<1x1088x29xf32>,
    return
  }
  func.func @transform_0(%arg0: i32) -> (i32, i32, i32) {
    %c0_i32 = arith.constant 0 : i32
    %c0_i32_0 = arith.constant 0 : i32
    %c0_i32_1 = arith.constant 0 : i32
    return %arg0, %c0_i32, %c0_i32_0 : i32, i32, i32
  }
  func.func @transform_1(%arg0: i32) -> (i32, i32, i32) {
    %c0_i32 = arith.constant 0 : i32
    %c0_i32_0 = arith.constant 0 : i32
    %c0_i32_1 = arith.constant 0 : i32
    %c0_i32_2 = arith.constant 0 : i32
    return %c0_i32, %c0_i32_0, %c0_i32_1 : i32, i32, i32
  }
  func.func @transform_2(%arg0: i32) -> (i32, i32, i32) {
    %c0_i32 = arith.constant 0 : i32
    %c0_i32_0 = arith.constant 0 : i32
    %c0_i32_1 = arith.constant 0 : i32
    return %arg0, %c0_i32, %c0_i32_0 : i32, i32, i32
  }
}

module attributes {stable_mosaic.version = 11 : i64} {
  func.func @_conv_plane_kernel(%arg0: i32, %arg1: memref<1x336x87xbf16, #tpu.memory_space<vmem>>, %arg2: memref<9x87x29xbf16, #tpu.memory_space<vmem>>, %arg3: memref<1x288x29xf32, #tpu.memory_space<vmem>>) attributes {dimension_semantics = [#tpu.dimension_semantics<parallel>], iteration_bounds = array<i64: 16>, scalar_prefetch = 0 : i64, scratch_operands = 0 : i64, tpu.core_type = #tpu.core_type<tc>, window_params = [{transform_indices = @transform_0, window_bounds = array<i64: 1, 336, 87>}, {pipeline_mode = #tpu.pipeline_mode<synchronous>, transform_indices = @transform_1, window_bounds = array<i64: 9, 87, 29>}, {transform_indices = @transform_2, window_bounds = array<i64: 1, 288, 29>}]} {
    %cst = arith.constant 0.000000e+00 : f32
    %0 = vector.broadcast %cst : f32 to vector<288x29xf32>
    %c0 = arith.constant 0 : index
    %c0_0 = arith.constant 0 : index
    %c0_1 = arith.constant 0 : index
    %1 = vector.load %arg1[%c0, %c0_0, %c0_1] : memref<1x336x87xbf16, #tpu.memory_space<vmem>>, vector<1x288x87xbf16>
    %2 = vector.shape_cast %1 : vector<1x288x87xbf16> to vector<288x87xbf16>
    %c0_2 = arith.constant 0 : index
    %c0_3 = arith.constant 0 : index
    %c0_4 = arith.constant 0 : index
    %3 = vector.load %arg2[%c0_2, %c0_3, %c0_4] : memref<9x87x29xbf16, #tpu.memory_space<vmem>>, vector<1x87x29xbf16>
    %4 = vector.shape_cast %3 : vector<1x87x29xbf16> to vector<87x29xbf16>
    %cst_5 = arith.constant dense<0.000000e+00> : vector<288x29xf32>
    %5 = tpu.matmul %2, %4, %cst_5 {dimension_numbers = #tpu.dot_dimension_numbers<[1], [0], [0], [1], [0, 0, 1, 1], [], []>} : vector<288x87xbf16>, vector<87x29xbf16>, vector<288x29xf32> -> vector<288x29xf32>
    %6 = arith.addf %0, %5 : vector<288x29xf32>
    %c0_6 = arith.constant 0 : index
    %c1 = arith.constant 1 : index
    %c0_7 = arith.constant 0 : index
    %7 = vector.load %arg1[%c0_6, %c1, %c0_7] : memref<1x336x87xbf16, #tpu.memory_space<vmem>>, vector<1x288x87xbf16>
    %8 = vector.shape_cast %7 : vector<1x288x87xbf16> to vector<288x87xbf16>
    %c1_8 = arith.constant 1 : index
    %c0_9 = arith.constant 0 : index
    %c0_10 = arith.constant 0 : index
    %9 = vector.load %arg2[%c1_8, %c0_9, %c0_10] : memref<9x87x29xbf16, #tpu.memory_space<vmem>>, vector<1x87x29xbf16>
    %10 = vector.shape_cast %9 : vector<1x87x29xbf16> to vector<87x29xbf16>
    %cst_11 = arith.constant dense<0.000000e+00> : vector<288x29xf32>
    %11 = tpu.matmul %8, %10, %cst_11 {dimension_numbers = #tpu.dot_dimension_numbers<[1], [0], [0], [1], [0, 0, 1, 1], [], []>} : vector<288x87xbf16>, vector<87x29xbf16>, vector<288x29xf32> -> vector<288x29xf32>
    %12 = arith.addf %6, %11 : vector<288x29xf32>
    %c0_12 = arith.constant 0 : index
    %c2 = arith.constant 2 : index
    %c0_13 = arith.constant 0 : index
    %13 = vector.load %arg1[%c0_12, %c2, %c0_13] : memref<1x336x87xbf16, #tpu.memory_space<vmem>>, vector<1x288x87xbf16>
    %14 = vector.shape_cast %13 : vector<1x288x87xbf16> to vector<288x87xbf16>
    %c2_14 = arith.constant 2 : index
    %c0_15 = arith.constant 0 : index
    %c0_16 = arith.constant 0 : index
    %15 = vector.load %arg2[%c2_14, %c0_15, %c0_16] : memref<9x87x29xbf16, #tpu.memory_space<vmem>>, vector<1x87x29xbf16>
    %16 = vector.shape_cast %15 : vector<1x87x29xbf16> to vector<87x29xbf16>
    %cst_17 = arith.constant dense<0.000000e+00> : vector<288x29xf32>
    %17 = tpu.matmul %14, %16, %cst_17 {dimension_numbers = #tpu.dot_dimension_numbers<[1], [0], [0], [1], [0, 0, 1, 1], [], []>} : vector<288x87xbf16>, vector<87x29xbf16>, vector<288x29xf32> -> vector<288x29xf32>
    %18 = arith.addf %12, %17 : vector<288x29xf32>
    %c0_18 = arith.constant 0 : index
    %c18 = arith.constant 18 : index
    %c0_19 = arith.constant 0 : index
    %19 = vector.load %arg1[%c0_18, %c18, %c0_19] : memref<1x336x87xbf16, #tpu.memory_space<vmem>>, vector<1x288x87xbf16>
    %20 = vector.shape_cast %19 : vector<1x288x87xbf16> to vector<288x87xbf16>
    %c3 = arith.constant 3 : index
    %c0_20 = arith.constant 0 : index
    %c0_21 = arith.constant 0 : index
    %21 = vector.load %arg2[%c3, %c0_20, %c0_21] : memref<9x87x29xbf16, #tpu.memory_space<vmem>>, vector<1x87x29xbf16>
    %22 = vector.shape_cast %21 : vector<1x87x29xbf16> to vector<87x29xbf16>
    %cst_22 = arith.constant dense<0.000000e+00> : vector<288x29xf32>
    %23 = tpu.matmul %20, %22, %cst_22 {dimension_numbers = #tpu.dot_dimension_numbers<[1], [0], [0], [1], [0, 0, 1, 1], [], []>} : vector<288x87xbf16>, vector<87x29xbf16>, vector<288x29xf32> -> vector<288x29xf32>
    %24 = arith.addf %18, %23 : vector<288x29xf32>
    %c0_23 = arith.constant 0 : index
    %c19 = arith.constant 19 : index
    %c0_24 = arith.constant 0 : index
    %25 = vector.load %arg1[%c0_23, %c19, %c0_24] : memref<1x336x87xbf16, #tpu.memory_space<vmem>>, vector<1x288x87xbf16>
    %26 = vector.shape_cast %25 : vector<1x288x87xbf16> to vector<288x87xbf16>
    %c4 = arith.constant 4 : index
    %c0_25 = arith.constant 0 : index
    %c0_26 = arith.constant 0 : index
    %27 = vector.load %arg2[%c4, %c0_25, %c0_26] : memref<9x87x29xbf16, #tpu.memory_space<vmem>>, vector<1x87x29xbf16>
    %28 = vector.shape_cast %27 : vector<1x87x29xbf16> to vector<87x29xbf16>
    %cst_27 = arith.constant dense<0.000000e+00> : vector<288x29xf32>
    %29 = tpu.matmul %26, %28, %cst_27 {dimension_numbers = #tpu.dot_dimension_numbers<[1], [0], [0], [1], [0, 0, 1, 1], [], []>} : vector<288x87xbf16>, vector<87x29xbf16>, vector<288x29xf32> -> vector<288x29xf32>
    %30 = arith.addf %24, %29 : vector<288x29xf32>
    %c0_28 = arith.constant 0 : index
    %c20 = arith.constant 20 : index
    %c0_29 = arith.constant 0 : index
    %31 = vector.load %arg1[%c0_28, %c20, %c0_29] : memref<1x336x87xbf16, #tpu.memory_space<vmem>>, vector<1x288x87xbf16>
    %32 = vector.shape_cast %31 : vector<1x288x87xbf16> to vector<288x87xbf16>
    %c5 = arith.constant 5 : index
    %c0_30 = arith.constant 0 : index
    %c0_31 = arith.constant 0 : index
    %33 = vector.load %arg2[%c5, %c0_30, %c0_31] : memref<9x87x29xbf16, #tpu.memory_space<vmem>>, vector<1x87x29xbf16>
    %34 = vector.shape_cast %33 : vector<1x87x29xbf16> to vector<87x29xbf16>
    %cst_32 = arith.constant dense<0.000000e+00> : vector<288x29xf32>
    %35 = tpu.matmul %32, %34, %cst_32 {dimension_numbers = #tpu.dot_dimension_numbers<[1], [0], [0], [1], [0, 0, 1, 1], [], []>} : vector<288x87xbf16>, vector<87x29xbf16>, vector<288x29xf32> -> vector<288x29xf32>
    %36 = arith.addf %30, %35 : vector<288x29xf32>
    %c0_33 = arith.constant 0 : index
    %c36 = arith.constant 36 : index
    %c0_34 = arith.constant 0 : index
    %37 = vector.load %arg1[%c0_33, %c36, %c0_34] : memref<1x336x87xbf16, #tpu.memory_space<vmem>>, vector<1x288x87xbf16>
    %38 = vector.shape_cast %37 : vector<1x288x87xbf16> to vector<288x87xbf16>
    %c6 = arith.constant 6 : index
    %c0_35 = arith.constant 0 : index
    %c0_36 = arith.constant 0 : index
    %39 = vector.load %arg2[%c6, %c0_35, %c0_36] : memref<9x87x29xbf16, #tpu.memory_space<vmem>>, vector<1x87x29xbf16>
    %40 = vector.shape_cast %39 : vector<1x87x29xbf16> to vector<87x29xbf16>
    %cst_37 = arith.constant dense<0.000000e+00> : vector<288x29xf32>
    %41 = tpu.matmul %38, %40, %cst_37 {dimension_numbers = #tpu.dot_dimension_numbers<[1], [0], [0], [1], [0, 0, 1, 1], [], []>} : vector<288x87xbf16>, vector<87x29xbf16>, vector<288x29xf32> -> vector<288x29xf32>
    %42 = arith.addf %36, %41 : vector<288x29xf32>
    %c0_38 = arith.constant 0 : index
    %c37 = arith.constant 37 : index
    %c0_39 = arith.constant 0 : index
    %43 = vector.load %arg1[%c0_38, %c37, %c0_39] : memref<1x336x87xbf16, #tpu.memory_space<vmem>>, vector<1x288x87xbf16>
    %44 = vector.shape_cast %43 : vector<1x288x87xbf16> to vector<288x87xbf16>
    %c7 = arith.constant 7 : index
    %c0_40 = arith.constant 0 : index
    %c0_41 = arith.constant 0 : index
    %45 = vector.load %arg2[%c7, %c0_40, %c0_41] : memref<9x87x29xbf16, #tpu.memory_space<vmem>>, vector<1x87x29xbf16>
    %46 = vector.shape_cast %45 : vector<1x87x29xbf16> to vector<87x29xbf16>
    %cst_42 = arith.constant dense<0.000000e+00> : vector<288x29xf32>
    %47 = tpu.matmul %44, %46, %cst_42 {dimension_numbers = #tpu.dot_dimension_numbers<[1], [0], [0], [1], [0, 0, 1, 1], [], []>} : vector<288x87xbf16>, vector<87x29xbf16>, vector<288x29xf32> -> vector<288x29xf32>
    %48 = arith.addf %42, %47 : vector<288x29xf32>
    %c0_43 = arith.constant 0 : index
    %c38 = arith.constant 38 : index
    %c0_44 = arith.constant 0 : index
    %49 = vector.load %arg1[%c0_43, %c38, %c0_44] : memref<1x336x87xbf16, #tpu.memory_space<vmem>>, vector<1x288x87xbf16>
    %50 = vector.shape_cast %49 : vector<1x288x87xbf16> to vector<288x87xbf16>
    %c8 = arith.constant 8 : index
    %c0_45 = arith.constant 0 : index
    %c0_46 = arith.constant 0 : index
    %51 = vector.load %arg2[%c8, %c0_45, %c0_46] : memref<9x87x29xbf16, #tpu.memory_space<vmem>>, vector<1x87x29xbf16>
    %52 = vector.shape_cast %51 : vector<1x87x29xbf16> to vector<87x29xbf16>
    %cst_47 = arith.constant dense<0.000000e+00> : vector<288x29xf32>
    %53 = tpu.matmul %50, %52, %cst_47 {dimension_numbers = #tpu.dot_dimension_numbers<[1], [0], [0], [1], [0, 0, 1, 1], [], []>} : vector<288x87xbf16>, vector<87x29xbf16>, vector<288x29xf32> -> vector<288x29xf32>
    %54 = arith.addf %48, %53 : vector<288x29xf32>
    %c0_48 = arith.constant 0 : index
    %c0_49 = arith.constant 0 : index
    %c0_50 = arith.constant 0 : index
    %55 = vector.load %arg3[%c0_48, %c0_49, %c0_50] : memref<1x288x29xf32, #tpu.memory_space<vmem>>, vector<1x288x29xf32>
    %56 = vector.shape_cast %55 : vector<1x288x29xf32> to vector<288x29xf32>
    %57 = vector.shape_cast %54 : vector<288x29xf32> to vector<1x288x29xf32>
    tpu.vector_store %arg3[%c0_48, %c0_49, %c0_50], %57 {strides = array<i32>} : memref<1x288x29xf32, #tpu.memory_space<vmem>>, vector<1x288x29xf32>,
    return
  }
  func.func @transform_0(%arg0: i32) -> (i32, i32, i32) {
    %c0_i32 = arith.constant 0 : i32
    %c0_i32_0 = arith.constant 0 : i32
    %c0_i32_1 = arith.constant 0 : i32
    return %arg0, %c0_i32, %c0_i32_0 : i32, i32, i32
  }
  func.func @transform_1(%arg0: i32) -> (i32, i32, i32) {
    %c0_i32 = arith.constant 0 : i32
    %c0_i32_0 = arith.constant 0 : i32
    %c0_i32_1 = arith.constant 0 : i32
    %c0_i32_2 = arith.constant 0 : i32
    return %c0_i32, %c0_i32_0, %c0_i32_1 : i32, i32, i32
  }
  func.func @transform_2(%arg0: i32) -> (i32, i32, i32) {
    %c0_i32 = arith.constant 0 : i32
    %c0_i32_0 = arith.constant 0 : i32
    %c0_i32_1 = arith.constant 0 : i32
    return %arg0, %c0_i32, %c0_i32_0 : i32, i32, i32
  }
}

module attributes {stable_mosaic.version = 11 : i64} {
  func.func @_knn_kernel(%arg0: i32, %arg1: memref<256x3xf32, #tpu.memory_space<vmem>>, %arg2: memref<3x1664xf32, #tpu.memory_space<vmem>>, %arg3: memref<256x1xi32, #tpu.memory_space<vmem>>) attributes {dimension_semantics = [#tpu.dimension_semantics<parallel>], iteration_bounds = array<i64: 1>, scalar_prefetch = 0 : i64, scratch_operands = 0 : i64, tpu.core_type = #tpu.core_type<tc>, window_params = [{transform_indices = @transform_0, window_bounds = array<i64: 256, 3>}, {pipeline_mode = #tpu.pipeline_mode<synchronous>, transform_indices = @transform_1, window_bounds = array<i64: 3, 1664>}, {transform_indices = @transform_2, window_bounds = array<i64: 256, 1>}]} {
    %c0 = arith.constant 0 : index
    %c0_0 = arith.constant 0 : index
    %0 = vector.load %arg1[%c0, %c0_0] : memref<256x3xf32, #tpu.memory_space<vmem>>, vector<256x3xf32>
    %c0_1 = arith.constant 0 : index
    %c0_2 = arith.constant 0 : index
    %1 = vector.load %arg2[%c0_1, %c0_2] : memref<3x1664xf32, #tpu.memory_space<vmem>>, vector<3x1664xf32>
    %cst = arith.constant 0.000000e+00 : f32
    %2 = vector.broadcast %cst : f32 to vector<256x1664xf32>
    %3 = vector.extract_strided_slice %0 {offsets = [0, 0], sizes = [256, 1], strides = [1, 1]} : vector<256x3xf32> to vector<256x1xf32>
    %4 = vector.extract_strided_slice %1 {offsets = [0, 0], sizes = [1, 1664], strides = [1, 1]} : vector<3x1664xf32> to vector<1x1664xf32>
    %5 = vector.broadcast %3 : vector<256x1xf32> to vector<256x1664xf32>
    %6 = vector.broadcast %4 : vector<1x1664xf32> to vector<256x1664xf32>
    %7 = arith.subf %5, %6 : vector<256x1664xf32>
    %8 = arith.mulf %7, %7 : vector<256x1664xf32>
    %9 = arith.addf %2, %8 : vector<256x1664xf32>
    %10 = vector.extract_strided_slice %0 {offsets = [0, 1], sizes = [256, 1], strides = [1, 1]} : vector<256x3xf32> to vector<256x1xf32>
    %11 = vector.extract_strided_slice %1 {offsets = [1, 0], sizes = [1, 1664], strides = [1, 1]} : vector<3x1664xf32> to vector<1x1664xf32>
    %12 = vector.broadcast %10 : vector<256x1xf32> to vector<256x1664xf32>
    %13 = vector.broadcast %11 : vector<1x1664xf32> to vector<256x1664xf32>
    %14 = arith.subf %12, %13 : vector<256x1664xf32>
    %15 = arith.mulf %14, %14 : vector<256x1664xf32>
    %16 = arith.addf %9, %15 : vector<256x1664xf32>
    %17 = vector.extract_strided_slice %0 {offsets = [0, 2], sizes = [256, 1], strides = [1, 1]} : vector<256x3xf32> to vector<256x1xf32>
    %18 = vector.extract_strided_slice %1 {offsets = [2, 0], sizes = [1, 1664], strides = [1, 1]} : vector<3x1664xf32> to vector<1x1664xf32>
    %19 = vector.broadcast %17 : vector<256x1xf32> to vector<256x1664xf32>
    %20 = vector.broadcast %18 : vector<1x1664xf32> to vector<256x1664xf32>
    %21 = arith.subf %19, %20 : vector<256x1664xf32>
    %22 = arith.mulf %21, %21 : vector<256x1664xf32>
    %23 = arith.addf %16, %22 : vector<256x1664xf32>
    %cst_3 = arith.constant dense<0x7F800000> : vector<256xf32>
    %24 = vector.multi_reduction <minimumf>, %23, %cst_3 [1] : vector<256x1664xf32> to vector<256xf32>
    %25 = vector.shape_cast %24 : vector<256xf32> to vector<256x1xf32>
    %26 = tpu.iota {dimensions = array<i32: 1>} : vector<256x1664xi32>
    %27 = vector.broadcast %25 : vector<256x1xf32> to vector<256x1664xf32>
    %28 = arith.cmpf ole, %23, %27 : vector<256x1664xf32>
    %c1073741824_i32 = arith.constant 1073741824 : i32
    %29 = vector.broadcast %c1073741824_i32 : i32 to vector<256x1664xi32>
    %30 = arith.select %28, %26, %29 : vector<256x1664xi1>, vector<256x1664xi32>
    %cst_4 = arith.constant dense<2147483647> : vector<256xi32>
    %31 = vector.multi_reduction <minsi>, %30, %cst_4 [1] : vector<256x1664xi32> to vector<256xi32>
    %32 = vector.shape_cast %31 : vector<256xi32> to vector<256x1xi32>
    %c0_5 = arith.constant 0 : index
    %c0_6 = arith.constant 0 : index
    %33 = vector.load %arg3[%c0_5, %c0_6] : memref<256x1xi32, #tpu.memory_space<vmem>>, vector<256x1xi32>
    tpu.vector_store %arg3[%c0_5, %c0_6], %32 {strides = array<i32>} : memref<256x1xi32, #tpu.memory_space<vmem>>, vector<256x1xi32>,
    return
  }
  func.func @transform_0(%arg0: i32) -> (i32, i32) {
    %c0_i32 = arith.constant 0 : i32
    %c0_i32_0 = arith.constant 0 : i32
    return %arg0, %c0_i32 : i32, i32
  }
  func.func @transform_1(%arg0: i32) -> (i32, i32) {
    %c0_i32 = arith.constant 0 : i32
    %c0_i32_0 = arith.constant 0 : i32
    %c0_i32_1 = arith.constant 0 : i32
    return %c0_i32, %c0_i32_0 : i32, i32
  }
  func.func @transform_2(%arg0: i32) -> (i32, i32) {
    %c0_i32 = arith.constant 0 : i32
    %c0_i32_0 = arith.constant 0 : i32
    return %arg0, %c0_i32 : i32, i32
  }
}

module attributes {stable_mosaic.version = 11 : i64} {
  func.func @_conv_plane_kernel(%arg0: i32, %arg1: memref<1x336x87xbf16, #tpu.memory_space<vmem>>, %arg2: memref<9x87x29xbf16, #tpu.memory_space<vmem>>, %arg3: memref<1x288x29xf32, #tpu.memory_space<vmem>>) attributes {dimension_semantics = [#tpu.dimension_semantics<parallel>], iteration_bounds = array<i64: 8>, scalar_prefetch = 0 : i64, scratch_operands = 0 : i64, tpu.core_type = #tpu.core_type<tc>, window_params = [{transform_indices = @transform_0, window_bounds = array<i64: 1, 336, 87>}, {pipeline_mode = #tpu.pipeline_mode<synchronous>, transform_indices = @transform_1, window_bounds = array<i64: 9, 87, 29>}, {transform_indices = @transform_2, window_bounds = array<i64: 1, 288, 29>}]} {
    %cst = arith.constant 0.000000e+00 : f32
    %0 = vector.broadcast %cst : f32 to vector<288x29xf32>
    %c0 = arith.constant 0 : index
    %c0_0 = arith.constant 0 : index
    %c0_1 = arith.constant 0 : index
    %1 = vector.load %arg1[%c0, %c0_0, %c0_1] : memref<1x336x87xbf16, #tpu.memory_space<vmem>>, vector<1x288x87xbf16>
    %2 = vector.shape_cast %1 : vector<1x288x87xbf16> to vector<288x87xbf16>
    %c0_2 = arith.constant 0 : index
    %c0_3 = arith.constant 0 : index
    %c0_4 = arith.constant 0 : index
    %3 = vector.load %arg2[%c0_2, %c0_3, %c0_4] : memref<9x87x29xbf16, #tpu.memory_space<vmem>>, vector<1x87x29xbf16>
    %4 = vector.shape_cast %3 : vector<1x87x29xbf16> to vector<87x29xbf16>
    %cst_5 = arith.constant dense<0.000000e+00> : vector<288x29xf32>
    %5 = tpu.matmul %2, %4, %cst_5 {dimension_numbers = #tpu.dot_dimension_numbers<[1], [0], [0], [1], [0, 0, 1, 1], [], []>} : vector<288x87xbf16>, vector<87x29xbf16>, vector<288x29xf32> -> vector<288x29xf32>
    %6 = arith.addf %0, %5 : vector<288x29xf32>
    %c0_6 = arith.constant 0 : index
    %c1 = arith.constant 1 : index
    %c0_7 = arith.constant 0 : index
    %7 = vector.load %arg1[%c0_6, %c1, %c0_7] : memref<1x336x87xbf16, #tpu.memory_space<vmem>>, vector<1x288x87xbf16>
    %8 = vector.shape_cast %7 : vector<1x288x87xbf16> to vector<288x87xbf16>
    %c1_8 = arith.constant 1 : index
    %c0_9 = arith.constant 0 : index
    %c0_10 = arith.constant 0 : index
    %9 = vector.load %arg2[%c1_8, %c0_9, %c0_10] : memref<9x87x29xbf16, #tpu.memory_space<vmem>>, vector<1x87x29xbf16>
    %10 = vector.shape_cast %9 : vector<1x87x29xbf16> to vector<87x29xbf16>
    %cst_11 = arith.constant dense<0.000000e+00> : vector<288x29xf32>
    %11 = tpu.matmul %8, %10, %cst_11 {dimension_numbers = #tpu.dot_dimension_numbers<[1], [0], [0], [1], [0, 0, 1, 1], [], []>} : vector<288x87xbf16>, vector<87x29xbf16>, vector<288x29xf32> -> vector<288x29xf32>
    %12 = arith.addf %6, %11 : vector<288x29xf32>
    %c0_12 = arith.constant 0 : index
    %c2 = arith.constant 2 : index
    %c0_13 = arith.constant 0 : index
    %13 = vector.load %arg1[%c0_12, %c2, %c0_13] : memref<1x336x87xbf16, #tpu.memory_space<vmem>>, vector<1x288x87xbf16>
    %14 = vector.shape_cast %13 : vector<1x288x87xbf16> to vector<288x87xbf16>
    %c2_14 = arith.constant 2 : index
    %c0_15 = arith.constant 0 : index
    %c0_16 = arith.constant 0 : index
    %15 = vector.load %arg2[%c2_14, %c0_15, %c0_16] : memref<9x87x29xbf16, #tpu.memory_space<vmem>>, vector<1x87x29xbf16>
    %16 = vector.shape_cast %15 : vector<1x87x29xbf16> to vector<87x29xbf16>
    %cst_17 = arith.constant dense<0.000000e+00> : vector<288x29xf32>
    %17 = tpu.matmul %14, %16, %cst_17 {dimension_numbers = #tpu.dot_dimension_numbers<[1], [0], [0], [1], [0, 0, 1, 1], [], []>} : vector<288x87xbf16>, vector<87x29xbf16>, vector<288x29xf32> -> vector<288x29xf32>
    %18 = arith.addf %12, %17 : vector<288x29xf32>
    %c0_18 = arith.constant 0 : index
    %c18 = arith.constant 18 : index
    %c0_19 = arith.constant 0 : index
    %19 = vector.load %arg1[%c0_18, %c18, %c0_19] : memref<1x336x87xbf16, #tpu.memory_space<vmem>>, vector<1x288x87xbf16>
    %20 = vector.shape_cast %19 : vector<1x288x87xbf16> to vector<288x87xbf16>
    %c3 = arith.constant 3 : index
    %c0_20 = arith.constant 0 : index
    %c0_21 = arith.constant 0 : index
    %21 = vector.load %arg2[%c3, %c0_20, %c0_21] : memref<9x87x29xbf16, #tpu.memory_space<vmem>>, vector<1x87x29xbf16>
    %22 = vector.shape_cast %21 : vector<1x87x29xbf16> to vector<87x29xbf16>
    %cst_22 = arith.constant dense<0.000000e+00> : vector<288x29xf32>
    %23 = tpu.matmul %20, %22, %cst_22 {dimension_numbers = #tpu.dot_dimension_numbers<[1], [0], [0], [1], [0, 0, 1, 1], [], []>} : vector<288x87xbf16>, vector<87x29xbf16>, vector<288x29xf32> -> vector<288x29xf32>
    %24 = arith.addf %18, %23 : vector<288x29xf32>
    %c0_23 = arith.constant 0 : index
    %c19 = arith.constant 19 : index
    %c0_24 = arith.constant 0 : index
    %25 = vector.load %arg1[%c0_23, %c19, %c0_24] : memref<1x336x87xbf16, #tpu.memory_space<vmem>>, vector<1x288x87xbf16>
    %26 = vector.shape_cast %25 : vector<1x288x87xbf16> to vector<288x87xbf16>
    %c4 = arith.constant 4 : index
    %c0_25 = arith.constant 0 : index
    %c0_26 = arith.constant 0 : index
    %27 = vector.load %arg2[%c4, %c0_25, %c0_26] : memref<9x87x29xbf16, #tpu.memory_space<vmem>>, vector<1x87x29xbf16>
    %28 = vector.shape_cast %27 : vector<1x87x29xbf16> to vector<87x29xbf16>
    %cst_27 = arith.constant dense<0.000000e+00> : vector<288x29xf32>
    %29 = tpu.matmul %26, %28, %cst_27 {dimension_numbers = #tpu.dot_dimension_numbers<[1], [0], [0], [1], [0, 0, 1, 1], [], []>} : vector<288x87xbf16>, vector<87x29xbf16>, vector<288x29xf32> -> vector<288x29xf32>
    %30 = arith.addf %24, %29 : vector<288x29xf32>
    %c0_28 = arith.constant 0 : index
    %c20 = arith.constant 20 : index
    %c0_29 = arith.constant 0 : index
    %31 = vector.load %arg1[%c0_28, %c20, %c0_29] : memref<1x336x87xbf16, #tpu.memory_space<vmem>>, vector<1x288x87xbf16>
    %32 = vector.shape_cast %31 : vector<1x288x87xbf16> to vector<288x87xbf16>
    %c5 = arith.constant 5 : index
    %c0_30 = arith.constant 0 : index
    %c0_31 = arith.constant 0 : index
    %33 = vector.load %arg2[%c5, %c0_30, %c0_31] : memref<9x87x29xbf16, #tpu.memory_space<vmem>>, vector<1x87x29xbf16>
    %34 = vector.shape_cast %33 : vector<1x87x29xbf16> to vector<87x29xbf16>
    %cst_32 = arith.constant dense<0.000000e+00> : vector<288x29xf32>
    %35 = tpu.matmul %32, %34, %cst_32 {dimension_numbers = #tpu.dot_dimension_numbers<[1], [0], [0], [1], [0, 0, 1, 1], [], []>} : vector<288x87xbf16>, vector<87x29xbf16>, vector<288x29xf32> -> vector<288x29xf32>
    %36 = arith.addf %30, %35 : vector<288x29xf32>
    %c0_33 = arith.constant 0 : index
    %c36 = arith.constant 36 : index
    %c0_34 = arith.constant 0 : index
    %37 = vector.load %arg1[%c0_33, %c36, %c0_34] : memref<1x336x87xbf16, #tpu.memory_space<vmem>>, vector<1x288x87xbf16>
    %38 = vector.shape_cast %37 : vector<1x288x87xbf16> to vector<288x87xbf16>
    %c6 = arith.constant 6 : index
    %c0_35 = arith.constant 0 : index
    %c0_36 = arith.constant 0 : index
    %39 = vector.load %arg2[%c6, %c0_35, %c0_36] : memref<9x87x29xbf16, #tpu.memory_space<vmem>>, vector<1x87x29xbf16>
    %40 = vector.shape_cast %39 : vector<1x87x29xbf16> to vector<87x29xbf16>
    %cst_37 = arith.constant dense<0.000000e+00> : vector<288x29xf32>
    %41 = tpu.matmul %38, %40, %cst_37 {dimension_numbers = #tpu.dot_dimension_numbers<[1], [0], [0], [1], [0, 0, 1, 1], [], []>} : vector<288x87xbf16>, vector<87x29xbf16>, vector<288x29xf32> -> vector<288x29xf32>
    %42 = arith.addf %36, %41 : vector<288x29xf32>
    %c0_38 = arith.constant 0 : index
    %c37 = arith.constant 37 : index
    %c0_39 = arith.constant 0 : index
    %43 = vector.load %arg1[%c0_38, %c37, %c0_39] : memref<1x336x87xbf16, #tpu.memory_space<vmem>>, vector<1x288x87xbf16>
    %44 = vector.shape_cast %43 : vector<1x288x87xbf16> to vector<288x87xbf16>
    %c7 = arith.constant 7 : index
    %c0_40 = arith.constant 0 : index
    %c0_41 = arith.constant 0 : index
    %45 = vector.load %arg2[%c7, %c0_40, %c0_41] : memref<9x87x29xbf16, #tpu.memory_space<vmem>>, vector<1x87x29xbf16>
    %46 = vector.shape_cast %45 : vector<1x87x29xbf16> to vector<87x29xbf16>
    %cst_42 = arith.constant dense<0.000000e+00> : vector<288x29xf32>
    %47 = tpu.matmul %44, %46, %cst_42 {dimension_numbers = #tpu.dot_dimension_numbers<[1], [0], [0], [1], [0, 0, 1, 1], [], []>} : vector<288x87xbf16>, vector<87x29xbf16>, vector<288x29xf32> -> vector<288x29xf32>
    %48 = arith.addf %42, %47 : vector<288x29xf32>
    %c0_43 = arith.constant 0 : index
    %c38 = arith.constant 38 : index
    %c0_44 = arith.constant 0 : index
    %49 = vector.load %arg1[%c0_43, %c38, %c0_44] : memref<1x336x87xbf16, #tpu.memory_space<vmem>>, vector<1x288x87xbf16>
    %50 = vector.shape_cast %49 : vector<1x288x87xbf16> to vector<288x87xbf16>
    %c8 = arith.constant 8 : index
    %c0_45 = arith.constant 0 : index
    %c0_46 = arith.constant 0 : index
    %51 = vector.load %arg2[%c8, %c0_45, %c0_46] : memref<9x87x29xbf16, #tpu.memory_space<vmem>>, vector<1x87x29xbf16>
    %52 = vector.shape_cast %51 : vector<1x87x29xbf16> to vector<87x29xbf16>
    %cst_47 = arith.constant dense<0.000000e+00> : vector<288x29xf32>
    %53 = tpu.matmul %50, %52, %cst_47 {dimension_numbers = #tpu.dot_dimension_numbers<[1], [0], [0], [1], [0, 0, 1, 1], [], []>} : vector<288x87xbf16>, vector<87x29xbf16>, vector<288x29xf32> -> vector<288x29xf32>
    %54 = arith.addf %48, %53 : vector<288x29xf32>
    %c0_48 = arith.constant 0 : index
    %c0_49 = arith.constant 0 : index
    %c0_50 = arith.constant 0 : index
    %55 = vector.load %arg3[%c0_48, %c0_49, %c0_50] : memref<1x288x29xf32, #tpu.memory_space<vmem>>, vector<1x288x29xf32>
    %56 = vector.shape_cast %55 : vector<1x288x29xf32> to vector<288x29xf32>
    %57 = vector.shape_cast %54 : vector<288x29xf32> to vector<1x288x29xf32>
    tpu.vector_store %arg3[%c0_48, %c0_49, %c0_50], %57 {strides = array<i32>} : memref<1x288x29xf32, #tpu.memory_space<vmem>>, vector<1x288x29xf32>,
    return
  }
  func.func @transform_0(%arg0: i32) -> (i32, i32, i32) {
    %c0_i32 = arith.constant 0 : i32
    %c0_i32_0 = arith.constant 0 : i32
    %c0_i32_1 = arith.constant 0 : i32
    return %arg0, %c0_i32, %c0_i32_0 : i32, i32, i32
  }
  func.func @transform_1(%arg0: i32) -> (i32, i32, i32) {
    %c0_i32 = arith.constant 0 : i32
    %c0_i32_0 = arith.constant 0 : i32
    %c0_i32_1 = arith.constant 0 : i32
    %c0_i32_2 = arith.constant 0 : i32
    return %c0_i32, %c0_i32_0, %c0_i32_1 : i32, i32, i32
  }
  func.func @transform_2(%arg0: i32) -> (i32, i32, i32) {
    %c0_i32 = arith.constant 0 : i32
    %c0_i32_0 = arith.constant 0 : i32
    %c0_i32_1 = arith.constant 0 : i32
    return %arg0, %c0_i32, %c0_i32_0 : i32, i32, i32
  }
}

module attributes {stable_mosaic.version = 11 : i64} {
  func.func @_conv_plane_kernel(%arg0: i32, %arg1: memref<1x112x87xbf16, #tpu.memory_space<vmem>>, %arg2: memref<9x87x29xbf16, #tpu.memory_space<vmem>>, %arg3: memref<1x80x29xf32, #tpu.memory_space<vmem>>) attributes {dimension_semantics = [#tpu.dimension_semantics<parallel>], iteration_bounds = array<i64: 8>, scalar_prefetch = 0 : i64, scratch_operands = 0 : i64, tpu.core_type = #tpu.core_type<tc>, window_params = [{transform_indices = @transform_0, window_bounds = array<i64: 1, 112, 87>}, {pipeline_mode = #tpu.pipeline_mode<synchronous>, transform_indices = @transform_1, window_bounds = array<i64: 9, 87, 29>}, {transform_indices = @transform_2, window_bounds = array<i64: 1, 80, 29>}]} {
    %cst = arith.constant 0.000000e+00 : f32
    %0 = vector.broadcast %cst : f32 to vector<80x29xf32>
    %c0 = arith.constant 0 : index
    %c0_0 = arith.constant 0 : index
    %c0_1 = arith.constant 0 : index
    %1 = vector.load %arg1[%c0, %c0_0, %c0_1] : memref<1x112x87xbf16, #tpu.memory_space<vmem>>, vector<1x80x87xbf16>
    %2 = vector.shape_cast %1 : vector<1x80x87xbf16> to vector<80x87xbf16>
    %c0_2 = arith.constant 0 : index
    %c0_3 = arith.constant 0 : index
    %c0_4 = arith.constant 0 : index
    %3 = vector.load %arg2[%c0_2, %c0_3, %c0_4] : memref<9x87x29xbf16, #tpu.memory_space<vmem>>, vector<1x87x29xbf16>
    %4 = vector.shape_cast %3 : vector<1x87x29xbf16> to vector<87x29xbf16>
    %cst_5 = arith.constant dense<0.000000e+00> : vector<80x29xf32>
    %5 = tpu.matmul %2, %4, %cst_5 {dimension_numbers = #tpu.dot_dimension_numbers<[1], [0], [0], [1], [0, 0, 1, 1], [], []>} : vector<80x87xbf16>, vector<87x29xbf16>, vector<80x29xf32> -> vector<80x29xf32>
    %6 = arith.addf %0, %5 : vector<80x29xf32>
    %c0_6 = arith.constant 0 : index
    %c1 = arith.constant 1 : index
    %c0_7 = arith.constant 0 : index
    %7 = vector.load %arg1[%c0_6, %c1, %c0_7] : memref<1x112x87xbf16, #tpu.memory_space<vmem>>, vector<1x80x87xbf16>
    %8 = vector.shape_cast %7 : vector<1x80x87xbf16> to vector<80x87xbf16>
    %c1_8 = arith.constant 1 : index
    %c0_9 = arith.constant 0 : index
    %c0_10 = arith.constant 0 : index
    %9 = vector.load %arg2[%c1_8, %c0_9, %c0_10] : memref<9x87x29xbf16, #tpu.memory_space<vmem>>, vector<1x87x29xbf16>
    %10 = vector.shape_cast %9 : vector<1x87x29xbf16> to vector<87x29xbf16>
    %cst_11 = arith.constant dense<0.000000e+00> : vector<80x29xf32>
    %11 = tpu.matmul %8, %10, %cst_11 {dimension_numbers = #tpu.dot_dimension_numbers<[1], [0], [0], [1], [0, 0, 1, 1], [], []>} : vector<80x87xbf16>, vector<87x29xbf16>, vector<80x29xf32> -> vector<80x29xf32>
    %12 = arith.addf %6, %11 : vector<80x29xf32>
    %c0_12 = arith.constant 0 : index
    %c2 = arith.constant 2 : index
    %c0_13 = arith.constant 0 : index
    %13 = vector.load %arg1[%c0_12, %c2, %c0_13] : memref<1x112x87xbf16, #tpu.memory_space<vmem>>, vector<1x80x87xbf16>
    %14 = vector.shape_cast %13 : vector<1x80x87xbf16> to vector<80x87xbf16>
    %c2_14 = arith.constant 2 : index
    %c0_15 = arith.constant 0 : index
    %c0_16 = arith.constant 0 : index
    %15 = vector.load %arg2[%c2_14, %c0_15, %c0_16] : memref<9x87x29xbf16, #tpu.memory_space<vmem>>, vector<1x87x29xbf16>
    %16 = vector.shape_cast %15 : vector<1x87x29xbf16> to vector<87x29xbf16>
    %cst_17 = arith.constant dense<0.000000e+00> : vector<80x29xf32>
    %17 = tpu.matmul %14, %16, %cst_17 {dimension_numbers = #tpu.dot_dimension_numbers<[1], [0], [0], [1], [0, 0, 1, 1], [], []>} : vector<80x87xbf16>, vector<87x29xbf16>, vector<80x29xf32> -> vector<80x29xf32>
    %18 = arith.addf %12, %17 : vector<80x29xf32>
    %c0_18 = arith.constant 0 : index
    %c10 = arith.constant 10 : index
    %c0_19 = arith.constant 0 : index
    %19 = vector.load %arg1[%c0_18, %c10, %c0_19] : memref<1x112x87xbf16, #tpu.memory_space<vmem>>, vector<1x80x87xbf16>
    %20 = vector.shape_cast %19 : vector<1x80x87xbf16> to vector<80x87xbf16>
    %c3 = arith.constant 3 : index
    %c0_20 = arith.constant 0 : index
    %c0_21 = arith.constant 0 : index
    %21 = vector.load %arg2[%c3, %c0_20, %c0_21] : memref<9x87x29xbf16, #tpu.memory_space<vmem>>, vector<1x87x29xbf16>
    %22 = vector.shape_cast %21 : vector<1x87x29xbf16> to vector<87x29xbf16>
    %cst_22 = arith.constant dense<0.000000e+00> : vector<80x29xf32>
    %23 = tpu.matmul %20, %22, %cst_22 {dimension_numbers = #tpu.dot_dimension_numbers<[1], [0], [0], [1], [0, 0, 1, 1], [], []>} : vector<80x87xbf16>, vector<87x29xbf16>, vector<80x29xf32> -> vector<80x29xf32>
    %24 = arith.addf %18, %23 : vector<80x29xf32>
    %c0_23 = arith.constant 0 : index
    %c11 = arith.constant 11 : index
    %c0_24 = arith.constant 0 : index
    %25 = vector.load %arg1[%c0_23, %c11, %c0_24] : memref<1x112x87xbf16, #tpu.memory_space<vmem>>, vector<1x80x87xbf16>
    %26 = vector.shape_cast %25 : vector<1x80x87xbf16> to vector<80x87xbf16>
    %c4 = arith.constant 4 : index
    %c0_25 = arith.constant 0 : index
    %c0_26 = arith.constant 0 : index
    %27 = vector.load %arg2[%c4, %c0_25, %c0_26] : memref<9x87x29xbf16, #tpu.memory_space<vmem>>, vector<1x87x29xbf16>
    %28 = vector.shape_cast %27 : vector<1x87x29xbf16> to vector<87x29xbf16>
    %cst_27 = arith.constant dense<0.000000e+00> : vector<80x29xf32>
    %29 = tpu.matmul %26, %28, %cst_27 {dimension_numbers = #tpu.dot_dimension_numbers<[1], [0], [0], [1], [0, 0, 1, 1], [], []>} : vector<80x87xbf16>, vector<87x29xbf16>, vector<80x29xf32> -> vector<80x29xf32>
    %30 = arith.addf %24, %29 : vector<80x29xf32>
    %c0_28 = arith.constant 0 : index
    %c12 = arith.constant 12 : index
    %c0_29 = arith.constant 0 : index
    %31 = vector.load %arg1[%c0_28, %c12, %c0_29] : memref<1x112x87xbf16, #tpu.memory_space<vmem>>, vector<1x80x87xbf16>
    %32 = vector.shape_cast %31 : vector<1x80x87xbf16> to vector<80x87xbf16>
    %c5 = arith.constant 5 : index
    %c0_30 = arith.constant 0 : index
    %c0_31 = arith.constant 0 : index
    %33 = vector.load %arg2[%c5, %c0_30, %c0_31] : memref<9x87x29xbf16, #tpu.memory_space<vmem>>, vector<1x87x29xbf16>
    %34 = vector.shape_cast %33 : vector<1x87x29xbf16> to vector<87x29xbf16>
    %cst_32 = arith.constant dense<0.000000e+00> : vector<80x29xf32>
    %35 = tpu.matmul %32, %34, %cst_32 {dimension_numbers = #tpu.dot_dimension_numbers<[1], [0], [0], [1], [0, 0, 1, 1], [], []>} : vector<80x87xbf16>, vector<87x29xbf16>, vector<80x29xf32> -> vector<80x29xf32>
    %36 = arith.addf %30, %35 : vector<80x29xf32>
    %c0_33 = arith.constant 0 : index
    %c20 = arith.constant 20 : index
    %c0_34 = arith.constant 0 : index
    %37 = vector.load %arg1[%c0_33, %c20, %c0_34] : memref<1x112x87xbf16, #tpu.memory_space<vmem>>, vector<1x80x87xbf16>
    %38 = vector.shape_cast %37 : vector<1x80x87xbf16> to vector<80x87xbf16>
    %c6 = arith.constant 6 : index
    %c0_35 = arith.constant 0 : index
    %c0_36 = arith.constant 0 : index
    %39 = vector.load %arg2[%c6, %c0_35, %c0_36] : memref<9x87x29xbf16, #tpu.memory_space<vmem>>, vector<1x87x29xbf16>
    %40 = vector.shape_cast %39 : vector<1x87x29xbf16> to vector<87x29xbf16>
    %cst_37 = arith.constant dense<0.000000e+00> : vector<80x29xf32>
    %41 = tpu.matmul %38, %40, %cst_37 {dimension_numbers = #tpu.dot_dimension_numbers<[1], [0], [0], [1], [0, 0, 1, 1], [], []>} : vector<80x87xbf16>, vector<87x29xbf16>, vector<80x29xf32> -> vector<80x29xf32>
    %42 = arith.addf %36, %41 : vector<80x29xf32>
    %c0_38 = arith.constant 0 : index
    %c21 = arith.constant 21 : index
    %c0_39 = arith.constant 0 : index
    %43 = vector.load %arg1[%c0_38, %c21, %c0_39] : memref<1x112x87xbf16, #tpu.memory_space<vmem>>, vector<1x80x87xbf16>
    %44 = vector.shape_cast %43 : vector<1x80x87xbf16> to vector<80x87xbf16>
    %c7 = arith.constant 7 : index
    %c0_40 = arith.constant 0 : index
    %c0_41 = arith.constant 0 : index
    %45 = vector.load %arg2[%c7, %c0_40, %c0_41] : memref<9x87x29xbf16, #tpu.memory_space<vmem>>, vector<1x87x29xbf16>
    %46 = vector.shape_cast %45 : vector<1x87x29xbf16> to vector<87x29xbf16>
    %cst_42 = arith.constant dense<0.000000e+00> : vector<80x29xf32>
    %47 = tpu.matmul %44, %46, %cst_42 {dimension_numbers = #tpu.dot_dimension_numbers<[1], [0], [0], [1], [0, 0, 1, 1], [], []>} : vector<80x87xbf16>, vector<87x29xbf16>, vector<80x29xf32> -> vector<80x29xf32>
    %48 = arith.addf %42, %47 : vector<80x29xf32>
    %c0_43 = arith.constant 0 : index
    %c22 = arith.constant 22 : index
    %c0_44 = arith.constant 0 : index
    %49 = vector.load %arg1[%c0_43, %c22, %c0_44] : memref<1x112x87xbf16, #tpu.memory_space<vmem>>, vector<1x80x87xbf16>
    %50 = vector.shape_cast %49 : vector<1x80x87xbf16> to vector<80x87xbf16>
    %c8 = arith.constant 8 : index
    %c0_45 = arith.constant 0 : index
    %c0_46 = arith.constant 0 : index
    %51 = vector.load %arg2[%c8, %c0_45, %c0_46] : memref<9x87x29xbf16, #tpu.memory_space<vmem>>, vector<1x87x29xbf16>
    %52 = vector.shape_cast %51 : vector<1x87x29xbf16> to vector<87x29xbf16>
    %cst_47 = arith.constant dense<0.000000e+00> : vector<80x29xf32>
    %53 = tpu.matmul %50, %52, %cst_47 {dimension_numbers = #tpu.dot_dimension_numbers<[1], [0], [0], [1], [0, 0, 1, 1], [], []>} : vector<80x87xbf16>, vector<87x29xbf16>, vector<80x29xf32> -> vector<80x29xf32>
    %54 = arith.addf %48, %53 : vector<80x29xf32>
    %c0_48 = arith.constant 0 : index
    %c0_49 = arith.constant 0 : index
    %c0_50 = arith.constant 0 : index
    %55 = vector.load %arg3[%c0_48, %c0_49, %c0_50] : memref<1x80x29xf32, #tpu.memory_space<vmem>>, vector<1x80x29xf32>
    %56 = vector.shape_cast %55 : vector<1x80x29xf32> to vector<80x29xf32>
    %57 = vector.shape_cast %54 : vector<80x29xf32> to vector<1x80x29xf32>
    tpu.vector_store %arg3[%c0_48, %c0_49, %c0_50], %57 {strides = array<i32>} : memref<1x80x29xf32, #tpu.memory_space<vmem>>, vector<1x80x29xf32>,
    return
  }
  func.func @transform_0(%arg0: i32) -> (i32, i32, i32) {
    %c0_i32 = arith.constant 0 : i32
    %c0_i32_0 = arith.constant 0 : i32
    %c0_i32_1 = arith.constant 0 : i32
    return %arg0, %c0_i32, %c0_i32_0 : i32, i32, i32
  }
  func.func @transform_1(%arg0: i32) -> (i32, i32, i32) {
    %c0_i32 = arith.constant 0 : i32
    %c0_i32_0 = arith.constant 0 : i32
    %c0_i32_1 = arith.constant 0 : i32
    %c0_i32_2 = arith.constant 0 : i32
    return %c0_i32, %c0_i32_0, %c0_i32_1 : i32, i32, i32
  }
  func.func @transform_2(%arg0: i32) -> (i32, i32, i32) {
    %c0_i32 = arith.constant 0 : i32
    %c0_i32_0 = arith.constant 0 : i32
    %c0_i32_1 = arith.constant 0 : i32
    return %arg0, %c0_i32, %c0_i32_0 : i32, i32, i32
  }
}

module attributes {stable_mosaic.version = 11 : i64} {
  func.func @_conv_plane_kernel(%arg0: i32, %arg1: memref<1x112x87xbf16, #tpu.memory_space<vmem>>, %arg2: memref<9x87x32xbf16, #tpu.memory_space<vmem>>, %arg3: memref<1x80x32xf32, #tpu.memory_space<vmem>>) attributes {dimension_semantics = [#tpu.dimension_semantics<parallel>], iteration_bounds = array<i64: 4>, scalar_prefetch = 0 : i64, scratch_operands = 0 : i64, tpu.core_type = #tpu.core_type<tc>, window_params = [{transform_indices = @transform_0, window_bounds = array<i64: 1, 112, 87>}, {pipeline_mode = #tpu.pipeline_mode<synchronous>, transform_indices = @transform_1, window_bounds = array<i64: 9, 87, 32>}, {transform_indices = @transform_2, window_bounds = array<i64: 1, 80, 32>}]} {
    %cst = arith.constant 0.000000e+00 : f32
    %0 = vector.broadcast %cst : f32 to vector<80x32xf32>
    %c0 = arith.constant 0 : index
    %c0_0 = arith.constant 0 : index
    %c0_1 = arith.constant 0 : index
    %1 = vector.load %arg1[%c0, %c0_0, %c0_1] : memref<1x112x87xbf16, #tpu.memory_space<vmem>>, vector<1x80x87xbf16>
    %2 = vector.shape_cast %1 : vector<1x80x87xbf16> to vector<80x87xbf16>
    %c0_2 = arith.constant 0 : index
    %c0_3 = arith.constant 0 : index
    %c0_4 = arith.constant 0 : index
    %3 = vector.load %arg2[%c0_2, %c0_3, %c0_4] : memref<9x87x32xbf16, #tpu.memory_space<vmem>>, vector<1x87x32xbf16>
    %4 = vector.shape_cast %3 : vector<1x87x32xbf16> to vector<87x32xbf16>
    %cst_5 = arith.constant dense<0.000000e+00> : vector<80x32xf32>
    %5 = tpu.matmul %2, %4, %cst_5 {dimension_numbers = #tpu.dot_dimension_numbers<[1], [0], [0], [1], [0, 0, 1, 1], [], []>} : vector<80x87xbf16>, vector<87x32xbf16>, vector<80x32xf32> -> vector<80x32xf32>
    %6 = arith.addf %0, %5 : vector<80x32xf32>
    %c0_6 = arith.constant 0 : index
    %c1 = arith.constant 1 : index
    %c0_7 = arith.constant 0 : index
    %7 = vector.load %arg1[%c0_6, %c1, %c0_7] : memref<1x112x87xbf16, #tpu.memory_space<vmem>>, vector<1x80x87xbf16>
    %8 = vector.shape_cast %7 : vector<1x80x87xbf16> to vector<80x87xbf16>
    %c1_8 = arith.constant 1 : index
    %c0_9 = arith.constant 0 : index
    %c0_10 = arith.constant 0 : index
    %9 = vector.load %arg2[%c1_8, %c0_9, %c0_10] : memref<9x87x32xbf16, #tpu.memory_space<vmem>>, vector<1x87x32xbf16>
    %10 = vector.shape_cast %9 : vector<1x87x32xbf16> to vector<87x32xbf16>
    %cst_11 = arith.constant dense<0.000000e+00> : vector<80x32xf32>
    %11 = tpu.matmul %8, %10, %cst_11 {dimension_numbers = #tpu.dot_dimension_numbers<[1], [0], [0], [1], [0, 0, 1, 1], [], []>} : vector<80x87xbf16>, vector<87x32xbf16>, vector<80x32xf32> -> vector<80x32xf32>
    %12 = arith.addf %6, %11 : vector<80x32xf32>
    %c0_12 = arith.constant 0 : index
    %c2 = arith.constant 2 : index
    %c0_13 = arith.constant 0 : index
    %13 = vector.load %arg1[%c0_12, %c2, %c0_13] : memref<1x112x87xbf16, #tpu.memory_space<vmem>>, vector<1x80x87xbf16>
    %14 = vector.shape_cast %13 : vector<1x80x87xbf16> to vector<80x87xbf16>
    %c2_14 = arith.constant 2 : index
    %c0_15 = arith.constant 0 : index
    %c0_16 = arith.constant 0 : index
    %15 = vector.load %arg2[%c2_14, %c0_15, %c0_16] : memref<9x87x32xbf16, #tpu.memory_space<vmem>>, vector<1x87x32xbf16>
    %16 = vector.shape_cast %15 : vector<1x87x32xbf16> to vector<87x32xbf16>
    %cst_17 = arith.constant dense<0.000000e+00> : vector<80x32xf32>
    %17 = tpu.matmul %14, %16, %cst_17 {dimension_numbers = #tpu.dot_dimension_numbers<[1], [0], [0], [1], [0, 0, 1, 1], [], []>} : vector<80x87xbf16>, vector<87x32xbf16>, vector<80x32xf32> -> vector<80x32xf32>
    %18 = arith.addf %12, %17 : vector<80x32xf32>
    %c0_18 = arith.constant 0 : index
    %c10 = arith.constant 10 : index
    %c0_19 = arith.constant 0 : index
    %19 = vector.load %arg1[%c0_18, %c10, %c0_19] : memref<1x112x87xbf16, #tpu.memory_space<vmem>>, vector<1x80x87xbf16>
    %20 = vector.shape_cast %19 : vector<1x80x87xbf16> to vector<80x87xbf16>
    %c3 = arith.constant 3 : index
    %c0_20 = arith.constant 0 : index
    %c0_21 = arith.constant 0 : index
    %21 = vector.load %arg2[%c3, %c0_20, %c0_21] : memref<9x87x32xbf16, #tpu.memory_space<vmem>>, vector<1x87x32xbf16>
    %22 = vector.shape_cast %21 : vector<1x87x32xbf16> to vector<87x32xbf16>
    %cst_22 = arith.constant dense<0.000000e+00> : vector<80x32xf32>
    %23 = tpu.matmul %20, %22, %cst_22 {dimension_numbers = #tpu.dot_dimension_numbers<[1], [0], [0], [1], [0, 0, 1, 1], [], []>} : vector<80x87xbf16>, vector<87x32xbf16>, vector<80x32xf32> -> vector<80x32xf32>
    %24 = arith.addf %18, %23 : vector<80x32xf32>
    %c0_23 = arith.constant 0 : index
    %c11 = arith.constant 11 : index
    %c0_24 = arith.constant 0 : index
    %25 = vector.load %arg1[%c0_23, %c11, %c0_24] : memref<1x112x87xbf16, #tpu.memory_space<vmem>>, vector<1x80x87xbf16>
    %26 = vector.shape_cast %25 : vector<1x80x87xbf16> to vector<80x87xbf16>
    %c4 = arith.constant 4 : index
    %c0_25 = arith.constant 0 : index
    %c0_26 = arith.constant 0 : index
    %27 = vector.load %arg2[%c4, %c0_25, %c0_26] : memref<9x87x32xbf16, #tpu.memory_space<vmem>>, vector<1x87x32xbf16>
    %28 = vector.shape_cast %27 : vector<1x87x32xbf16> to vector<87x32xbf16>
    %cst_27 = arith.constant dense<0.000000e+00> : vector<80x32xf32>
    %29 = tpu.matmul %26, %28, %cst_27 {dimension_numbers = #tpu.dot_dimension_numbers<[1], [0], [0], [1], [0, 0, 1, 1], [], []>} : vector<80x87xbf16>, vector<87x32xbf16>, vector<80x32xf32> -> vector<80x32xf32>
    %30 = arith.addf %24, %29 : vector<80x32xf32>
    %c0_28 = arith.constant 0 : index
    %c12 = arith.constant 12 : index
    %c0_29 = arith.constant 0 : index
    %31 = vector.load %arg1[%c0_28, %c12, %c0_29] : memref<1x112x87xbf16, #tpu.memory_space<vmem>>, vector<1x80x87xbf16>
    %32 = vector.shape_cast %31 : vector<1x80x87xbf16> to vector<80x87xbf16>
    %c5 = arith.constant 5 : index
    %c0_30 = arith.constant 0 : index
    %c0_31 = arith.constant 0 : index
    %33 = vector.load %arg2[%c5, %c0_30, %c0_31] : memref<9x87x32xbf16, #tpu.memory_space<vmem>>, vector<1x87x32xbf16>
    %34 = vector.shape_cast %33 : vector<1x87x32xbf16> to vector<87x32xbf16>
    %cst_32 = arith.constant dense<0.000000e+00> : vector<80x32xf32>
    %35 = tpu.matmul %32, %34, %cst_32 {dimension_numbers = #tpu.dot_dimension_numbers<[1], [0], [0], [1], [0, 0, 1, 1], [], []>} : vector<80x87xbf16>, vector<87x32xbf16>, vector<80x32xf32> -> vector<80x32xf32>
    %36 = arith.addf %30, %35 : vector<80x32xf32>
    %c0_33 = arith.constant 0 : index
    %c20 = arith.constant 20 : index
    %c0_34 = arith.constant 0 : index
    %37 = vector.load %arg1[%c0_33, %c20, %c0_34] : memref<1x112x87xbf16, #tpu.memory_space<vmem>>, vector<1x80x87xbf16>
    %38 = vector.shape_cast %37 : vector<1x80x87xbf16> to vector<80x87xbf16>
    %c6 = arith.constant 6 : index
    %c0_35 = arith.constant 0 : index
    %c0_36 = arith.constant 0 : index
    %39 = vector.load %arg2[%c6, %c0_35, %c0_36] : memref<9x87x32xbf16, #tpu.memory_space<vmem>>, vector<1x87x32xbf16>
    %40 = vector.shape_cast %39 : vector<1x87x32xbf16> to vector<87x32xbf16>
    %cst_37 = arith.constant dense<0.000000e+00> : vector<80x32xf32>
    %41 = tpu.matmul %38, %40, %cst_37 {dimension_numbers = #tpu.dot_dimension_numbers<[1], [0], [0], [1], [0, 0, 1, 1], [], []>} : vector<80x87xbf16>, vector<87x32xbf16>, vector<80x32xf32> -> vector<80x32xf32>
    %42 = arith.addf %36, %41 : vector<80x32xf32>
    %c0_38 = arith.constant 0 : index
    %c21 = arith.constant 21 : index
    %c0_39 = arith.constant 0 : index
    %43 = vector.load %arg1[%c0_38, %c21, %c0_39] : memref<1x112x87xbf16, #tpu.memory_space<vmem>>, vector<1x80x87xbf16>
    %44 = vector.shape_cast %43 : vector<1x80x87xbf16> to vector<80x87xbf16>
    %c7 = arith.constant 7 : index
    %c0_40 = arith.constant 0 : index
    %c0_41 = arith.constant 0 : index
    %45 = vector.load %arg2[%c7, %c0_40, %c0_41] : memref<9x87x32xbf16, #tpu.memory_space<vmem>>, vector<1x87x32xbf16>
    %46 = vector.shape_cast %45 : vector<1x87x32xbf16> to vector<87x32xbf16>
    %cst_42 = arith.constant dense<0.000000e+00> : vector<80x32xf32>
    %47 = tpu.matmul %44, %46, %cst_42 {dimension_numbers = #tpu.dot_dimension_numbers<[1], [0], [0], [1], [0, 0, 1, 1], [], []>} : vector<80x87xbf16>, vector<87x32xbf16>, vector<80x32xf32> -> vector<80x32xf32>
    %48 = arith.addf %42, %47 : vector<80x32xf32>
    %c0_43 = arith.constant 0 : index
    %c22 = arith.constant 22 : index
    %c0_44 = arith.constant 0 : index
    %49 = vector.load %arg1[%c0_43, %c22, %c0_44] : memref<1x112x87xbf16, #tpu.memory_space<vmem>>, vector<1x80x87xbf16>
    %50 = vector.shape_cast %49 : vector<1x80x87xbf16> to vector<80x87xbf16>
    %c8 = arith.constant 8 : index
    %c0_45 = arith.constant 0 : index
    %c0_46 = arith.constant 0 : index
    %51 = vector.load %arg2[%c8, %c0_45, %c0_46] : memref<9x87x32xbf16, #tpu.memory_space<vmem>>, vector<1x87x32xbf16>
    %52 = vector.shape_cast %51 : vector<1x87x32xbf16> to vector<87x32xbf16>
    %cst_47 = arith.constant dense<0.000000e+00> : vector<80x32xf32>
    %53 = tpu.matmul %50, %52, %cst_47 {dimension_numbers = #tpu.dot_dimension_numbers<[1], [0], [0], [1], [0, 0, 1, 1], [], []>} : vector<80x87xbf16>, vector<87x32xbf16>, vector<80x32xf32> -> vector<80x32xf32>
    %54 = arith.addf %48, %53 : vector<80x32xf32>
    %c0_48 = arith.constant 0 : index
    %c0_49 = arith.constant 0 : index
    %c0_50 = arith.constant 0 : index
    %55 = vector.load %arg3[%c0_48, %c0_49, %c0_50] : memref<1x80x32xf32, #tpu.memory_space<vmem>>, vector<1x80x32xf32>
    %56 = vector.shape_cast %55 : vector<1x80x32xf32> to vector<80x32xf32>
    %57 = vector.shape_cast %54 : vector<80x32xf32> to vector<1x80x32xf32>
    tpu.vector_store %arg3[%c0_48, %c0_49, %c0_50], %57 {strides = array<i32>} : memref<1x80x32xf32, #tpu.memory_space<vmem>>, vector<1x80x32xf32>,
    return
  }
  func.func @transform_0(%arg0: i32) -> (i32, i32, i32) {
    %c0_i32 = arith.constant 0 : i32
    %c0_i32_0 = arith.constant 0 : i32
    %c0_i32_1 = arith.constant 0 : i32
    return %arg0, %c0_i32, %c0_i32_0 : i32, i32, i32
  }
  func.func @transform_1(%arg0: i32) -> (i32, i32, i32) {
    %c0_i32 = arith.constant 0 : i32
    %c0_i32_0 = arith.constant 0 : i32
    %c0_i32_1 = arith.constant 0 : i32
    %c0_i32_2 = arith.constant 0 : i32
    return %c0_i32, %c0_i32_0, %c0_i32_1 : i32, i32, i32
  }
  func.func @transform_2(%arg0: i32) -> (i32, i32, i32) {
    %c0_i32 = arith.constant 0 : i32
    %c0_i32_0 = arith.constant 0 : i32
    %c0_i32_1 = arith.constant 0 : i32
    return %arg0, %c0_i32, %c0_i32_0 : i32, i32, i32
  }
}

module attributes {stable_mosaic.version = 11 : i64} {
  func.func @_conv_plane_kernel(%arg0: i32, %arg1: memref<1x48x96xbf16, #tpu.memory_space<vmem>>, %arg2: memref<9x96x32xbf16, #tpu.memory_space<vmem>>, %arg3: memref<1x32x32xf32, #tpu.memory_space<vmem>>) attributes {dimension_semantics = [#tpu.dimension_semantics<parallel>], iteration_bounds = array<i64: 4>, scalar_prefetch = 0 : i64, scratch_operands = 0 : i64, tpu.core_type = #tpu.core_type<tc>, window_params = [{transform_indices = @transform_0, window_bounds = array<i64: 1, 48, 96>}, {pipeline_mode = #tpu.pipeline_mode<synchronous>, transform_indices = @transform_1, window_bounds = array<i64: 9, 96, 32>}, {transform_indices = @transform_2, window_bounds = array<i64: 1, 32, 32>}]} {
    %cst = arith.constant 0.000000e+00 : f32
    %0 = vector.broadcast %cst : f32 to vector<32x32xf32>
    %c0 = arith.constant 0 : index
    %c0_0 = arith.constant 0 : index
    %c0_1 = arith.constant 0 : index
    %1 = vector.load %arg1[%c0, %c0_0, %c0_1] : memref<1x48x96xbf16, #tpu.memory_space<vmem>>, vector<1x32x96xbf16>
    %2 = vector.shape_cast %1 : vector<1x32x96xbf16> to vector<32x96xbf16>
    %c0_2 = arith.constant 0 : index
    %c0_3 = arith.constant 0 : index
    %c0_4 = arith.constant 0 : index
    %3 = vector.load %arg2[%c0_2, %c0_3, %c0_4] : memref<9x96x32xbf16, #tpu.memory_space<vmem>>, vector<1x96x32xbf16>
    %4 = vector.shape_cast %3 : vector<1x96x32xbf16> to vector<96x32xbf16>
    %cst_5 = arith.constant dense<0.000000e+00> : vector<32x32xf32>
    %5 = tpu.matmul %2, %4, %cst_5 {dimension_numbers = #tpu.dot_dimension_numbers<[1], [0], [0], [1], [0, 0, 1, 1], [], []>} : vector<32x96xbf16>, vector<96x32xbf16>, vector<32x32xf32> -> vector<32x32xf32>
    %6 = arith.addf %0, %5 : vector<32x32xf32>
    %c0_6 = arith.constant 0 : index
    %c1 = arith.constant 1 : index
    %c0_7 = arith.constant 0 : index
    %7 = vector.load %arg1[%c0_6, %c1, %c0_7] : memref<1x48x96xbf16, #tpu.memory_space<vmem>>, vector<1x32x96xbf16>
    %8 = vector.shape_cast %7 : vector<1x32x96xbf16> to vector<32x96xbf16>
    %c1_8 = arith.constant 1 : index
    %c0_9 = arith.constant 0 : index
    %c0_10 = arith.constant 0 : index
    %9 = vector.load %arg2[%c1_8, %c0_9, %c0_10] : memref<9x96x32xbf16, #tpu.memory_space<vmem>>, vector<1x96x32xbf16>
    %10 = vector.shape_cast %9 : vector<1x96x32xbf16> to vector<96x32xbf16>
    %cst_11 = arith.constant dense<0.000000e+00> : vector<32x32xf32>
    %11 = tpu.matmul %8, %10, %cst_11 {dimension_numbers = #tpu.dot_dimension_numbers<[1], [0], [0], [1], [0, 0, 1, 1], [], []>} : vector<32x96xbf16>, vector<96x32xbf16>, vector<32x32xf32> -> vector<32x32xf32>
    %12 = arith.addf %6, %11 : vector<32x32xf32>
    %c0_12 = arith.constant 0 : index
    %c2 = arith.constant 2 : index
    %c0_13 = arith.constant 0 : index
    %13 = vector.load %arg1[%c0_12, %c2, %c0_13] : memref<1x48x96xbf16, #tpu.memory_space<vmem>>, vector<1x32x96xbf16>
    %14 = vector.shape_cast %13 : vector<1x32x96xbf16> to vector<32x96xbf16>
    %c2_14 = arith.constant 2 : index
    %c0_15 = arith.constant 0 : index
    %c0_16 = arith.constant 0 : index
    %15 = vector.load %arg2[%c2_14, %c0_15, %c0_16] : memref<9x96x32xbf16, #tpu.memory_space<vmem>>, vector<1x96x32xbf16>
    %16 = vector.shape_cast %15 : vector<1x96x32xbf16> to vector<96x32xbf16>
    %cst_17 = arith.constant dense<0.000000e+00> : vector<32x32xf32>
    %17 = tpu.matmul %14, %16, %cst_17 {dimension_numbers = #tpu.dot_dimension_numbers<[1], [0], [0], [1], [0, 0, 1, 1], [], []>} : vector<32x96xbf16>, vector<96x32xbf16>, vector<32x32xf32> -> vector<32x32xf32>
    %18 = arith.addf %12, %17 : vector<32x32xf32>
    %c0_18 = arith.constant 0 : index
    %c6 = arith.constant 6 : index
    %c0_19 = arith.constant 0 : index
    %19 = vector.load %arg1[%c0_18, %c6, %c0_19] : memref<1x48x96xbf16, #tpu.memory_space<vmem>>, vector<1x32x96xbf16>
    %20 = vector.shape_cast %19 : vector<1x32x96xbf16> to vector<32x96xbf16>
    %c3 = arith.constant 3 : index
    %c0_20 = arith.constant 0 : index
    %c0_21 = arith.constant 0 : index
    %21 = vector.load %arg2[%c3, %c0_20, %c0_21] : memref<9x96x32xbf16, #tpu.memory_space<vmem>>, vector<1x96x32xbf16>
    %22 = vector.shape_cast %21 : vector<1x96x32xbf16> to vector<96x32xbf16>
    %cst_22 = arith.constant dense<0.000000e+00> : vector<32x32xf32>
    %23 = tpu.matmul %20, %22, %cst_22 {dimension_numbers = #tpu.dot_dimension_numbers<[1], [0], [0], [1], [0, 0, 1, 1], [], []>} : vector<32x96xbf16>, vector<96x32xbf16>, vector<32x32xf32> -> vector<32x32xf32>
    %24 = arith.addf %18, %23 : vector<32x32xf32>
    %c0_23 = arith.constant 0 : index
    %c7 = arith.constant 7 : index
    %c0_24 = arith.constant 0 : index
    %25 = vector.load %arg1[%c0_23, %c7, %c0_24] : memref<1x48x96xbf16, #tpu.memory_space<vmem>>, vector<1x32x96xbf16>
    %26 = vector.shape_cast %25 : vector<1x32x96xbf16> to vector<32x96xbf16>
    %c4 = arith.constant 4 : index
    %c0_25 = arith.constant 0 : index
    %c0_26 = arith.constant 0 : index
    %27 = vector.load %arg2[%c4, %c0_25, %c0_26] : memref<9x96x32xbf16, #tpu.memory_space<vmem>>, vector<1x96x32xbf16>
    %28 = vector.shape_cast %27 : vector<1x96x32xbf16> to vector<96x32xbf16>
    %cst_27 = arith.constant dense<0.000000e+00> : vector<32x32xf32>
    %29 = tpu.matmul %26, %28, %cst_27 {dimension_numbers = #tpu.dot_dimension_numbers<[1], [0], [0], [1], [0, 0, 1, 1], [], []>} : vector<32x96xbf16>, vector<96x32xbf16>, vector<32x32xf32> -> vector<32x32xf32>
    %30 = arith.addf %24, %29 : vector<32x32xf32>
    %c0_28 = arith.constant 0 : index
    %c8 = arith.constant 8 : index
    %c0_29 = arith.constant 0 : index
    %31 = vector.load %arg1[%c0_28, %c8, %c0_29] : memref<1x48x96xbf16, #tpu.memory_space<vmem>>, vector<1x32x96xbf16>
    %32 = vector.shape_cast %31 : vector<1x32x96xbf16> to vector<32x96xbf16>
    %c5 = arith.constant 5 : index
    %c0_30 = arith.constant 0 : index
    %c0_31 = arith.constant 0 : index
    %33 = vector.load %arg2[%c5, %c0_30, %c0_31] : memref<9x96x32xbf16, #tpu.memory_space<vmem>>, vector<1x96x32xbf16>
    %34 = vector.shape_cast %33 : vector<1x96x32xbf16> to vector<96x32xbf16>
    %cst_32 = arith.constant dense<0.000000e+00> : vector<32x32xf32>
    %35 = tpu.matmul %32, %34, %cst_32 {dimension_numbers = #tpu.dot_dimension_numbers<[1], [0], [0], [1], [0, 0, 1, 1], [], []>} : vector<32x96xbf16>, vector<96x32xbf16>, vector<32x32xf32> -> vector<32x32xf32>
    %36 = arith.addf %30, %35 : vector<32x32xf32>
    %c0_33 = arith.constant 0 : index
    %c12 = arith.constant 12 : index
    %c0_34 = arith.constant 0 : index
    %37 = vector.load %arg1[%c0_33, %c12, %c0_34] : memref<1x48x96xbf16, #tpu.memory_space<vmem>>, vector<1x32x96xbf16>
    %38 = vector.shape_cast %37 : vector<1x32x96xbf16> to vector<32x96xbf16>
    %c6_35 = arith.constant 6 : index
    %c0_36 = arith.constant 0 : index
    %c0_37 = arith.constant 0 : index
    %39 = vector.load %arg2[%c6_35, %c0_36, %c0_37] : memref<9x96x32xbf16, #tpu.memory_space<vmem>>, vector<1x96x32xbf16>
    %40 = vector.shape_cast %39 : vector<1x96x32xbf16> to vector<96x32xbf16>
    %cst_38 = arith.constant dense<0.000000e+00> : vector<32x32xf32>
    %41 = tpu.matmul %38, %40, %cst_38 {dimension_numbers = #tpu.dot_dimension_numbers<[1], [0], [0], [1], [0, 0, 1, 1], [], []>} : vector<32x96xbf16>, vector<96x32xbf16>, vector<32x32xf32> -> vector<32x32xf32>
    %42 = arith.addf %36, %41 : vector<32x32xf32>
    %c0_39 = arith.constant 0 : index
    %c13 = arith.constant 13 : index
    %c0_40 = arith.constant 0 : index
    %43 = vector.load %arg1[%c0_39, %c13, %c0_40] : memref<1x48x96xbf16, #tpu.memory_space<vmem>>, vector<1x32x96xbf16>
    %44 = vector.shape_cast %43 : vector<1x32x96xbf16> to vector<32x96xbf16>
    %c7_41 = arith.constant 7 : index
    %c0_42 = arith.constant 0 : index
    %c0_43 = arith.constant 0 : index
    %45 = vector.load %arg2[%c7_41, %c0_42, %c0_43] : memref<9x96x32xbf16, #tpu.memory_space<vmem>>, vector<1x96x32xbf16>
    %46 = vector.shape_cast %45 : vector<1x96x32xbf16> to vector<96x32xbf16>
    %cst_44 = arith.constant dense<0.000000e+00> : vector<32x32xf32>
    %47 = tpu.matmul %44, %46, %cst_44 {dimension_numbers = #tpu.dot_dimension_numbers<[1], [0], [0], [1], [0, 0, 1, 1], [], []>} : vector<32x96xbf16>, vector<96x32xbf16>, vector<32x32xf32> -> vector<32x32xf32>
    %48 = arith.addf %42, %47 : vector<32x32xf32>
    %c0_45 = arith.constant 0 : index
    %c14 = arith.constant 14 : index
    %c0_46 = arith.constant 0 : index
    %49 = vector.load %arg1[%c0_45, %c14, %c0_46] : memref<1x48x96xbf16, #tpu.memory_space<vmem>>, vector<1x32x96xbf16>
    %50 = vector.shape_cast %49 : vector<1x32x96xbf16> to vector<32x96xbf16>
    %c8_47 = arith.constant 8 : index
    %c0_48 = arith.constant 0 : index
    %c0_49 = arith.constant 0 : index
    %51 = vector.load %arg2[%c8_47, %c0_48, %c0_49] : memref<9x96x32xbf16, #tpu.memory_space<vmem>>, vector<1x96x32xbf16>
    %52 = vector.shape_cast %51 : vector<1x96x32xbf16> to vector<96x32xbf16>
    %cst_50 = arith.constant dense<0.000000e+00> : vector<32x32xf32>
    %53 = tpu.matmul %50, %52, %cst_50 {dimension_numbers = #tpu.dot_dimension_numbers<[1], [0], [0], [1], [0, 0, 1, 1], [], []>} : vector<32x96xbf16>, vector<96x32xbf16>, vector<32x32xf32> -> vector<32x32xf32>
    %54 = arith.addf %48, %53 : vector<32x32xf32>
    %c0_51 = arith.constant 0 : index
    %c0_52 = arith.constant 0 : index
    %c0_53 = arith.constant 0 : index
    %55 = vector.load %arg3[%c0_51, %c0_52, %c0_53] : memref<1x32x32xf32, #tpu.memory_space<vmem>>, vector<1x32x32xf32>
    %56 = vector.shape_cast %55 : vector<1x32x32xf32> to vector<32x32xf32>
    %57 = vector.shape_cast %54 : vector<32x32xf32> to vector<1x32x32xf32>
    tpu.vector_store %arg3[%c0_51, %c0_52, %c0_53], %57 {strides = array<i32>} : memref<1x32x32xf32, #tpu.memory_space<vmem>>, vector<1x32x32xf32>,
    return
  }
  func.func @transform_0(%arg0: i32) -> (i32, i32, i32) {
    %c0_i32 = arith.constant 0 : i32
    %c0_i32_0 = arith.constant 0 : i32
    %c0_i32_1 = arith.constant 0 : i32
    return %arg0, %c0_i32, %c0_i32_0 : i32, i32, i32
  }
  func.func @transform_1(%arg0: i32) -> (i32, i32, i32) {
    %c0_i32 = arith.constant 0 : i32
    %c0_i32_0 = arith.constant 0 : i32
    %c0_i32_1 = arith.constant 0 : i32
    %c0_i32_2 = arith.constant 0 : i32
    return %c0_i32, %c0_i32_0, %c0_i32_1 : i32, i32, i32
  }
  func.func @transform_2(%arg0: i32) -> (i32, i32, i32) {
    %c0_i32 = arith.constant 0 : i32
    %c0_i32_0 = arith.constant 0 : i32
    %c0_i32_1 = arith.constant 0 : i32
    return %arg0, %c0_i32, %c0_i32_0 : i32, i32, i32
  }
}

module attributes {stable_mosaic.version = 11 : i64} {
  func.func @_conv_plane_kernel(%arg0: i32, %arg1: memref<1x48x96xbf16, #tpu.memory_space<vmem>>, %arg2: memref<9x96x32xbf16, #tpu.memory_space<vmem>>, %arg3: memref<1x32x32xf32, #tpu.memory_space<vmem>>) attributes {dimension_semantics = [#tpu.dimension_semantics<parallel>], iteration_bounds = array<i64: 2>, scalar_prefetch = 0 : i64, scratch_operands = 0 : i64, tpu.core_type = #tpu.core_type<tc>, window_params = [{transform_indices = @transform_0, window_bounds = array<i64: 1, 48, 96>}, {pipeline_mode = #tpu.pipeline_mode<synchronous>, transform_indices = @transform_1, window_bounds = array<i64: 9, 96, 32>}, {transform_indices = @transform_2, window_bounds = array<i64: 1, 32, 32>}]} {
    %cst = arith.constant 0.000000e+00 : f32
    %0 = vector.broadcast %cst : f32 to vector<32x32xf32>
    %c0 = arith.constant 0 : index
    %c0_0 = arith.constant 0 : index
    %c0_1 = arith.constant 0 : index
    %1 = vector.load %arg1[%c0, %c0_0, %c0_1] : memref<1x48x96xbf16, #tpu.memory_space<vmem>>, vector<1x32x96xbf16>
    %2 = vector.shape_cast %1 : vector<1x32x96xbf16> to vector<32x96xbf16>
    %c0_2 = arith.constant 0 : index
    %c0_3 = arith.constant 0 : index
    %c0_4 = arith.constant 0 : index
    %3 = vector.load %arg2[%c0_2, %c0_3, %c0_4] : memref<9x96x32xbf16, #tpu.memory_space<vmem>>, vector<1x96x32xbf16>
    %4 = vector.shape_cast %3 : vector<1x96x32xbf16> to vector<96x32xbf16>
    %cst_5 = arith.constant dense<0.000000e+00> : vector<32x32xf32>
    %5 = tpu.matmul %2, %4, %cst_5 {dimension_numbers = #tpu.dot_dimension_numbers<[1], [0], [0], [1], [0, 0, 1, 1], [], []>} : vector<32x96xbf16>, vector<96x32xbf16>, vector<32x32xf32> -> vector<32x32xf32>
    %6 = arith.addf %0, %5 : vector<32x32xf32>
    %c0_6 = arith.constant 0 : index
    %c1 = arith.constant 1 : index
    %c0_7 = arith.constant 0 : index
    %7 = vector.load %arg1[%c0_6, %c1, %c0_7] : memref<1x48x96xbf16, #tpu.memory_space<vmem>>, vector<1x32x96xbf16>
    %8 = vector.shape_cast %7 : vector<1x32x96xbf16> to vector<32x96xbf16>
    %c1_8 = arith.constant 1 : index
    %c0_9 = arith.constant 0 : index
    %c0_10 = arith.constant 0 : index
    %9 = vector.load %arg2[%c1_8, %c0_9, %c0_10] : memref<9x96x32xbf16, #tpu.memory_space<vmem>>, vector<1x96x32xbf16>
    %10 = vector.shape_cast %9 : vector<1x96x32xbf16> to vector<96x32xbf16>
    %cst_11 = arith.constant dense<0.000000e+00> : vector<32x32xf32>
    %11 = tpu.matmul %8, %10, %cst_11 {dimension_numbers = #tpu.dot_dimension_numbers<[1], [0], [0], [1], [0, 0, 1, 1], [], []>} : vector<32x96xbf16>, vector<96x32xbf16>, vector<32x32xf32> -> vector<32x32xf32>
    %12 = arith.addf %6, %11 : vector<32x32xf32>
    %c0_12 = arith.constant 0 : index
    %c2 = arith.constant 2 : index
    %c0_13 = arith.constant 0 : index
    %13 = vector.load %arg1[%c0_12, %c2, %c0_13] : memref<1x48x96xbf16, #tpu.memory_space<vmem>>, vector<1x32x96xbf16>
    %14 = vector.shape_cast %13 : vector<1x32x96xbf16> to vector<32x96xbf16>
    %c2_14 = arith.constant 2 : index
    %c0_15 = arith.constant 0 : index
    %c0_16 = arith.constant 0 : index
    %15 = vector.load %arg2[%c2_14, %c0_15, %c0_16] : memref<9x96x32xbf16, #tpu.memory_space<vmem>>, vector<1x96x32xbf16>
    %16 = vector.shape_cast %15 : vector<1x96x32xbf16> to vector<96x32xbf16>
    %cst_17 = arith.constant dense<0.000000e+00> : vector<32x32xf32>
    %17 = tpu.matmul %14, %16, %cst_17 {dimension_numbers = #tpu.dot_dimension_numbers<[1], [0], [0], [1], [0, 0, 1, 1], [], []>} : vector<32x96xbf16>, vector<96x32xbf16>, vector<32x32xf32> -> vector<32x32xf32>
    %18 = arith.addf %12, %17 : vector<32x32xf32>
    %c0_18 = arith.constant 0 : index
    %c6 = arith.constant 6 : index
    %c0_19 = arith.constant 0 : index
    %19 = vector.load %arg1[%c0_18, %c6, %c0_19] : memref<1x48x96xbf16, #tpu.memory_space<vmem>>, vector<1x32x96xbf16>
    %20 = vector.shape_cast %19 : vector<1x32x96xbf16> to vector<32x96xbf16>
    %c3 = arith.constant 3 : index
    %c0_20 = arith.constant 0 : index
    %c0_21 = arith.constant 0 : index
    %21 = vector.load %arg2[%c3, %c0_20, %c0_21] : memref<9x96x32xbf16, #tpu.memory_space<vmem>>, vector<1x96x32xbf16>
    %22 = vector.shape_cast %21 : vector<1x96x32xbf16> to vector<96x32xbf16>
    %cst_22 = arith.constant dense<0.000000e+00> : vector<32x32xf32>
    %23 = tpu.matmul %20, %22, %cst_22 {dimension_numbers = #tpu.dot_dimension_numbers<[1], [0], [0], [1], [0, 0, 1, 1], [], []>} : vector<32x96xbf16>, vector<96x32xbf16>, vector<32x32xf32> -> vector<32x32xf32>
    %24 = arith.addf %18, %23 : vector<32x32xf32>
    %c0_23 = arith.constant 0 : index
    %c7 = arith.constant 7 : index
    %c0_24 = arith.constant 0 : index
    %25 = vector.load %arg1[%c0_23, %c7, %c0_24] : memref<1x48x96xbf16, #tpu.memory_space<vmem>>, vector<1x32x96xbf16>
    %26 = vector.shape_cast %25 : vector<1x32x96xbf16> to vector<32x96xbf16>
    %c4 = arith.constant 4 : index
    %c0_25 = arith.constant 0 : index
    %c0_26 = arith.constant 0 : index
    %27 = vector.load %arg2[%c4, %c0_25, %c0_26] : memref<9x96x32xbf16, #tpu.memory_space<vmem>>, vector<1x96x32xbf16>
    %28 = vector.shape_cast %27 : vector<1x96x32xbf16> to vector<96x32xbf16>
    %cst_27 = arith.constant dense<0.000000e+00> : vector<32x32xf32>
    %29 = tpu.matmul %26, %28, %cst_27 {dimension_numbers = #tpu.dot_dimension_numbers<[1], [0], [0], [1], [0, 0, 1, 1], [], []>} : vector<32x96xbf16>, vector<96x32xbf16>, vector<32x32xf32> -> vector<32x32xf32>
    %30 = arith.addf %24, %29 : vector<32x32xf32>
    %c0_28 = arith.constant 0 : index
    %c8 = arith.constant 8 : index
    %c0_29 = arith.constant 0 : index
    %31 = vector.load %arg1[%c0_28, %c8, %c0_29] : memref<1x48x96xbf16, #tpu.memory_space<vmem>>, vector<1x32x96xbf16>
    %32 = vector.shape_cast %31 : vector<1x32x96xbf16> to vector<32x96xbf16>
    %c5 = arith.constant 5 : index
    %c0_30 = arith.constant 0 : index
    %c0_31 = arith.constant 0 : index
    %33 = vector.load %arg2[%c5, %c0_30, %c0_31] : memref<9x96x32xbf16, #tpu.memory_space<vmem>>, vector<1x96x32xbf16>
    %34 = vector.shape_cast %33 : vector<1x96x32xbf16> to vector<96x32xbf16>
    %cst_32 = arith.constant dense<0.000000e+00> : vector<32x32xf32>
    %35 = tpu.matmul %32, %34, %cst_32 {dimension_numbers = #tpu.dot_dimension_numbers<[1], [0], [0], [1], [0, 0, 1, 1], [], []>} : vector<32x96xbf16>, vector<96x32xbf16>, vector<32x32xf32> -> vector<32x32xf32>
    %36 = arith.addf %30, %35 : vector<32x32xf32>
    %c0_33 = arith.constant 0 : index
    %c12 = arith.constant 12 : index
    %c0_34 = arith.constant 0 : index
    %37 = vector.load %arg1[%c0_33, %c12, %c0_34] : memref<1x48x96xbf16, #tpu.memory_space<vmem>>, vector<1x32x96xbf16>
    %38 = vector.shape_cast %37 : vector<1x32x96xbf16> to vector<32x96xbf16>
    %c6_35 = arith.constant 6 : index
    %c0_36 = arith.constant 0 : index
    %c0_37 = arith.constant 0 : index
    %39 = vector.load %arg2[%c6_35, %c0_36, %c0_37] : memref<9x96x32xbf16, #tpu.memory_space<vmem>>, vector<1x96x32xbf16>
    %40 = vector.shape_cast %39 : vector<1x96x32xbf16> to vector<96x32xbf16>
    %cst_38 = arith.constant dense<0.000000e+00> : vector<32x32xf32>
    %41 = tpu.matmul %38, %40, %cst_38 {dimension_numbers = #tpu.dot_dimension_numbers<[1], [0], [0], [1], [0, 0, 1, 1], [], []>} : vector<32x96xbf16>, vector<96x32xbf16>, vector<32x32xf32> -> vector<32x32xf32>
    %42 = arith.addf %36, %41 : vector<32x32xf32>
    %c0_39 = arith.constant 0 : index
    %c13 = arith.constant 13 : index
    %c0_40 = arith.constant 0 : index
    %43 = vector.load %arg1[%c0_39, %c13, %c0_40] : memref<1x48x96xbf16, #tpu.memory_space<vmem>>, vector<1x32x96xbf16>
    %44 = vector.shape_cast %43 : vector<1x32x96xbf16> to vector<32x96xbf16>
    %c7_41 = arith.constant 7 : index
    %c0_42 = arith.constant 0 : index
    %c0_43 = arith.constant 0 : index
    %45 = vector.load %arg2[%c7_41, %c0_42, %c0_43] : memref<9x96x32xbf16, #tpu.memory_space<vmem>>, vector<1x96x32xbf16>
    %46 = vector.shape_cast %45 : vector<1x96x32xbf16> to vector<96x32xbf16>
    %cst_44 = arith.constant dense<0.000000e+00> : vector<32x32xf32>
    %47 = tpu.matmul %44, %46, %cst_44 {dimension_numbers = #tpu.dot_dimension_numbers<[1], [0], [0], [1], [0, 0, 1, 1], [], []>} : vector<32x96xbf16>, vector<96x32xbf16>, vector<32x32xf32> -> vector<32x32xf32>
    %48 = arith.addf %42, %47 : vector<32x32xf32>
    %c0_45 = arith.constant 0 : index
    %c14 = arith.constant 14 : index
    %c0_46 = arith.constant 0 : index
    %49 = vector.load %arg1[%c0_45, %c14, %c0_46] : memref<1x48x96xbf16, #tpu.memory_space<vmem>>, vector<1x32x96xbf16>
    %50 = vector.shape_cast %49 : vector<1x32x96xbf16> to vector<32x96xbf16>
    %c8_47 = arith.constant 8 : index
    %c0_48 = arith.constant 0 : index
    %c0_49 = arith.constant 0 : index
    %51 = vector.load %arg2[%c8_47, %c0_48, %c0_49] : memref<9x96x32xbf16, #tpu.memory_space<vmem>>, vector<1x96x32xbf16>
    %52 = vector.shape_cast %51 : vector<1x96x32xbf16> to vector<96x32xbf16>
    %cst_50 = arith.constant dense<0.000000e+00> : vector<32x32xf32>
    %53 = tpu.matmul %50, %52, %cst_50 {dimension_numbers = #tpu.dot_dimension_numbers<[1], [0], [0], [1], [0, 0, 1, 1], [], []>} : vector<32x96xbf16>, vector<96x32xbf16>, vector<32x32xf32> -> vector<32x32xf32>
    %54 = arith.addf %48, %53 : vector<32x32xf32>
    %c0_51 = arith.constant 0 : index
    %c0_52 = arith.constant 0 : index
    %c0_53 = arith.constant 0 : index
    %55 = vector.load %arg3[%c0_51, %c0_52, %c0_53] : memref<1x32x32xf32, #tpu.memory_space<vmem>>, vector<1x32x32xf32>
    %56 = vector.shape_cast %55 : vector<1x32x32xf32> to vector<32x32xf32>
    %57 = vector.shape_cast %54 : vector<32x32xf32> to vector<1x32x32xf32>
    tpu.vector_store %arg3[%c0_51, %c0_52, %c0_53], %57 {strides = array<i32>} : memref<1x32x32xf32, #tpu.memory_space<vmem>>, vector<1x32x32xf32>,
    return
  }
  func.func @transform_0(%arg0: i32) -> (i32, i32, i32) {
    %c0_i32 = arith.constant 0 : i32
    %c0_i32_0 = arith.constant 0 : i32
    %c0_i32_1 = arith.constant 0 : i32
    return %arg0, %c0_i32, %c0_i32_0 : i32, i32, i32
  }
  func.func @transform_1(%arg0: i32) -> (i32, i32, i32) {
    %c0_i32 = arith.constant 0 : i32
    %c0_i32_0 = arith.constant 0 : i32
    %c0_i32_1 = arith.constant 0 : i32
    %c0_i32_2 = arith.constant 0 : i32
    return %c0_i32, %c0_i32_0, %c0_i32_1 : i32, i32, i32
  }
  func.func @transform_2(%arg0: i32) -> (i32, i32, i32) {
    %c0_i32 = arith.constant 0 : i32
    %c0_i32_0 = arith.constant 0 : i32
    %c0_i32_1 = arith.constant 0 : i32
    return %arg0, %c0_i32, %c0_i32_0 : i32, i32, i32
  }
}

module attributes {stable_mosaic.version = 11 : i64} {
  func.func @_conv_plane_kernel(%arg0: i32, %arg1: memref<1x32x96xbf16, #tpu.memory_space<vmem>>, %arg2: memref<9x96x32xbf16, #tpu.memory_space<vmem>>, %arg3: memref<1x16x32xf32, #tpu.memory_space<vmem>>) attributes {dimension_semantics = [#tpu.dimension_semantics<parallel>], iteration_bounds = array<i64: 2>, scalar_prefetch = 0 : i64, scratch_operands = 0 : i64, tpu.core_type = #tpu.core_type<tc>, window_params = [{transform_indices = @transform_0, window_bounds = array<i64: 1, 32, 96>}, {pipeline_mode = #tpu.pipeline_mode<synchronous>, transform_indices = @transform_1, window_bounds = array<i64: 9, 96, 32>}, {transform_indices = @transform_2, window_bounds = array<i64: 1, 16, 32>}]} {
    %cst = arith.constant 0.000000e+00 : f32
    %0 = vector.broadcast %cst : f32 to vector<16x32xf32>
    %c0 = arith.constant 0 : index
    %c0_0 = arith.constant 0 : index
    %c0_1 = arith.constant 0 : index
    %1 = vector.load %arg1[%c0, %c0_0, %c0_1] : memref<1x32x96xbf16, #tpu.memory_space<vmem>>, vector<1x16x96xbf16>
    %2 = vector.shape_cast %1 : vector<1x16x96xbf16> to vector<16x96xbf16>
    %c0_2 = arith.constant 0 : index
    %c0_3 = arith.constant 0 : index
    %c0_4 = arith.constant 0 : index
    %3 = vector.load %arg2[%c0_2, %c0_3, %c0_4] : memref<9x96x32xbf16, #tpu.memory_space<vmem>>, vector<1x96x32xbf16>
    %4 = vector.shape_cast %3 : vector<1x96x32xbf16> to vector<96x32xbf16>
    %cst_5 = arith.constant dense<0.000000e+00> : vector<16x32xf32>
    %5 = tpu.matmul %2, %4, %cst_5 {dimension_numbers = #tpu.dot_dimension_numbers<[1], [0], [0], [1], [0, 0, 1, 1], [], []>} : vector<16x96xbf16>, vector<96x32xbf16>, vector<16x32xf32> -> vector<16x32xf32>
    %6 = arith.addf %0, %5 : vector<16x32xf32>
    %c0_6 = arith.constant 0 : index
    %c1 = arith.constant 1 : index
    %c0_7 = arith.constant 0 : index
    %7 = vector.load %arg1[%c0_6, %c1, %c0_7] : memref<1x32x96xbf16, #tpu.memory_space<vmem>>, vector<1x16x96xbf16>
    %8 = vector.shape_cast %7 : vector<1x16x96xbf16> to vector<16x96xbf16>
    %c1_8 = arith.constant 1 : index
    %c0_9 = arith.constant 0 : index
    %c0_10 = arith.constant 0 : index
    %9 = vector.load %arg2[%c1_8, %c0_9, %c0_10] : memref<9x96x32xbf16, #tpu.memory_space<vmem>>, vector<1x96x32xbf16>
    %10 = vector.shape_cast %9 : vector<1x96x32xbf16> to vector<96x32xbf16>
    %cst_11 = arith.constant dense<0.000000e+00> : vector<16x32xf32>
    %11 = tpu.matmul %8, %10, %cst_11 {dimension_numbers = #tpu.dot_dimension_numbers<[1], [0], [0], [1], [0, 0, 1, 1], [], []>} : vector<16x96xbf16>, vector<96x32xbf16>, vector<16x32xf32> -> vector<16x32xf32>
    %12 = arith.addf %6, %11 : vector<16x32xf32>
    %c0_12 = arith.constant 0 : index
    %c2 = arith.constant 2 : index
    %c0_13 = arith.constant 0 : index
    %13 = vector.load %arg1[%c0_12, %c2, %c0_13] : memref<1x32x96xbf16, #tpu.memory_space<vmem>>, vector<1x16x96xbf16>
    %14 = vector.shape_cast %13 : vector<1x16x96xbf16> to vector<16x96xbf16>
    %c2_14 = arith.constant 2 : index
    %c0_15 = arith.constant 0 : index
    %c0_16 = arith.constant 0 : index
    %15 = vector.load %arg2[%c2_14, %c0_15, %c0_16] : memref<9x96x32xbf16, #tpu.memory_space<vmem>>, vector<1x96x32xbf16>
    %16 = vector.shape_cast %15 : vector<1x96x32xbf16> to vector<96x32xbf16>
    %cst_17 = arith.constant dense<0.000000e+00> : vector<16x32xf32>
    %17 = tpu.matmul %14, %16, %cst_17 {dimension_numbers = #tpu.dot_dimension_numbers<[1], [0], [0], [1], [0, 0, 1, 1], [], []>} : vector<16x96xbf16>, vector<96x32xbf16>, vector<16x32xf32> -> vector<16x32xf32>
    %18 = arith.addf %12, %17 : vector<16x32xf32>
    %c0_18 = arith.constant 0 : index
    %c4 = arith.constant 4 : index
    %c0_19 = arith.constant 0 : index
    %19 = vector.load %arg1[%c0_18, %c4, %c0_19] : memref<1x32x96xbf16, #tpu.memory_space<vmem>>, vector<1x16x96xbf16>
    %20 = vector.shape_cast %19 : vector<1x16x96xbf16> to vector<16x96xbf16>
    %c3 = arith.constant 3 : index
    %c0_20 = arith.constant 0 : index
    %c0_21 = arith.constant 0 : index
    %21 = vector.load %arg2[%c3, %c0_20, %c0_21] : memref<9x96x32xbf16, #tpu.memory_space<vmem>>, vector<1x96x32xbf16>
    %22 = vector.shape_cast %21 : vector<1x96x32xbf16> to vector<96x32xbf16>
    %cst_22 = arith.constant dense<0.000000e+00> : vector<16x32xf32>
    %23 = tpu.matmul %20, %22, %cst_22 {dimension_numbers = #tpu.dot_dimension_numbers<[1], [0], [0], [1], [0, 0, 1, 1], [], []>} : vector<16x96xbf16>, vector<96x32xbf16>, vector<16x32xf32> -> vector<16x32xf32>
    %24 = arith.addf %18, %23 : vector<16x32xf32>
    %c0_23 = arith.constant 0 : index
    %c5 = arith.constant 5 : index
    %c0_24 = arith.constant 0 : index
    %25 = vector.load %arg1[%c0_23, %c5, %c0_24] : memref<1x32x96xbf16, #tpu.memory_space<vmem>>, vector<1x16x96xbf16>
    %26 = vector.shape_cast %25 : vector<1x16x96xbf16> to vector<16x96xbf16>
    %c4_25 = arith.constant 4 : index
    %c0_26 = arith.constant 0 : index
    %c0_27 = arith.constant 0 : index
    %27 = vector.load %arg2[%c4_25, %c0_26, %c0_27] : memref<9x96x32xbf16, #tpu.memory_space<vmem>>, vector<1x96x32xbf16>
    %28 = vector.shape_cast %27 : vector<1x96x32xbf16> to vector<96x32xbf16>
    %cst_28 = arith.constant dense<0.000000e+00> : vector<16x32xf32>
    %29 = tpu.matmul %26, %28, %cst_28 {dimension_numbers = #tpu.dot_dimension_numbers<[1], [0], [0], [1], [0, 0, 1, 1], [], []>} : vector<16x96xbf16>, vector<96x32xbf16>, vector<16x32xf32> -> vector<16x32xf32>
    %30 = arith.addf %24, %29 : vector<16x32xf32>
    %c0_29 = arith.constant 0 : index
    %c6 = arith.constant 6 : index
    %c0_30 = arith.constant 0 : index
    %31 = vector.load %arg1[%c0_29, %c6, %c0_30] : memref<1x32x96xbf16, #tpu.memory_space<vmem>>, vector<1x16x96xbf16>
    %32 = vector.shape_cast %31 : vector<1x16x96xbf16> to vector<16x96xbf16>
    %c5_31 = arith.constant 5 : index
    %c0_32 = arith.constant 0 : index
    %c0_33 = arith.constant 0 : index
    %33 = vector.load %arg2[%c5_31, %c0_32, %c0_33] : memref<9x96x32xbf16, #tpu.memory_space<vmem>>, vector<1x96x32xbf16>
    %34 = vector.shape_cast %33 : vector<1x96x32xbf16> to vector<96x32xbf16>
    %cst_34 = arith.constant dense<0.000000e+00> : vector<16x32xf32>
    %35 = tpu.matmul %32, %34, %cst_34 {dimension_numbers = #tpu.dot_dimension_numbers<[1], [0], [0], [1], [0, 0, 1, 1], [], []>} : vector<16x96xbf16>, vector<96x32xbf16>, vector<16x32xf32> -> vector<16x32xf32>
    %36 = arith.addf %30, %35 : vector<16x32xf32>
    %c0_35 = arith.constant 0 : index
    %c8 = arith.constant 8 : index
    %c0_36 = arith.constant 0 : index
    %37 = vector.load %arg1[%c0_35, %c8, %c0_36] : memref<1x32x96xbf16, #tpu.memory_space<vmem>>, vector<1x16x96xbf16>
    %38 = vector.shape_cast %37 : vector<1x16x96xbf16> to vector<16x96xbf16>
    %c6_37 = arith.constant 6 : index
    %c0_38 = arith.constant 0 : index
    %c0_39 = arith.constant 0 : index
    %39 = vector.load %arg2[%c6_37, %c0_38, %c0_39] : memref<9x96x32xbf16, #tpu.memory_space<vmem>>, vector<1x96x32xbf16>
    %40 = vector.shape_cast %39 : vector<1x96x32xbf16> to vector<96x32xbf16>
    %cst_40 = arith.constant dense<0.000000e+00> : vector<16x32xf32>
    %41 = tpu.matmul %38, %40, %cst_40 {dimension_numbers = #tpu.dot_dimension_numbers<[1], [0], [0], [1], [0, 0, 1, 1], [], []>} : vector<16x96xbf16>, vector<96x32xbf16>, vector<16x32xf32> -> vector<16x32xf32>
    %42 = arith.addf %36, %41 : vector<16x32xf32>
    %c0_41 = arith.constant 0 : index
    %c9 = arith.constant 9 : index
    %c0_42 = arith.constant 0 : index
    %43 = vector.load %arg1[%c0_41, %c9, %c0_42] : memref<1x32x96xbf16, #tpu.memory_space<vmem>>, vector<1x16x96xbf16>
    %44 = vector.shape_cast %43 : vector<1x16x96xbf16> to vector<16x96xbf16>
    %c7 = arith.constant 7 : index
    %c0_43 = arith.constant 0 : index
    %c0_44 = arith.constant 0 : index
    %45 = vector.load %arg2[%c7, %c0_43, %c0_44] : memref<9x96x32xbf16, #tpu.memory_space<vmem>>, vector<1x96x32xbf16>
    %46 = vector.shape_cast %45 : vector<1x96x32xbf16> to vector<96x32xbf16>
    %cst_45 = arith.constant dense<0.000000e+00> : vector<16x32xf32>
    %47 = tpu.matmul %44, %46, %cst_45 {dimension_numbers = #tpu.dot_dimension_numbers<[1], [0], [0], [1], [0, 0, 1, 1], [], []>} : vector<16x96xbf16>, vector<96x32xbf16>, vector<16x32xf32> -> vector<16x32xf32>
    %48 = arith.addf %42, %47 : vector<16x32xf32>
    %c0_46 = arith.constant 0 : index
    %c10 = arith.constant 10 : index
    %c0_47 = arith.constant 0 : index
    %49 = vector.load %arg1[%c0_46, %c10, %c0_47] : memref<1x32x96xbf16, #tpu.memory_space<vmem>>, vector<1x16x96xbf16>
    %50 = vector.shape_cast %49 : vector<1x16x96xbf16> to vector<16x96xbf16>
    %c8_48 = arith.constant 8 : index
    %c0_49 = arith.constant 0 : index
    %c0_50 = arith.constant 0 : index
    %51 = vector.load %arg2[%c8_48, %c0_49, %c0_50] : memref<9x96x32xbf16, #tpu.memory_space<vmem>>, vector<1x96x32xbf16>
    %52 = vector.shape_cast %51 : vector<1x96x32xbf16> to vector<96x32xbf16>
    %cst_51 = arith.constant dense<0.000000e+00> : vector<16x32xf32>
    %53 = tpu.matmul %50, %52, %cst_51 {dimension_numbers = #tpu.dot_dimension_numbers<[1], [0], [0], [1], [0, 0, 1, 1], [], []>} : vector<16x96xbf16>, vector<96x32xbf16>, vector<16x32xf32> -> vector<16x32xf32>
    %54 = arith.addf %48, %53 : vector<16x32xf32>
    %c0_52 = arith.constant 0 : index
    %c0_53 = arith.constant 0 : index
    %c0_54 = arith.constant 0 : index
    %55 = vector.load %arg3[%c0_52, %c0_53, %c0_54] : memref<1x16x32xf32, #tpu.memory_space<vmem>>, vector<1x16x32xf32>
    %56 = vector.shape_cast %55 : vector<1x16x32xf32> to vector<16x32xf32>
    %57 = vector.shape_cast %54 : vector<16x32xf32> to vector<1x16x32xf32>
    tpu.vector_store %arg3[%c0_52, %c0_53, %c0_54], %57 {strides = array<i32>} : memref<1x16x32xf32, #tpu.memory_space<vmem>>, vector<1x16x32xf32>,
    return
  }
  func.func @transform_0(%arg0: i32) -> (i32, i32, i32) {
    %c0_i32 = arith.constant 0 : i32
    %c0_i32_0 = arith.constant 0 : i32
    %c0_i32_1 = arith.constant 0 : i32
    return %arg0, %c0_i32, %c0_i32_0 : i32, i32, i32
  }
  func.func @transform_1(%arg0: i32) -> (i32, i32, i32) {
    %c0_i32 = arith.constant 0 : i32
    %c0_i32_0 = arith.constant 0 : i32
    %c0_i32_1 = arith.constant 0 : i32
    %c0_i32_2 = arith.constant 0 : i32
    return %c0_i32, %c0_i32_0, %c0_i32_1 : i32, i32, i32
  }
  func.func @transform_2(%arg0: i32) -> (i32, i32, i32) {
    %c0_i32 = arith.constant 0 : i32
    %c0_i32_0 = arith.constant 0 : i32
    %c0_i32_1 = arith.constant 0 : i32
    return %arg0, %c0_i32, %c0_i32_0 : i32, i32, i32
  }
}

module attributes {stable_mosaic.version = 11 : i64} {
  func.func @_mm_kernel(%arg0: i32, %arg1: i32, %arg2: memref<256x215xbf16, #tpu.memory_space<vmem>>, %arg3: memref<215x96xbf16, #tpu.memory_space<vmem>>, %arg4: memref<1x96xf32, #tpu.memory_space<vmem>>, %arg5: memref<256x96xf32, #tpu.memory_space<vmem>>) attributes {dimension_semantics = [#tpu.dimension_semantics<parallel>, #tpu.dimension_semantics<parallel>], iteration_bounds = array<i64: 1, 1>, scalar_prefetch = 0 : i64, scratch_operands = 0 : i64, tpu.core_type = #tpu.core_type<tc>, window_params = [{transform_indices = @transform_0, window_bounds = array<i64: 256, 215>}, {transform_indices = @transform_1, window_bounds = array<i64: 215, 96>}, {transform_indices = @transform_2, window_bounds = array<i64: 1, 96>}, {transform_indices = @transform_3, window_bounds = array<i64: 256, 96>}]} {
    %c0 = arith.constant 0 : index
    %c0_0 = arith.constant 0 : index
    %0 = vector.load %arg2[%c0, %c0_0] : memref<256x215xbf16, #tpu.memory_space<vmem>>, vector<256x215xbf16>
    %c0_1 = arith.constant 0 : index
    %c0_2 = arith.constant 0 : index
    %1 = vector.load %arg3[%c0_1, %c0_2] : memref<215x96xbf16, #tpu.memory_space<vmem>>, vector<215x96xbf16>
    %cst = arith.constant dense<0.000000e+00> : vector<256x96xf32>
    %2 = tpu.matmul %0, %1, %cst {dimension_numbers = #tpu.dot_dimension_numbers<[1], [0], [0], [1], [0, 0, 1, 1], [], []>} : vector<256x215xbf16>, vector<215x96xbf16>, vector<256x96xf32> -> vector<256x96xf32>
    %c0_3 = arith.constant 0 : index
    %c0_4 = arith.constant 0 : index
    %3 = vector.load %arg4[%c0_3, %c0_4] : memref<1x96xf32, #tpu.memory_space<vmem>>, vector<1x96xf32>
    %4 = vector.broadcast %3 : vector<1x96xf32> to vector<256x96xf32>
    %5 = arith.addf %2, %4 : vector<256x96xf32>
    %c0_5 = arith.constant 0 : index
    %c0_6 = arith.constant 0 : index
    %6 = vector.load %arg5[%c0_5, %c0_6] : memref<256x96xf32, #tpu.memory_space<vmem>>, vector<256x96xf32>
    tpu.vector_store %arg5[%c0_5, %c0_6], %5 {strides = array<i32>} : memref<256x96xf32, #tpu.memory_space<vmem>>, vector<256x96xf32>,
    return
  }
  func.func @transform_0(%arg0: i32, %arg1: i32) -> (i32, i32) {
    %c0_i32 = arith.constant 0 : i32
    %c0_i32_0 = arith.constant 0 : i32
    return %arg0, %c0_i32 : i32, i32
  }
  func.func @transform_1(%arg0: i32, %arg1: i32) -> (i32, i32) {
    %c0_i32 = arith.constant 0 : i32
    %c0_i32_0 = arith.constant 0 : i32
    return %c0_i32, %arg1 : i32, i32
  }
  func.func @transform_2(%arg0: i32, %arg1: i32) -> (i32, i32) {
    %c0_i32 = arith.constant 0 : i32
    %c0_i32_0 = arith.constant 0 : i32
    return %c0_i32, %arg1 : i32, i32
  }
  func.func @transform_3(%arg0: i32, %arg1: i32) -> (i32, i32) {
    %c0_i32 = arith.constant 0 : i32
    return %arg0, %arg1 : i32, i32
  }
}

module attributes {stable_mosaic.version = 11 : i64} {
  func.func @_ln_kernel(%arg0: i32, %arg1: memref<256x96xf32, #tpu.memory_space<vmem>>, %arg2: memref<1x96xf32, #tpu.memory_space<vmem>>, %arg3: memref<1x96xf32, #tpu.memory_space<vmem>>, %arg4: memref<256x96xf32, #tpu.memory_space<vmem>>) attributes {dimension_semantics = [#tpu.dimension_semantics<parallel>], iteration_bounds = array<i64: 1>, scalar_prefetch = 0 : i64, scratch_operands = 0 : i64, tpu.core_type = #tpu.core_type<tc>, window_params = [{transform_indices = @transform_0, window_bounds = array<i64: 256, 96>}, {pipeline_mode = #tpu.pipeline_mode<synchronous>, transform_indices = @transform_1, window_bounds = array<i64: 1, 96>}, {pipeline_mode = #tpu.pipeline_mode<synchronous>, transform_indices = @transform_2, window_bounds = array<i64: 1, 96>}, {transform_indices = @transform_3, window_bounds = array<i64: 256, 96>}]} {
    %c0 = arith.constant 0 : index
    %c0_0 = arith.constant 0 : index
    %0 = vector.load %arg1[%c0, %c0_0] : memref<256x96xf32, #tpu.memory_space<vmem>>, vector<256x96xf32>
    %cst = arith.constant dense<0.000000e+00> : vector<256xf32>
    %1 = vector.multi_reduction <add>, %0, %cst [1] : vector<256x96xf32> to vector<256xf32>
    %2 = vector.shape_cast %1 : vector<256xf32> to vector<256x1xf32>
    %cst_1 = arith.constant 9.600000e+01 : f32
    %3 = vector.broadcast %cst_1 : f32 to vector<256x1xf32>
    %4 = arith.divf %2, %3 : vector<256x1xf32>
    %5 = vector.broadcast %4 : vector<256x1xf32> to vector<256x96xf32>
    %6 = arith.subf %0, %5 : vector<256x96xf32>
    %7 = arith.mulf %6, %6 : vector<256x96xf32>
    %cst_2 = arith.constant dense<0.000000e+00> : vector<256xf32>
    %8 = vector.multi_reduction <add>, %7, %cst_2 [1] : vector<256x96xf32> to vector<256xf32>
    %9 = vector.shape_cast %8 : vector<256xf32> to vector<256x1xf32>
    %cst_3 = arith.constant 9.600000e+01 : f32
    %10 = vector.broadcast %cst_3 : f32 to vector<256x1xf32>
    %11 = arith.divf %9, %10 : vector<256x1xf32>
    %cst_4 = arith.constant 9.99999997E-7 : f32
    %12 = vector.broadcast %cst_4 : f32 to vector<256x1xf32>
    %13 = arith.addf %11, %12 : vector<256x1xf32>
    %14 = math.rsqrt %13 : vector<256x1xf32>
    %15 = vector.broadcast %14 : vector<256x1xf32> to vector<256x96xf32>
    %16 = arith.mulf %6, %15 : vector<256x96xf32>
    %c0_5 = arith.constant 0 : index
    %c0_6 = arith.constant 0 : index
    %17 = vector.load %arg2[%c0_5, %c0_6] : memref<1x96xf32, #tpu.memory_space<vmem>>, vector<1x96xf32>
    %18 = vector.broadcast %17 : vector<1x96xf32> to vector<256x96xf32>
    %19 = arith.mulf %16, %18 : vector<256x96xf32>
    %c0_7 = arith.constant 0 : index
    %c0_8 = arith.constant 0 : index
    %20 = vector.load %arg3[%c0_7, %c0_8] : memref<1x96xf32, #tpu.memory_space<vmem>>, vector<1x96xf32>
    %21 = vector.broadcast %20 : vector<1x96xf32> to vector<256x96xf32>
    %22 = arith.addf %19, %21 : vector<256x96xf32>
    %cst_9 = arith.constant 0.000000e+00 : f32
    %23 = vector.broadcast %cst_9 : f32 to vector<256x96xf32>
    %24 = arith.maximumf %22, %23 : vector<256x96xf32>
    %c0_10 = arith.constant 0 : index
    %c0_11 = arith.constant 0 : index
    %25 = vector.load %arg4[%c0_10, %c0_11] : memref<256x96xf32, #tpu.memory_space<vmem>>, vector<256x96xf32>
    tpu.vector_store %arg4[%c0_10, %c0_11], %24 {strides = array<i32>} : memref<256x96xf32, #tpu.memory_space<vmem>>, vector<256x96xf32>,
    return
  }
  func.func @transform_0(%arg0: i32) -> (i32, i32) {
    %c0_i32 = arith.constant 0 : i32
    %c0_i32_0 = arith.constant 0 : i32
    return %arg0, %c0_i32 : i32, i32
  }
  func.func @transform_1(%arg0: i32) -> (i32, i32) {
    %c0_i32 = arith.constant 0 : i32
    %c0_i32_0 = arith.constant 0 : i32
    %c0_i32_1 = arith.constant 0 : i32
    return %c0_i32, %c0_i32_0 : i32, i32
  }
  func.func @transform_2(%arg0: i32) -> (i32, i32) {
    %c0_i32 = arith.constant 0 : i32
    %c0_i32_0 = arith.constant 0 : i32
    %c0_i32_1 = arith.constant 0 : i32
    return %c0_i32, %c0_i32_0 : i32, i32
  }
  func.func @transform_3(%arg0: i32) -> (i32, i32) {
    %c0_i32 = arith.constant 0 : i32
    %c0_i32_0 = arith.constant 0 : i32
    return %arg0, %c0_i32 : i32, i32
  }
}

module attributes {stable_mosaic.version = 11 : i64} {
  func.func @_mm_kernel(%arg0: i32, %arg1: i32, %arg2: memref<256x96xbf16, #tpu.memory_space<vmem>>, %arg3: memref<96x7xbf16, #tpu.memory_space<vmem>>, %arg4: memref<1x7xf32, #tpu.memory_space<vmem>>, %arg5: memref<256x7xf32, #tpu.memory_space<vmem>>) attributes {dimension_semantics = [#tpu.dimension_semantics<parallel>, #tpu.dimension_semantics<parallel>], iteration_bounds = array<i64: 1, 1>, scalar_prefetch = 0 : i64, scratch_operands = 0 : i64, tpu.core_type = #tpu.core_type<tc>, window_params = [{transform_indices = @transform_0, window_bounds = array<i64: 256, 96>}, {transform_indices = @transform_1, window_bounds = array<i64: 96, 7>}, {transform_indices = @transform_2, window_bounds = array<i64: 1, 7>}, {transform_indices = @transform_3, window_bounds = array<i64: 256, 7>}]} {
    %c0 = arith.constant 0 : index
    %c0_0 = arith.constant 0 : index
    %0 = vector.load %arg2[%c0, %c0_0] : memref<256x96xbf16, #tpu.memory_space<vmem>>, vector<256x96xbf16>
    %c0_1 = arith.constant 0 : index
    %c0_2 = arith.constant 0 : index
    %1 = vector.load %arg3[%c0_1, %c0_2] : memref<96x7xbf16, #tpu.memory_space<vmem>>, vector<96x7xbf16>
    %cst = arith.constant dense<0.000000e+00> : vector<256x7xf32>
    %2 = tpu.matmul %0, %1, %cst {dimension_numbers = #tpu.dot_dimension_numbers<[1], [0], [0], [1], [0, 0, 1, 1], [], []>} : vector<256x96xbf16>, vector<96x7xbf16>, vector<256x7xf32> -> vector<256x7xf32>
    %c0_3 = arith.constant 0 : index
    %c0_4 = arith.constant 0 : index
    %3 = vector.load %arg4[%c0_3, %c0_4] : memref<1x7xf32, #tpu.memory_space<vmem>>, vector<1x7xf32>
    %4 = vector.broadcast %3 : vector<1x7xf32> to vector<256x7xf32>
    %5 = arith.addf %2, %4 : vector<256x7xf32>
    %6 = arith.negf %5 : vector<256x7xf32>
    %7 = math.exp %6 : vector<256x7xf32>
    %cst_5 = arith.constant 1.000000e+00 : f32
    %8 = vector.broadcast %cst_5 : f32 to vector<256x7xf32>
    %9 = arith.addf %8, %7 : vector<256x7xf32>
    %10 = arith.divf %8, %9 : vector<256x7xf32>
    %c0_6 = arith.constant 0 : index
    %c0_7 = arith.constant 0 : index
    %11 = vector.load %arg5[%c0_6, %c0_7] : memref<256x7xf32, #tpu.memory_space<vmem>>, vector<256x7xf32>
    tpu.vector_store %arg5[%c0_6, %c0_7], %10 {strides = array<i32>} : memref<256x7xf32, #tpu.memory_space<vmem>>, vector<256x7xf32>,
    return
  }
  func.func @transform_0(%arg0: i32, %arg1: i32) -> (i32, i32) {
    %c0_i32 = arith.constant 0 : i32
    %c0_i32_0 = arith.constant 0 : i32
    return %arg0, %c0_i32 : i32, i32
  }
  func.func @transform_1(%arg0: i32, %arg1: i32) -> (i32, i32) {
    %c0_i32 = arith.constant 0 : i32
    %c0_i32_0 = arith.constant 0 : i32
    return %c0_i32, %arg1 : i32, i32
  }
  func.func @transform_2(%arg0: i32, %arg1: i32) -> (i32, i32) {
    %c0_i32 = arith.constant 0 : i32
    %c0_i32_0 = arith.constant 0 : i32
    return %c0_i32, %arg1 : i32, i32
  }
  func.func @transform_3(%arg0: i32, %arg1: i32) -> (i32, i32) {
    %c0_i32 = arith.constant 0 : i32
    return %arg0, %arg1 : i32, i32
  }
}

module attributes {stable_mosaic.version = 11 : i64} {
  func.func @_mm_kernel(%arg0: i32, %arg1: i32, %arg2: memref<256x3xbf16, #tpu.memory_space<vmem>>, %arg3: memref<3x10xbf16, #tpu.memory_space<vmem>>, %arg4: memref<1x10xf32, #tpu.memory_space<vmem>>, %arg5: memref<256x10xf32, #tpu.memory_space<vmem>>) attributes {dimension_semantics = [#tpu.dimension_semantics<parallel>, #tpu.dimension_semantics<parallel>], iteration_bounds = array<i64: 1, 1>, scalar_prefetch = 0 : i64, scratch_operands = 0 : i64, tpu.core_type = #tpu.core_type<tc>, window_params = [{transform_indices = @transform_0, window_bounds = array<i64: 256, 3>}, {transform_indices = @transform_1, window_bounds = array<i64: 3, 10>}, {transform_indices = @transform_2, window_bounds = array<i64: 1, 10>}, {transform_indices = @transform_3, window_bounds = array<i64: 256, 10>}]} {
    %c0 = arith.constant 0 : index
    %c0_0 = arith.constant 0 : index
    %0 = vector.load %arg2[%c0, %c0_0] : memref<256x3xbf16, #tpu.memory_space<vmem>>, vector<256x3xbf16>
    %c0_1 = arith.constant 0 : index
    %c0_2 = arith.constant 0 : index
    %1 = vector.load %arg3[%c0_1, %c0_2] : memref<3x10xbf16, #tpu.memory_space<vmem>>, vector<3x10xbf16>
    %cst = arith.constant dense<0.000000e+00> : vector<256x10xf32>
    %2 = tpu.matmul %0, %1, %cst {dimension_numbers = #tpu.dot_dimension_numbers<[1], [0], [0], [1], [0, 0, 1, 1], [], []>} : vector<256x3xbf16>, vector<3x10xbf16>, vector<256x10xf32> -> vector<256x10xf32>
    %c0_3 = arith.constant 0 : index
    %c0_4 = arith.constant 0 : index
    %3 = vector.load %arg4[%c0_3, %c0_4] : memref<1x10xf32, #tpu.memory_space<vmem>>, vector<1x10xf32>
    %4 = vector.broadcast %3 : vector<1x10xf32> to vector<256x10xf32>
    %5 = arith.addf %2, %4 : vector<256x10xf32>
    %c0_5 = arith.constant 0 : index
    %c0_6 = arith.constant 0 : index
    %6 = vector.load %arg5[%c0_5, %c0_6] : memref<256x10xf32, #tpu.memory_space<vmem>>, vector<256x10xf32>
    tpu.vector_store %arg5[%c0_5, %c0_6], %5 {strides = array<i32>} : memref<256x10xf32, #tpu.memory_space<vmem>>, vector<256x10xf32>,
    return
  }
  func.func @transform_0(%arg0: i32, %arg1: i32) -> (i32, i32) {
    %c0_i32 = arith.constant 0 : i32
    %c0_i32_0 = arith.constant 0 : i32
    return %arg0, %c0_i32 : i32, i32
  }
  func.func @transform_1(%arg0: i32, %arg1: i32) -> (i32, i32) {
    %c0_i32 = arith.constant 0 : i32
    %c0_i32_0 = arith.constant 0 : i32
    return %c0_i32, %arg1 : i32, i32
  }
  func.func @transform_2(%arg0: i32, %arg1: i32) -> (i32, i32) {
    %c0_i32 = arith.constant 0 : i32
    %c0_i32_0 = arith.constant 0 : i32
    return %c0_i32, %arg1 : i32, i32
  }
  func.func @transform_3(%arg0: i32, %arg1: i32) -> (i32, i32) {
    %c0_i32 = arith.constant 0 : i32
    return %arg0, %arg1 : i32, i32
  }
}

module attributes {stable_mosaic.version = 11 : i64} {
  func.func @_ln_kernel(%arg0: i32, %arg1: memref<256x10xf32, #tpu.memory_space<vmem>>, %arg2: memref<1x10xf32, #tpu.memory_space<vmem>>, %arg3: memref<1x10xf32, #tpu.memory_space<vmem>>, %arg4: memref<256x10xf32, #tpu.memory_space<vmem>>) attributes {dimension_semantics = [#tpu.dimension_semantics<parallel>], iteration_bounds = array<i64: 1>, scalar_prefetch = 0 : i64, scratch_operands = 0 : i64, tpu.core_type = #tpu.core_type<tc>, window_params = [{transform_indices = @transform_0, window_bounds = array<i64: 256, 10>}, {pipeline_mode = #tpu.pipeline_mode<synchronous>, transform_indices = @transform_1, window_bounds = array<i64: 1, 10>}, {pipeline_mode = #tpu.pipeline_mode<synchronous>, transform_indices = @transform_2, window_bounds = array<i64: 1, 10>}, {transform_indices = @transform_3, window_bounds = array<i64: 256, 10>}]} {
    %c0 = arith.constant 0 : index
    %c0_0 = arith.constant 0 : index
    %0 = vector.load %arg1[%c0, %c0_0] : memref<256x10xf32, #tpu.memory_space<vmem>>, vector<256x10xf32>
    %cst = arith.constant dense<0.000000e+00> : vector<256xf32>
    %1 = vector.multi_reduction <add>, %0, %cst [1] : vector<256x10xf32> to vector<256xf32>
    %2 = vector.shape_cast %1 : vector<256xf32> to vector<256x1xf32>
    %cst_1 = arith.constant 1.000000e+01 : f32
    %3 = vector.broadcast %cst_1 : f32 to vector<256x1xf32>
    %4 = arith.divf %2, %3 : vector<256x1xf32>
    %5 = vector.broadcast %4 : vector<256x1xf32> to vector<256x10xf32>
    %6 = arith.subf %0, %5 : vector<256x10xf32>
    %7 = arith.mulf %6, %6 : vector<256x10xf32>
    %cst_2 = arith.constant dense<0.000000e+00> : vector<256xf32>
    %8 = vector.multi_reduction <add>, %7, %cst_2 [1] : vector<256x10xf32> to vector<256xf32>
    %9 = vector.shape_cast %8 : vector<256xf32> to vector<256x1xf32>
    %cst_3 = arith.constant 1.000000e+01 : f32
    %10 = vector.broadcast %cst_3 : f32 to vector<256x1xf32>
    %11 = arith.divf %9, %10 : vector<256x1xf32>
    %cst_4 = arith.constant 9.99999997E-7 : f32
    %12 = vector.broadcast %cst_4 : f32 to vector<256x1xf32>
    %13 = arith.addf %11, %12 : vector<256x1xf32>
    %14 = math.rsqrt %13 : vector<256x1xf32>
    %15 = vector.broadcast %14 : vector<256x1xf32> to vector<256x10xf32>
    %16 = arith.mulf %6, %15 : vector<256x10xf32>
    %c0_5 = arith.constant 0 : index
    %c0_6 = arith.constant 0 : index
    %17 = vector.load %arg2[%c0_5, %c0_6] : memref<1x10xf32, #tpu.memory_space<vmem>>, vector<1x10xf32>
    %18 = vector.broadcast %17 : vector<1x10xf32> to vector<256x10xf32>
    %19 = arith.mulf %16, %18 : vector<256x10xf32>
    %c0_7 = arith.constant 0 : index
    %c0_8 = arith.constant 0 : index
    %20 = vector.load %arg3[%c0_7, %c0_8] : memref<1x10xf32, #tpu.memory_space<vmem>>, vector<1x10xf32>
    %21 = vector.broadcast %20 : vector<1x10xf32> to vector<256x10xf32>
    %22 = arith.addf %19, %21 : vector<256x10xf32>
    %cst_9 = arith.constant 0.000000e+00 : f32
    %23 = vector.broadcast %cst_9 : f32 to vector<256x10xf32>
    %24 = arith.maximumf %22, %23 : vector<256x10xf32>
    %c0_10 = arith.constant 0 : index
    %c0_11 = arith.constant 0 : index
    %25 = vector.load %arg4[%c0_10, %c0_11] : memref<256x10xf32, #tpu.memory_space<vmem>>, vector<256x10xf32>
    tpu.vector_store %arg4[%c0_10, %c0_11], %24 {strides = array<i32>} : memref<256x10xf32, #tpu.memory_space<vmem>>, vector<256x10xf32>,
    return
  }
  func.func @transform_0(%arg0: i32) -> (i32, i32) {
    %c0_i32 = arith.constant 0 : i32
    %c0_i32_0 = arith.constant 0 : i32
    return %arg0, %c0_i32 : i32, i32
  }
  func.func @transform_1(%arg0: i32) -> (i32, i32) {
    %c0_i32 = arith.constant 0 : i32
    %c0_i32_0 = arith.constant 0 : i32
    %c0_i32_1 = arith.constant 0 : i32
    return %c0_i32, %c0_i32_0 : i32, i32
  }
  func.func @transform_2(%arg0: i32) -> (i32, i32) {
    %c0_i32 = arith.constant 0 : i32
    %c0_i32_0 = arith.constant 0 : i32
    %c0_i32_1 = arith.constant 0 : i32
    return %c0_i32, %c0_i32_0 : i32, i32
  }
  func.func @transform_3(%arg0: i32) -> (i32, i32) {
    %c0_i32 = arith.constant 0 : i32
    %c0_i32_0 = arith.constant 0 : i32
    return %arg0, %c0_i32 : i32, i32
  }
}

module attributes {stable_mosaic.version = 11 : i64} {
  func.func @_mm_kernel(%arg0: i32, %arg1: i32, %arg2: memref<256x10xbf16, #tpu.memory_space<vmem>>, %arg3: memref<10x7xbf16, #tpu.memory_space<vmem>>, %arg4: memref<1x7xf32, #tpu.memory_space<vmem>>, %arg5: memref<256x7xf32, #tpu.memory_space<vmem>>) attributes {dimension_semantics = [#tpu.dimension_semantics<parallel>, #tpu.dimension_semantics<parallel>], iteration_bounds = array<i64: 1, 1>, scalar_prefetch = 0 : i64, scratch_operands = 0 : i64, tpu.core_type = #tpu.core_type<tc>, window_params = [{transform_indices = @transform_0, window_bounds = array<i64: 256, 10>}, {transform_indices = @transform_1, window_bounds = array<i64: 10, 7>}, {transform_indices = @transform_2, window_bounds = array<i64: 1, 7>}, {transform_indices = @transform_3, window_bounds = array<i64: 256, 7>}]} {
    %c0 = arith.constant 0 : index
    %c0_0 = arith.constant 0 : index
    %0 = vector.load %arg2[%c0, %c0_0] : memref<256x10xbf16, #tpu.memory_space<vmem>>, vector<256x10xbf16>
    %c0_1 = arith.constant 0 : index
    %c0_2 = arith.constant 0 : index
    %1 = vector.load %arg3[%c0_1, %c0_2] : memref<10x7xbf16, #tpu.memory_space<vmem>>, vector<10x7xbf16>
    %cst = arith.constant dense<0.000000e+00> : vector<256x7xf32>
    %2 = tpu.matmul %0, %1, %cst {dimension_numbers = #tpu.dot_dimension_numbers<[1], [0], [0], [1], [0, 0, 1, 1], [], []>} : vector<256x10xbf16>, vector<10x7xbf16>, vector<256x7xf32> -> vector<256x7xf32>
    %c0_3 = arith.constant 0 : index
    %c0_4 = arith.constant 0 : index
    %3 = vector.load %arg4[%c0_3, %c0_4] : memref<1x7xf32, #tpu.memory_space<vmem>>, vector<1x7xf32>
    %4 = vector.broadcast %3 : vector<1x7xf32> to vector<256x7xf32>
    %5 = arith.addf %2, %4 : vector<256x7xf32>
    %6 = arith.negf %5 : vector<256x7xf32>
    %7 = math.exp %6 : vector<256x7xf32>
    %cst_5 = arith.constant 1.000000e+00 : f32
    %8 = vector.broadcast %cst_5 : f32 to vector<256x7xf32>
    %9 = arith.addf %8, %7 : vector<256x7xf32>
    %10 = arith.divf %8, %9 : vector<256x7xf32>
    %c0_6 = arith.constant 0 : index
    %c0_7 = arith.constant 0 : index
    %11 = vector.load %arg5[%c0_6, %c0_7] : memref<256x7xf32, #tpu.memory_space<vmem>>, vector<256x7xf32>
    tpu.vector_store %arg5[%c0_6, %c0_7], %10 {strides = array<i32>} : memref<256x7xf32, #tpu.memory_space<vmem>>, vector<256x7xf32>,
    return
  }
  func.func @transform_0(%arg0: i32, %arg1: i32) -> (i32, i32) {
    %c0_i32 = arith.constant 0 : i32
    %c0_i32_0 = arith.constant 0 : i32
    return %arg0, %c0_i32 : i32, i32
  }
  func.func @transform_1(%arg0: i32, %arg1: i32) -> (i32, i32) {
    %c0_i32 = arith.constant 0 : i32
    %c0_i32_0 = arith.constant 0 : i32
    return %c0_i32, %arg1 : i32, i32
  }
  func.func @transform_2(%arg0: i32, %arg1: i32) -> (i32, i32) {
    %c0_i32 = arith.constant 0 : i32
    %c0_i32_0 = arith.constant 0 : i32
    return %c0_i32, %arg1 : i32, i32
  }
  func.func @transform_3(%arg0: i32, %arg1: i32) -> (i32, i32) {
    %c0_i32 = arith.constant 0 : i32
    return %arg0, %arg1 : i32, i32
  }
}

module attributes {stable_mosaic.version = 11 : i64} {
  func.func @_mm_kernel(%arg0: i32, %arg1: i32, %arg2: memref<256x218xbf16, #tpu.memory_space<vmem>>, %arg3: memref<218x96xbf16, #tpu.memory_space<vmem>>, %arg4: memref<1x96xf32, #tpu.memory_space<vmem>>, %arg5: memref<256x96xf32, #tpu.memory_space<vmem>>) attributes {dimension_semantics = [#tpu.dimension_semantics<parallel>, #tpu.dimension_semantics<parallel>], iteration_bounds = array<i64: 1, 1>, scalar_prefetch = 0 : i64, scratch_operands = 0 : i64, tpu.core_type = #tpu.core_type<tc>, window_params = [{transform_indices = @transform_0, window_bounds = array<i64: 256, 218>}, {transform_indices = @transform_1, window_bounds = array<i64: 218, 96>}, {transform_indices = @transform_2, window_bounds = array<i64: 1, 96>}, {transform_indices = @transform_3, window_bounds = array<i64: 256, 96>}]} {
    %c0 = arith.constant 0 : index
    %c0_0 = arith.constant 0 : index
    %0 = vector.load %arg2[%c0, %c0_0] : memref<256x218xbf16, #tpu.memory_space<vmem>>, vector<256x218xbf16>
    %c0_1 = arith.constant 0 : index
    %c0_2 = arith.constant 0 : index
    %1 = vector.load %arg3[%c0_1, %c0_2] : memref<218x96xbf16, #tpu.memory_space<vmem>>, vector<218x96xbf16>
    %cst = arith.constant dense<0.000000e+00> : vector<256x96xf32>
    %2 = tpu.matmul %0, %1, %cst {dimension_numbers = #tpu.dot_dimension_numbers<[1], [0], [0], [1], [0, 0, 1, 1], [], []>} : vector<256x218xbf16>, vector<218x96xbf16>, vector<256x96xf32> -> vector<256x96xf32>
    %c0_3 = arith.constant 0 : index
    %c0_4 = arith.constant 0 : index
    %3 = vector.load %arg4[%c0_3, %c0_4] : memref<1x96xf32, #tpu.memory_space<vmem>>, vector<1x96xf32>
    %4 = vector.broadcast %3 : vector<1x96xf32> to vector<256x96xf32>
    %5 = arith.addf %2, %4 : vector<256x96xf32>
    %c0_5 = arith.constant 0 : index
    %c0_6 = arith.constant 0 : index
    %6 = vector.load %arg5[%c0_5, %c0_6] : memref<256x96xf32, #tpu.memory_space<vmem>>, vector<256x96xf32>
    tpu.vector_store %arg5[%c0_5, %c0_6], %5 {strides = array<i32>} : memref<256x96xf32, #tpu.memory_space<vmem>>, vector<256x96xf32>,
    return
  }
  func.func @transform_0(%arg0: i32, %arg1: i32) -> (i32, i32) {
    %c0_i32 = arith.constant 0 : i32
    %c0_i32_0 = arith.constant 0 : i32
    return %arg0, %c0_i32 : i32, i32
  }
  func.func @transform_1(%arg0: i32, %arg1: i32) -> (i32, i32) {
    %c0_i32 = arith.constant 0 : i32
    %c0_i32_0 = arith.constant 0 : i32
    return %c0_i32, %arg1 : i32, i32
  }
  func.func @transform_2(%arg0: i32, %arg1: i32) -> (i32, i32) {
    %c0_i32 = arith.constant 0 : i32
    %c0_i32_0 = arith.constant 0 : i32
    return %c0_i32, %arg1 : i32, i32
  }
  func.func @transform_3(%arg0: i32, %arg1: i32) -> (i32, i32) {
    %c0_i32 = arith.constant 0 : i32
    return %arg0, %arg1 : i32, i32
  }
}

module attributes {stable_mosaic.version = 11 : i64} {
  func.func @_mm_kernel(%arg0: i32, %arg1: i32, %arg2: memref<256x96xbf16, #tpu.memory_space<vmem>>, %arg3: memref<96x40xbf16, #tpu.memory_space<vmem>>, %arg4: memref<1x40xf32, #tpu.memory_space<vmem>>, %arg5: memref<256x40xf32, #tpu.memory_space<vmem>>) attributes {dimension_semantics = [#tpu.dimension_semantics<parallel>, #tpu.dimension_semantics<parallel>], iteration_bounds = array<i64: 1, 1>, scalar_prefetch = 0 : i64, scratch_operands = 0 : i64, tpu.core_type = #tpu.core_type<tc>, window_params = [{transform_indices = @transform_0, window_bounds = array<i64: 256, 96>}, {transform_indices = @transform_1, window_bounds = array<i64: 96, 40>}, {transform_indices = @transform_2, window_bounds = array<i64: 1, 40>}, {transform_indices = @transform_3, window_bounds = array<i64: 256, 40>}]} {
    %c0 = arith.constant 0 : index
    %c0_0 = arith.constant 0 : index
    %0 = vector.load %arg2[%c0, %c0_0] : memref<256x96xbf16, #tpu.memory_space<vmem>>, vector<256x96xbf16>
    %c0_1 = arith.constant 0 : index
    %c0_2 = arith.constant 0 : index
    %1 = vector.load %arg3[%c0_1, %c0_2] : memref<96x40xbf16, #tpu.memory_space<vmem>>, vector<96x40xbf16>
    %cst = arith.constant dense<0.000000e+00> : vector<256x40xf32>
    %2 = tpu.matmul %0, %1, %cst {dimension_numbers = #tpu.dot_dimension_numbers<[1], [0], [0], [1], [0, 0, 1, 1], [], []>} : vector<256x96xbf16>, vector<96x40xbf16>, vector<256x40xf32> -> vector<256x40xf32>
    %c0_3 = arith.constant 0 : index
    %c0_4 = arith.constant 0 : index
    %3 = vector.load %arg4[%c0_3, %c0_4] : memref<1x40xf32, #tpu.memory_space<vmem>>, vector<1x40xf32>
    %4 = vector.broadcast %3 : vector<1x40xf32> to vector<256x40xf32>
    %5 = arith.addf %2, %4 : vector<256x40xf32>
    %c0_5 = arith.constant 0 : index
    %c0_6 = arith.constant 0 : index
    %6 = vector.load %arg5[%c0_5, %c0_6] : memref<256x40xf32, #tpu.memory_space<vmem>>, vector<256x40xf32>
    tpu.vector_store %arg5[%c0_5, %c0_6], %5 {strides = array<i32>} : memref<256x40xf32, #tpu.memory_space<vmem>>, vector<256x40xf32>,
    return
  }
  func.func @transform_0(%arg0: i32, %arg1: i32) -> (i32, i32) {
    %c0_i32 = arith.constant 0 : i32
    %c0_i32_0 = arith.constant 0 : i32
    return %arg0, %c0_i32 : i32, i32
  }
  func.func @transform_1(%arg0: i32, %arg1: i32) -> (i32, i32) {
    %c0_i32 = arith.constant 0 : i32
    %c0_i32_0 = arith.constant 0 : i32
    return %c0_i32, %arg1 : i32, i32
  }
  func.func @transform_2(%arg0: i32, %arg1: i32) -> (i32, i32) {
    %c0_i32 = arith.constant 0 : i32
    %c0_i32_0 = arith.constant 0 : i32
    return %c0_i32, %arg1 : i32, i32
  }
  func.func @transform_3(%arg0: i32, %arg1: i32) -> (i32, i32) {
    %c0_i32 = arith.constant 0 : i32
    return %arg0, %arg1 : i32, i32
  }
}

</mosaic_0001>

<llo_original>
// kernel: mul.874
$region0: #{mul.874}
  %s0 = inlined_call_operand.vmem [shape: f32[32768], index: 0, kind: input, shape index: {}]
  %s1 = inlined_call_operand.vmem [shape: f32[32,32,32], index: 1, kind: output, shape index: {}]
  %v2 = vld [vmem:[%s0] sm:$0xff]
  %vm3 = vcmask 261120
  %4 = vst.msk [vmem:[%s1] ss:$4 sm:$0xff] %vm3, %v2
  %s5 = scalar_lea.vmem %s0, 8
  %v6 = vld [vmem:[%s5] sm:$0xff]
  %vm7 = vcmask 261120
  %s8 = scalar_lea.vmem %s1, 32
  %9 = vst.msk [vmem:[%s8] ss:$4 sm:$0xff] %vm7, %v6
  %s10 = scalar_lea.vmem %s0, 16
  %v11 = vld [vmem:[%s10] sm:$0xff]
  %vm12 = vcmask 261120
  %s13 = scalar_lea.vmem %s1, 64
  %14 = vst.msk [vmem:[%s13] ss:$4 sm:$0xff] %vm12, %v11
  %s15 = scalar_lea.vmem %s0, 24
  %v16 = vld [vmem:[%s15] sm:$0xff]
  %vm17 = vcmask 261120
  %s18 = scalar_lea.vmem %s1, 96
  %19 = vst.msk [vmem:[%s18] ss:$4 sm:$0xff] %vm17, %v16
  %s20 = scalar_lea.vmem %s0, 32
  %v21 = vld [vmem:[%s20] sm:$0xff]
  %vm22 = vcmask 261120
  %s23 = scalar_lea.vmem %s1, 128
  %24 = vst.msk [vmem:[%s23] ss:$4 sm:$0xff] %vm22, %v21
  %s25 = scalar_lea.vmem %s0, 40
  %v26 = vld [vmem:[%s25] sm:$0xff]
  %vm27 = vcmask 261120
  %s28 = scalar_lea.vmem %s1, 160
  %29 = vst.msk [vmem:[%s28] ss:$4 sm:$0xff] %vm27, %v26
  %s30 = scalar_lea.vmem %s0, 48
  %v31 = vld [vmem:[%s30] sm:$0xff]
  %vm32 = vcmask 261120
  %s33 = scalar_lea.vmem %s1, 192
  %34 = vst.msk [vmem:[%s33] ss:$4 sm:$0xff] %vm32, %v31
  %s35 = scalar_lea.vmem %s0, 56
  %v36 = vld [vmem:[%s35] sm:$0xff]
  %vm37 = vcmask 261120
  %s38 = scalar_lea.vmem %s1, 224
  %39 = vst.msk [vmem:[%s38] ss:$4 sm:$0xff] %vm37, %v36
  %s40 = scalar_lea.vmem %s0, 64
  %v41 = vld [vmem:[%s40] sm:$0xff]
  %vm42 = vcmask 261120
  %s43 = scalar_lea.vmem %s1, 256
  %44 = vst.msk [vmem:[%s43] ss:$4 sm:$0xff] %vm42, %v41
  %s45 = scalar_lea.vmem %s0, 72
  %v46 = vld [vmem:[%s45] sm:$0xff]
  %vm47 = vcmask 261120
  %s48 = scalar_lea.vmem %s1, 288
  %49 = vst.msk [vmem:[%s48] ss:$4 sm:$0xff] %vm47, %v46
  %s50 = scalar_lea.vmem %s0, 80
  %v51 = vld [vmem:[%s50] sm:$0xff]
  %vm52 = vcmask 261120
  %s53 = scalar_lea.vmem %s1, 320
  %54 = vst.msk [vmem:[%s53] ss:$4 sm:$0xff] %vm52, %v51
  %s55 = scalar_lea.vmem %s0, 88
  %v56 = vld [vmem:[%s55] sm:$0xff]
  %vm57 = vcmask 261120
  %s58 = scalar_lea.vmem %s1, 352
  %59 = vst.msk [vmem:[%s58] ss:$4 sm:$0xff] %vm57, %v56
  %s60 = scalar_lea.vmem %s0, 96
  %v61 = vld [vmem:[%s60] sm:$0xff]
  %vm62 = vcmask 261120
  %s63 = scalar_lea.vmem %s1, 384
  %64 = vst.msk [vmem:[%s63] ss:$4 sm:$0xff] %vm62, %v61
  %s65 = scalar_lea.vmem %s0, 104
  %v66 = vld [vmem:[%s65] sm:$0xff]
  %vm67 = vcmask 261120
  %s68 = scalar_lea.vmem %s1, 416
  %69 = vst.msk [vmem:[%s68] ss:$4 sm:$0xff] %vm67, %v66
  %s70 = scalar_lea.vmem %s0, 112
  %v71 = vld [vmem:[%s70] sm:$0xff]
  %vm72 = vcmask 261120
  %s73 = scalar_lea.vmem %s1, 448
  %74 = vst.msk [vmem:[%s73] ss:$4 sm:$0xff] %vm72, %v71
  %s75 = scalar_lea.vmem %s0, 120
  %v76 = vld [vmem:[%s75] sm:$0xff]
  %vm77 = vcmask 261120
  %s78 = scalar_lea.vmem %s1, 480
  %79 = vst.msk [vmem:[%s78] ss:$4 sm:$0xff] %vm77, %v76
  %s80 = scalar_lea.vmem %s0, 128
  %v81 = vld [vmem:[%s80] sm:$0xff]
  %vm82 = vcmask 261120
  %s83 = scalar_lea.vmem %s1, 512
  %84 = vst.msk [vmem:[%s83] ss:$4 sm:$0xff] %vm82, %v81
  %s85 = scalar_lea.vmem %s0, 136
  %v86 = vld [vmem:[%s85] sm:$0xff]
  %vm87 = vcmask 261120
  %s88 = scalar_lea.vmem %s1, 544
  %89 = vst.msk [vmem:[%s88] ss:$4 sm:$0xff] %vm87, %v86
  %s90 = scalar_lea.vmem %s0, 144
  %v91 = vld [vmem:[%s90] sm:$0xff]
  %vm92 = vcmask 261120
  %s93 = scalar_lea.vmem %s1, 576
  %94 = vst.msk [vmem:[%s93] ss:$4 sm:$0xff] %vm92, %v91
  %s95 = scalar_lea.vmem %s0, 152
  %v96 = vld [vmem:[%s95] sm:$0xff]
  %vm97 = vcmask 261120
  %s98 = scalar_lea.vmem %s1, 608
  %99 = vst.msk [vmem:[%s98] ss:$4 sm:$0xff] %vm97, %v96
  %s100 = scalar_lea.vmem %s0, 160
  %v101 = vld [vmem:[%s100] sm:$0xff]
  %vm102 = vcmask 261120
  %s103 = scalar_lea.vmem %s1, 640
  %104 = vst.msk [vmem:[%s103] ss:$4 sm:$0xff] %vm102, %v101
  %s105 = scalar_lea.vmem %s0, 168
  %v106 = vld [vmem:[%s105] sm:$0xff]
  %vm107 = vcmask 261120
  %s108 = scalar_lea.vmem %s1, 672
  %109 = vst.msk [vmem:[%s108] ss:$4 sm:$0xff] %vm107, %v106
  %s110 = scalar_lea.vmem %s0, 176
  %v111 = vld [vmem:[%s110] sm:$0xff]
  %vm112 = vcmask 261120
  %s113 = scalar_lea.vmem %s1, 704
  %114 = vst.msk [vmem:[%s113] ss:$4 sm:$0xff] %vm112, %v111
  %s115 = scalar_lea.vmem %s0, 184
  %v116 = vld [vmem:[%s115] sm:$0xff]
  %vm117 = vcmask 261120
  %s118 = scalar_lea.vmem %s1, 736
  %119 = vst.msk [vmem:[%s118] ss:$4 sm:$0xff] %vm117, %v116
  %s120 = scalar_lea.vmem %s0, 192
  %v121 = vld [vmem:[%s120] sm:$0xff]
  %vm122 = vcmask 261120
  %s123 = scalar_lea.vmem %s1, 768
  %124 = vst.msk [vmem:[%s123] ss:$4 sm:$0xff] %vm122, %v121
  %s125 = scalar_lea.vmem %s0, 200
  %v126 = vld [vmem:[%s125] sm:$0xff]
  %vm127 = vcmask 261120
  %s128 = scalar_lea.vmem %s1, 800
  %129 = vst.msk [vmem:[%s128] ss:$4 sm:$0xff] %vm127, %v126
  %s130 = scalar_lea.vmem %s0, 208
  %v131 = vld [vmem:[%s130] sm:$0xff]
  %vm132 = vcmask 261120
  %s133 = scalar_lea.vmem %s1, 832
  %134 = vst.msk [vmem:[%s133] ss:$4 sm:$0xff] %vm132, %v131
  %s135 = scalar_lea.vmem %s0, 216
  %v136 = vld [vmem:[%s135] sm:$0xff]
  %vm137 = vcmask 261120
  %s138 = scalar_lea.vmem %s1, 864
  %139 = vst.msk [vmem:[%s138] ss:$4 sm:$0xff] %vm137, %v136
  %s140 = scalar_lea.vmem %s0, 224
  %v141 = vld [vmem:[%s140] sm:$0xff]
  %vm142 = vcmask 261120
  %s143 = scalar_lea.vmem %s1, 896
  %144 = vst.msk [vmem:[%s143] ss:$4 sm:$0xff] %vm142, %v141
  %s145 = scalar_lea.vmem %s0, 232
  %v146 = vld [vmem:[%s145] sm:$0xff]
  %vm147 = vcmask 261120
  %s148 = scalar_lea.vmem %s1, 928
  %149 = vst.msk [vmem:[%s148] ss:$4 sm:$0xff] %vm147, %v146
  %s150 = scalar_lea.vmem %s0, 240
  %v151 = vld [vmem:[%s150] sm:$0xff]
  %vm152 = vcmask 261120
  %s153 = scalar_lea.vmem %s1, 960
  %154 = vst.msk [vmem:[%s153] ss:$4 sm:$0xff] %vm152, %v151
  %s155 = scalar_lea.vmem %s0, 248
  %v156 = vld [vmem:[%s155] sm:$0xff]
  %vm157 = vcmask 261120
  %s158 = scalar_lea.vmem %s1, 992
  %159 = vst.msk [vmem:[%s158] ss:$4 sm:$0xff] %vm157, %v156
  %v160 = vld [vmem:[%s0] sm:$0xff]
  %161 = vrot.lane.b32.xlu0 %v160, 96
  %v162 = vpop.permute.xlu0 %161
  %vm163 = vcmask 261120
  %s164 = scalar_lea.vmem %s1, 1
  %165 = vst.msk [vmem:[%s164] ss:$4 sm:$0xff] %vm163, %v162
  %s166 = scalar_lea.vmem %s0, 8
  %v167 = vld [vmem:[%s166] sm:$0xff]
  %168 = vrot.lane.b32.xlu0 %v167, 96
  %v169 = vpop.permute.xlu0 %168
  %vm170 = vcmask 261120
  %s171 = scalar_lea.vmem %s1, 33
  %172 = vst.msk [vmem:[%s171] ss:$4 sm:$0xff] %vm170, %v169
  %s173 = scalar_lea.vmem %s0, 16
  %v174 = vld [vmem:[%s173] sm:$0xff]
  %175 = vrot.lane.b32.xlu0 %v174, 96
  %v176 = vpop.permute.xlu0 %175
  %vm177 = vcmask 261120
  %s178 = scalar_lea.vmem %s1, 65
  %179 = vst.msk [vmem:[%s178] ss:$4 sm:$0xff] %vm177, %v176
  %s180 = scalar_lea.vmem %s0, 24
  %v181 = vld [vmem:[%s180] sm:$0xff]
  %182 = vrot.lane.b32.xlu0 %v181, 96
  %v183 = vpop.permute.xlu0 %182
  %vm184 = vcmask 261120
  %s185 = scalar_lea.vmem %s1, 97
  %186 = vst.msk [vmem:[%s185] ss:$4 sm:$0xff] %vm184, %v183
  %s187 = scalar_lea.vmem %s0, 32
  %v188 = vld [vmem:[%s187] sm:$0xff]
  %189 = vrot.lane.b32.xlu0 %v188, 96
  %v190 = vpop.permute.xlu0 %189
  %vm191 = vcmask 261120
  %s192 = scalar_lea.vmem %s1, 129
  %193 = vst.msk [vmem:[%s192] ss:$4 sm:$0xff] %vm191, %v190
  %s194 = scalar_lea.vmem %s0, 40
  %v195 = vld [vmem:[%s194] sm:$0xff]
  %196 = vrot.lane.b32.xlu0 %v195, 96
  %v197 = vpop.permute.xlu0 %196
  %vm198 = vcmask 261120
  %s199 = scalar_lea.vmem %s1, 161
  %200 = vst.msk [vmem:[%s199] ss:$4 sm:$0xff] %vm198, %v197
  %s201 = scalar_lea.vmem %s0, 48
  %v202 = vld [vmem:[%s201] sm:$0xff]
  %203 = vrot.lane.b32.xlu0 %v202, 96
  %v204 = vpop.permute.xlu0 %203
  %vm205 = vcmask 261120
  %s206 = scalar_lea.vmem %s1, 193
  %207 = vst.msk [vmem:[%s206] ss:$4 sm:$0xff] %vm205, %v204
  %s208 = scalar_lea.vmem %s0, 56
  %v209 = vld [vmem:[%s208] sm:$0xff]
  %210 = vrot.lane.b32.xlu0 %v209, 96
  %v211 = vpop.permute.xlu0 %210
  %vm212 = vcmask 261120
  %s213 = scalar_lea.vmem %s1, 225
  %214 = vst.msk [vmem:[%s213] ss:$4 sm:$0xff] %vm212, %v211
  %s215 = scalar_lea.vmem %s0, 64
  %v216 = vld [vmem:[%s215] sm:$0xff]
  %217 = vrot.lane.b32.xlu0 %v216, 96
  %v218 = vpop.permute.xlu0 %217
  %vm219 = vcmask 261120
  %s220 = scalar_lea.vmem %s1, 257
  %221 = vst.msk [vmem:[%s220] ss:$4 sm:$0xff] %vm219, %v218
  %s222 = scalar_lea.vmem %s0, 72
  %v223 = vld [vmem:[%s222] sm:$0xff]
  %224 = vrot.lane.b32.xlu0 %v223, 96
  %v225 = vpop.permute.xlu0 %224
  %vm226 = vcmask 261120
  %s227 = scalar_lea.vmem %s1, 289
  %228 = vst.msk [vmem:[%s227] ss:$4 sm:$0xff] %vm226, %v225
  %s229 = scalar_lea.vmem %s0, 80
  %v230 = vld [vmem:[%s229] sm:$0xff]
  %231 = vrot.lane.b32.xlu0 %v230, 96
  %v232 = vpop.permute.xlu0 %231
  %vm233 = vcmask 261120
  %s234 = scalar_lea.vmem %s1, 321
  %235 = vst.msk [vmem:[%s234] ss:$4 sm:$0xff] %vm233, %v232
  %s236 = scalar_lea.vmem %s0, 88
  %v237 = vld [vmem:[%s236] sm:$0xff]
  %238 = vrot.lane.b32.xlu0 %v237, 96
  %v239 = vpop.permute.xlu0 %238
  %vm240 = vcmask 261120
  %s241 = scalar_lea.vmem %s1, 353
  %242 = vst.msk [vmem:[%s241] ss:$4 sm:$0xff] %vm240, %v239
  %s243 = scalar_lea.vmem %s0, 96
  %v244 = vld [vmem:[%s243] sm:$0xff]
  %245 = vrot.lane.b32.xlu0 %v244, 96
  %v246 = vpop.permute.xlu0 %245
  %vm247 = vcmask 261120
  %s248 = scalar_lea.vmem %s1, 385
  %249 = vst.msk [vmem:[%s248] ss:$4 sm:$0xff] %vm247, %v246
  %s250 = scalar_lea.vmem %s0, 104
  %v251 = vld [vmem:[%s250] sm:$0xff]
  %252 = vrot.lane.b32.xlu0 %v251, 96
  %v253 = vpop.permute.xlu0 %252
  %vm254 = vcmask 261120
  %s255 = scalar_lea.vmem %s1, 417
  %256 = vst.msk [vmem:[%s255] ss:$4 sm:$0xff] %vm254, %v253
  %s257 = scalar_lea.vmem %s0, 112
  %v258 = vld [vmem:[%s257] sm:$0xff]
  %259 = vrot.lane.b32.xlu0 %v258, 96
  %v260 = vpop.permute.xlu0 %259
  %vm261 = vcmask 261120
  %s262 = scalar_lea.vmem %s1, 449
  %263 = vst.msk [vmem:[%s262] ss:$4 sm:$0xff] %vm261, %v260
  %s264 = scalar_lea.vmem %s0, 120
  %v265 = vld [vmem:[%s264] sm:$0xff]
  %266 = vrot.lane.b32.xlu0 %v265, 96
  %v267 = vpop.permute.xlu0 %266
  %vm268 = vcmask 261120
  %s269 = scalar_lea.vmem %s1, 481
  %270 = vst.msk [vmem:[%s269] ss:$4 sm:$0xff] %vm268, %v267
  %s271 = scalar_lea.vmem %s0, 128
  %v272 = vld [vmem:[%s271] sm:$0xff]
  %273 = vrot.lane.b32.xlu0 %v272, 96
  %v274 = vpop.permute.xlu0 %273
  %vm275 = vcmask 261120
  %s276 = scalar_lea.vmem %s1, 513
  %277 = vst.msk [vmem:[%s276] ss:$4 sm:$0xff] %vm275, %v274
  %s278 = scalar_lea.vmem %s0, 136
  %v279 = vld [vmem:[%s278] sm:$0xff]
  %280 = vrot.lane.b32.xlu0 %v279, 96
  %v281 = vpop.permute.xlu0 %280
  %vm282 = vcmask 261120
  %s283 = scalar_lea.vmem %s1, 545
  %284 = vst.msk [vmem:[%s283] ss:$4 sm:$0xff] %vm282, %v281
  %s285 = scalar_lea.vmem %s0, 144
  %v286 = vld [vmem:[%s285] sm:$0xff]
  %287 = vrot.lane.b32.xlu0 %v286, 96
  %v288 = vpop.permute.xlu0 %287
  %vm289 = vcmask 261120
  %s290 = scalar_lea.vmem %s1, 577
  %291 = vst.msk [vmem:[%s290] ss:$4 sm:$0xff] %vm289, %v288
  %s292 = scalar_lea.vmem %s0, 152
  %v293 = vld [vmem:[%s292] sm:$0xff]
  %294 = vrot.lane.b32.xlu0 %v293, 96
  %v295 = vpop.permute.xlu0 %294
  %vm296 = vcmask 261120
  %s297 = scalar_lea.vmem %s1, 609
  %298 = vst.msk [vmem:[%s297] ss:$4 sm:$0xff] %vm296, %v295
  %s299 = scalar_lea.vmem %s0, 160
  %v300 = vld [vmem:[%s299] sm:$0xff]
  %301 = vrot.lane.b32.xlu0 %v300, 96
  %v302 = vpop.permute.xlu0 %301
  %vm303 = vcmask 261120
  %s304 = scalar_lea.vmem %s1, 641
  %305 = vst.msk [vmem:[%s304] ss:$4 sm:$0xff] %vm303, %v302
  %s306 = scalar_lea.vmem %s0, 168
  %v307 = vld [vmem:[%s306] sm:$0xff]
  %308 = vrot.lane.b32.xlu0 %v307, 96
  %v309 = vpop.permute.xlu0 %308
  %vm310 = vcmask 261120
  %s311 = scalar_lea.vmem %s1, 673
  %312 = vst.msk [vmem:[%s311] ss:$4 sm:$0xff] %vm310, %v309
  %s313 = scalar_lea.vmem %s0, 176
  %v314 = vld [vmem:[%s313] sm:$0xff]
  %315 = vrot.lane.b32.xlu0 %v314, 96
  %v316 = vpop.permute.xlu0 %315
  %vm317 = vcmask 261120
  %s318 = scalar_lea.vmem %s1, 705
  %319 = vst.msk [vmem:[%s318] ss:$4 sm:$0xff] %vm317, %v316
  %s320 = scalar_lea.vmem %s0, 184
  %v321 = vld [vmem:[%s320] sm:$0xff]
  %322 = vrot.lane.b32.xlu0 %v321, 96
  %v323 = vpop.permute.xlu0 %322
  %vm324 = vcmask 261120
  %s325 = scalar_lea.vmem %s1, 737
  %326 = vst.msk [vmem:[%s325] ss:$4 sm:$0xff] %vm324, %v323
  %s327 = scalar_lea.vmem %s0, 192
  %v328 = vld [vmem:[%s327] sm:$0xff]
  %329 = vrot.lane.b32.xlu0 %v328, 96
  %v330 = vpop.permute.xlu0 %329
  %vm331 = vcmask 261120
  %s332 = scalar_lea.vmem %s1, 769
  %333 = vst.msk [vmem:[%s332] ss:$4 sm:$0xff] %vm331, %v330
  %s334 = scalar_lea.vmem %s0, 200
  %v335 = vld [vmem:[%s334] sm:$0xff]
  %336 = vrot.lane.b32.xlu0 %v335, 96
  %v337 = vpop.permute.xlu0 %336
  %vm338 = vcmask 261120
  %s339 = scalar_lea.vmem %s1, 801
  %340 = vst.msk [vmem:[%s339] ss:$4 sm:$0xff] %vm338, %v337
  %s341 = scalar_lea.vmem %s0, 208
  %v342 = vld [vmem:[%s341] sm:$0xff]
  %343 = vrot.lane.b32.xlu0 %v342, 96
  %v344 = vpop.permute.xlu0 %343
  %vm345 = vcmask 261120
  %s346 = scalar_lea.vmem %s1, 833
  %347 = vst.msk [vmem:[%s346] ss:$4 sm:$0xff] %vm345, %v344
  %s348 = scalar_lea.vmem %s0, 216
  %v349 = vld [vmem:[%s348] sm:$0xff]
  %350 = vrot.lane.b32.xlu0 %v349, 96
  %v351 = vpop.permute.xlu0 %350
  %vm352 = vcmask 261120
  %s353 = scalar_lea.vmem %s1, 865
  %354 = vst.msk [vmem:[%s353] ss:$4 sm:$0xff] %vm352, %v351
  %s355 = scalar_lea.vmem %s0, 224
  %v356 = vld [vmem:[%s355] sm:$0xff]
  %357 = vrot.lane.b32.xlu0 %v356, 96
  %v358 = vpop.permute.xlu0 %357
  %vm359 = vcmask 261120
  %s360 = scalar_lea.vmem %s1, 897
  %361 = vst.msk [vmem:[%s360] ss:$4 sm:$0xff] %vm359, %v358
  %s362 = scalar_lea.vmem %s0, 232
  %v363 = vld [vmem:[%s362] sm:$0xff]
  %364 = vrot.lane.b32.xlu0 %v363, 96
  %v365 = vpop.permute.xlu0 %364
  %vm366 = vcmask 261120
  %s367 = scalar_lea.vmem %s1, 929
  %368 = vst.msk [vmem:[%s367] ss:$4 sm:$0xff] %vm366, %v365
  %s369 = scalar_lea.vmem %s0, 240
  %v370 = vld [vmem:[%s369] sm:$0xff]
  %371 = vrot.lane.b32.xlu0 %v370, 96
  %v372 = vpop.permute.xlu0 %371
  %vm373 = vcmask 261120
  %s374 = scalar_lea.vmem %s1, 961
  %375 = vst.msk [vmem:[%s374] ss:$4 sm:$0xff] %vm373, %v372
  %s376 = scalar_lea.vmem %s0, 248
  %v377 = vld [vmem:[%s376] sm:$0xff]
  %378 = vrot.lane.b32.xlu0 %v377, 96
  %v379 = vpop.permute.xlu0 %378
  %vm380 = vcmask 261120
  %s381 = scalar_lea.vmem %s1, 993
  %382 = vst.msk [vmem:[%s381] ss:$4 sm:$0xff] %vm380, %v379
  %v383 = vld [vmem:[%s0] sm:$0xff]
  %384 = vrot.lane.b32.xlu0 %v383, 64
  %v385 = vpop.permute.xlu0 %384
  %vm386 = vcmask 261120
  %s387 = scalar_lea.vmem %s1, 2
  %388 = vst.msk [vmem:[%s387] ss:$4 sm:$0xff] %vm386, %v385
  %s389 = scalar_lea.vmem %s0, 8
  %v390 = vld [vmem:[%s389] sm:$0xff]
  %391 = vrot.lane.b32.xlu0 %v390, 64
  %v392 = vpop.permute.xlu0 %391
  %vm393 = vcmask 261120
  %s394 = scalar_lea.vmem %s1, 34
  %395 = vst.msk [vmem:[%s394] ss:$4 sm:$0xff] %vm393, %v392
  %s396 = scalar_lea.vmem %s0, 16
  %v397 = vld [vmem:[%s396] sm:$0xff]
  %398 = vrot.lane.b32.xlu0 %v397, 64
  %v399 = vpop.permute.xlu0 %398
  %vm400 = vcmask 261120
  %s401 = scalar_lea.vmem %s1, 66
  %402 = vst.msk [vmem:[%s401] ss:$4 sm:$0xff] %vm400, %v399
  %s403 = scalar_lea.vmem %s0, 24
  %v404 = vld [vmem:[%s403] sm:$0xff]
  %405 = vrot.lane.b32.xlu0 %v404, 64
  %v406 = vpop.permute.xlu0 %405
  %vm407 = vcmask 261120
  %s408 = scalar_lea.vmem %s1, 98
  %409 = vst.msk [vmem:[%s408] ss:$4 sm:$0xff] %vm407, %v406
  %s410 = scalar_lea.vmem %s0, 32
  %v411 = vld [vmem:[%s410] sm:$0xff]
  %412 = vrot.lane.b32.xlu0 %v411, 64
  %v413 = vpop.permute.xlu0 %412
  %vm414 = vcmask 261120
  %s415 = scalar_lea.vmem %s1, 130
  %416 = vst.msk [vmem:[%s415] ss:$4 sm:$0xff] %vm414, %v413
  %s417 = scalar_lea.vmem %s0, 40
  %v418 = vld [vmem:[%s417] sm:$0xff]
  %419 = vrot.lane.b32.xlu0 %v418, 64
  %v420 = vpop.permute.xlu0 %419
  %vm421 = vcmask 261120
  %s422 = scalar_lea.vmem %s1, 162
  %423 = vst.msk [vmem:[%s422] ss:$4 sm:$0xff] %vm421, %v420
  %s424 = scalar_lea.vmem %s0, 48
  %v425 = vld [vmem:[%s424] sm:$0xff]
  %426 = vrot.lane.b32.xlu0 %v425, 64
  %v427 = vpop.permute.xlu0 %426
  %vm428 = vcmask 261120
  %s429 = scalar_lea.vmem %s1, 194
  %430 = vst.msk [vmem:[%s429] ss:$4 sm:$0xff] %vm428, %v427
  %s431 = scalar_lea.vmem %s0, 56
  %v432 = vld [vmem:[%s431] sm:$0xff]
  %433 = vrot.lane.b32.xlu0 %v432, 64
  %v434 = vpop.permute.xlu0 %433
  %vm435 = vcmask 261120
  %s436 = scalar_lea.vmem %s1, 226
  %437 = vst.msk [vmem:[%s436] ss:$4 sm:$0xff] %vm435, %v434
  %s438 = scalar_lea.vmem %s0, 64
  %v439 = vld [vmem:[%s438] sm:$0xff]
  %440 = vrot.lane.b32.xlu0 %v439, 64
  %v441 = vpop.permute.xlu0 %440
  %vm442 = vcmask 261120
  %s443 = scalar_lea.vmem %s1, 258
  %444 = vst.msk [vmem:[%s443] ss:$4 sm:$0xff] %vm442, %v441
  %s445 = scalar_lea.vmem %s0, 72
  %v446 = vld [vmem:[%s445] sm:$0xff]
  %447 = vrot.lane.b32.xlu0 %v446, 64
  %v448 = vpop.permute.xlu0 %447
  %vm449 = vcmask 261120
  %s450 = scalar_lea.vmem %s1, 290
  %451 = vst.msk [vmem:[%s450] ss:$4 sm:$0xff] %vm449, %v448
  %s452 = scalar_lea.vmem %s0, 80
  %v453 = vld [vmem:[%s452] sm:$0xff]
  %454 = vrot.lane.b32.xlu0 %v453, 64
  %v455 = vpop.permute.xlu0 %454
  %vm456 = vcmask 261120
  %s457 = scalar_lea.vmem %s1, 322
  %458 = vst.msk [vmem:[%s457] ss:$4 sm:$0xff] %vm456, %v455
  %s459 = scalar_lea.vmem %s0, 88
  %v460 = vld [vmem:[%s459] sm:$0xff]
  %461 = vrot.lane.b32.xlu0 %v460, 64
  %v462 = vpop.permute.xlu0 %461
  %vm463 = vcmask 261120
  %s464 = scalar_lea.vmem %s1, 354
  %465 = vst.msk [vmem:[%s464] ss:$4 sm:$0xff] %vm463, %v462
  %s466 = scalar_lea.vmem %s0, 96
  %v467 = vld [vmem:[%s466] sm:$0xff]
  %468 = vrot.lane.b32.xlu0 %v467, 64
  %v469 = vpop.permute.xlu0 %468
  %vm470 = vcmask 261120
  %s471 = scalar_lea.vmem %s1, 386
  %472 = vst.msk [vmem:[%s471] ss:$4 sm:$0xff] %vm470, %v469
  %s473 = scalar_lea.vmem %s0, 104
  %v474 = vld [vmem:[%s473] sm:$0xff]
  %475 = vrot.lane.b32.xlu0 %v474, 64
  %v476 = vpop.permute.xlu0 %475
  %vm477 = vcmask 261120
  %s478 = scalar_lea.vmem %s1, 418
  %479 = vst.msk [vmem:[%s478] ss:$4 sm:$0xff] %vm477, %v476
  %s480 = scalar_lea.vmem %s0, 112
  %v481 = vld [vmem:[%s480] sm:$0xff]
  %482 = vrot.lane.b32.xlu0 %v481, 64
  %v483 = vpop.permute.xlu0 %482
  %vm484 = vcmask 261120
  %s485 = scalar_lea.vmem %s1, 450
  %486 = vst.msk [vmem:[%s485] ss:$4 sm:$0xff] %vm484, %v483
  %s487 = scalar_lea.vmem %s0, 120
  %v488 = vld [vmem:[%s487] sm:$0xff]
  %489 = vrot.lane.b32.xlu0 %v488, 64
  %v490 = vpop.permute.xlu0 %489
  %vm491 = vcmask 261120
  %s492 = scalar_lea.vmem %s1, 482
  %493 = vst.msk [vmem:[%s492] ss:$4 sm:$0xff] %vm491, %v490
  %s494 = scalar_lea.vmem %s0, 128
  %v495 = vld [vmem:[%s494] sm:$0xff]
  %496 = vrot.lane.b32.xlu0 %v495, 64
  %v497 = vpop.permute.xlu0 %496
  %vm498 = vcmask 261120
  %s499 = scalar_lea.vmem %s1, 514
  %500 = vst.msk [vmem:[%s499] ss:$4 sm:$0xff] %vm498, %v497
  %s501 = scalar_lea.vmem %s0, 136
  %v502 = vld [vmem:[%s501] sm:$0xff]
  %503 = vrot.lane.b32.xlu0 %v502, 64
  %v504 = vpop.permute.xlu0 %503
  %vm505 = vcmask 261120
  %s506 = scalar_lea.vmem %s1, 546
  %507 = vst.msk [vmem:[%s506] ss:$4 sm:$0xff] %vm505, %v504
  %s508 = scalar_lea.vmem %s0, 144
  %v509 = vld [vmem:[%s508] sm:$0xff]
  %510 = vrot.lane.b32.xlu0 %v509, 64
  %v511 = vpop.permute.xlu0 %510
  %vm512 = vcmask 261120
  %s513 = scalar_lea.vmem %s1, 578
  %514 = vst.msk [vmem:[%s513] ss:$4 sm:$0xff] %vm512, %v511
  %s515 = scalar_lea.vmem %s0, 152
  %v516 = vld [vmem:[%s515] sm:$0xff]
  %517 = vrot.lane.b32.xlu0 %v516, 64
  %v518 = vpop.permute.xlu0 %517
  %vm519 = vcmask 261120
  %s520 = scalar_lea.vmem %s1, 610
  %521 = vst.msk [vmem:[%s520] ss:$4 sm:$0xff] %vm519, %v518
  %s522 = scalar_lea.vmem %s0, 160
  %v523 = vld [vmem:[%s522] sm:$0xff]
  %524 = vrot.lane.b32.xlu0 %v523, 64
  %v525 = vpop.permute.xlu0 %524
  %vm526 = vcmask 261120
  %s527 = scalar_lea.vmem %s1, 642
  %528 = vst.msk [vmem:[%s527] ss:$4 sm:$0xff] %vm526, %v525
  %s529 = scalar_lea.vmem %s0, 168
  %v530 = vld [vmem:[%s529] sm:$0xff]
  %531 = vrot.lane.b32.xlu0 %v530, 64
  %v532 = vpop.permute.xlu0 %531
  %vm533 = vcmask 261120
  %s534 = scalar_lea.vmem %s1, 674
  %535 = vst.msk [vmem:[%s534] ss:$4 sm:$0xff] %vm533, %v532
  %s536 = scalar_lea.vmem %s0, 176
  %v537 = vld [vmem:[%s536] sm:$0xff]
  %538 = vrot.lane.b32.xlu0 %v537, 64
  %v539 = vpop.permute.xlu0 %538
  %vm540 = vcmask 261120
  %s541 = scalar_lea.vmem %s1, 706
  %542 = vst.msk [vmem:[%s541] ss:$4 sm:$0xff] %vm540, %v539
  %s543 = scalar_lea.vmem %s0, 184
  %v544 = vld [vmem:[%s543] sm:$0xff]
  %545 = vrot.lane.b32.xlu0 %v544, 64
  %v546 = vpop.permute.xlu0 %545
  %vm547 = vcmask 261120
  %s548 = scalar_lea.vmem %s1, 738
  %549 = vst.msk [vmem:[%s548] ss:$4 sm:$0xff] %vm547, %v546
  %s550 = scalar_lea.vmem %s0, 192
  %v551 = vld [vmem:[%s550] sm:$0xff]
  %552 = vrot.lane.b32.xlu0 %v551, 64
  %v553 = vpop.permute.xlu0 %552
  %vm554 = vcmask 261120
  %s555 = scalar_lea.vmem %s1, 770
  %556 = vst.msk [vmem:[%s555] ss:$4 sm:$0xff] %vm554, %v553
  %s557 = scalar_lea.vmem %s0, 200
  %v558 = vld [vmem:[%s557] sm:$0xff]
  %559 = vrot.lane.b32.xlu0 %v558, 64
  %v560 = vpop.permute.xlu0 %559
  %vm561 = vcmask 261120
  %s562 = scalar_lea.vmem %s1, 802
  %563 = vst.msk [vmem:[%s562] ss:$4 sm:$0xff] %vm561, %v560
  %s564 = scalar_lea.vmem %s0, 208
  %v565 = vld [vmem:[%s564] sm:$0xff]
  %566 = vrot.lane.b32.xlu0 %v565, 64
  %v567 = vpop.permute.xlu0 %566
  %vm568 = vcmask 261120
  %s569 = scalar_lea.vmem %s1, 834
  %570 = vst.msk [vmem:[%s569] ss:$4 sm:$0xff] %vm568, %v567
  %s571 = scalar_lea.vmem %s0, 216
  %v572 = vld [vmem:[%s571] sm:$0xff]
  %573 = vrot.lane.b32.xlu0 %v572, 64
  %v574 = vpop.permute.xlu0 %573
  %vm575 = vcmask 261120
  %s576 = scalar_lea.vmem %s1, 866
  %577 = vst.msk [vmem:[%s576] ss:$4 sm:$0xff] %vm575, %v574
  %s578 = scalar_lea.vmem %s0, 224
  %v579 = vld [vmem:[%s578] sm:$0xff]
  %580 = vrot.lane.b32.xlu0 %v579, 64
  %v581 = vpop.permute.xlu0 %580
  %vm582 = vcmask 261120
  %s583 = scalar_lea.vmem %s1, 898
  %584 = vst.msk [vmem:[%s583] ss:$4 sm:$0xff] %vm582, %v581
  %s585 = scalar_lea.vmem %s0, 232
  %v586 = vld [vmem:[%s585] sm:$0xff]
  %587 = vrot.lane.b32.xlu0 %v586, 64
  %v588 = vpop.permute.xlu0 %587
  %vm589 = vcmask 261120
  %s590 = scalar_lea.vmem %s1, 930
  %591 = vst.msk [vmem:[%s590] ss:$4 sm:$0xff] %vm589, %v588
  %s592 = scalar_lea.vmem %s0, 240
  %v593 = vld [vmem:[%s592] sm:$0xff]
  %594 = vrot.lane.b32.xlu0 %v593, 64
  %v595 = vpop.permute.xlu0 %594
  %vm596 = vcmask 261120
  %s597 = scalar_lea.vmem %s1, 962
  %598 = vst.msk [vmem:[%s597] ss:$4 sm:$0xff] %vm596, %v595
  %s599 = scalar_lea.vmem %s0, 248
  %v600 = vld [vmem:[%s599] sm:$0xff]
  %601 = vrot.lane.b32.xlu0 %v600, 64
  %v602 = vpop.permute.xlu0 %601
  %vm603 = vcmask 261120
  %s604 = scalar_lea.vmem %s1, 994
  %605 = vst.msk [vmem:[%s604] ss:$4 sm:$0xff] %vm603, %v602
  %v606 = vld [vmem:[%s0] sm:$0xff]
  %607 = vrot.lane.b32.xlu0 %v606, 32
  %v608 = vpop.permute.xlu0 %607
  %vm609 = vcmask 261120
  %s610 = scalar_lea.vmem %s1, 3
  %611 = vst.msk [vmem:[%s610] ss:$4 sm:$0xff] %vm609, %v608
  %s612 = scalar_lea.vmem %s0, 8
  %v613 = vld [vmem:[%s612] sm:$0xff]
  %614 = vrot.lane.b32.xlu0 %v613, 32
  %v615 = vpop.permute.xlu0 %614
  %vm616 = vcmask 261120
  %s617 = scalar_lea.vmem %s1, 35
  %618 = vst.msk [vmem:[%s617] ss:$4 sm:$0xff] %vm616, %v615
  %s619 = scalar_lea.vmem %s0, 16
  %v620 = vld [vmem:[%s619] sm:$0xff]
  %621 = vrot.lane.b32.xlu0 %v620, 32
  %v622 = vpop.permute.xlu0 %621
  %vm623 = vcmask 261120
  %s624 = scalar_lea.vmem %s1, 67
  %625 = vst.msk [vmem:[%s624] ss:$4 sm:$0xff] %vm623, %v622
  %s626 = scalar_lea.vmem %s0, 24
  %v627 = vld [vmem:[%s626] sm:$0xff]
  %628 = vrot.lane.b32.xlu0 %v627, 32
  %v629 = vpop.permute.xlu0 %628
  %vm630 = vcmask 261120
  %s631 = scalar_lea.vmem %s1, 99
  %632 = vst.msk [vmem:[%s631] ss:$4 sm:$0xff] %vm630, %v629
  %s633 = scalar_lea.vmem %s0, 32
  %v634 = vld [vmem:[%s633] sm:$0xff]
  %635 = vrot.lane.b32.xlu0 %v634, 32
  %v636 = vpop.permute.xlu0 %635
  %vm637 = vcmask 261120
  %s638 = scalar_lea.vmem %s1, 131
  %639 = vst.msk [vmem:[%s638] ss:$4 sm:$0xff] %vm637, %v636
  %s640 = scalar_lea.vmem %s0, 40
  %v641 = vld [vmem:[%s640] sm:$0xff]
  %642 = vrot.lane.b32.xlu0 %v641, 32
  %v643 = vpop.permute.xlu0 %642
  %vm644 = vcmask 261120
  %s645 = scalar_lea.vmem %s1, 163
  %646 = vst.msk [vmem:[%s645] ss:$4 sm:$0xff] %vm644, %v643
  %s647 = scalar_lea.vmem %s0, 48
  %v648 = vld [vmem:[%s647] sm:$0xff]
  %649 = vrot.lane.b32.xlu0 %v648, 32
  %v650 = vpop.permute.xlu0 %649
  %vm651 = vcmask 261120
  %s652 = scalar_lea.vmem %s1, 195
  %653 = vst.msk [vmem:[%s652] ss:$4 sm:$0xff] %vm651, %v650
  %s654 = scalar_lea.vmem %s0, 56
  %v655 = vld [vmem:[%s654] sm:$0xff]
  %656 = vrot.lane.b32.xlu0 %v655, 32
  %v657 = vpop.permute.xlu0 %656
  %vm658 = vcmask 261120
  %s659 = scalar_lea.vmem %s1, 227
  %660 = vst.msk [vmem:[%s659] ss:$4 sm:$0xff] %vm658, %v657
  %s661 = scalar_lea.vmem %s0, 64
  %v662 = vld [vmem:[%s661] sm:$0xff]
  %663 = vrot.lane.b32.xlu0 %v662, 32
  %v664 = vpop.permute.xlu0 %663
  %vm665 = vcmask 261120
  %s666 = scalar_lea.vmem %s1, 259
  %667 = vst.msk [vmem:[%s666] ss:$4 sm:$0xff] %vm665, %v664
  %s668 = scalar_lea.vmem %s0, 72
  %v669 = vld [vmem:[%s668] sm:$0xff]
  %670 = vrot.lane.b32.xlu0 %v669, 32
  %v671 = vpop.permute.xlu0 %670
  %vm672 = vcmask 261120
  %s673 = scalar_lea.vmem %s1, 291
  %674 = vst.msk [vmem:[%s673] ss:$4 sm:$0xff] %vm672, %v671
  %s675 = scalar_lea.vmem %s0, 80
  %v676 = vld [vmem:[%s675] sm:$0xff]
  %677 = vrot.lane.b32.xlu0 %v676, 32
  %v678 = vpop.permute.xlu0 %677
  %vm679 = vcmask 261120
  %s680 = scalar_lea.vmem %s1, 323
  %681 = vst.msk [vmem:[%s680] ss:$4 sm:$0xff] %vm679, %v678
  %s682 = scalar_lea.vmem %s0, 88
  %v683 = vld [vmem:[%s682] sm:$0xff]
  %684 = vrot.lane.b32.xlu0 %v683, 32
  %v685 = vpop.permute.xlu0 %684
  %vm686 = vcmask 261120
  %s687 = scalar_lea.vmem %s1, 355
  %688 = vst.msk [vmem:[%s687] ss:$4 sm:$0xff] %vm686, %v685
  %s689 = scalar_lea.vmem %s0, 96
  %v690 = vld [vmem:[%s689] sm:$0xff]
  %691 = vrot.lane.b32.xlu0 %v690, 32
  %v692 = vpop.permute.xlu0 %691
  %vm693 = vcmask 261120
  %s694 = scalar_lea.vmem %s1, 387
  %695 = vst.msk [vmem:[%s694] ss:$4 sm:$0xff] %vm693, %v692
  %s696 = scalar_lea.vmem %s0, 104
  %v697 = vld [vmem:[%s696] sm:$0xff]
  %698 = vrot.lane.b32.xlu0 %v697, 32
  %v699 = vpop.permute.xlu0 %698
  %vm700 = vcmask 261120
  %s701 = scalar_lea.vmem %s1, 419
  %702 = vst.msk [vmem:[%s701] ss:$4 sm:$0xff] %vm700, %v699
  %s703 = scalar_lea.vmem %s0, 112
  %v704 = vld [vmem:[%s703] sm:$0xff]
  %705 = vrot.lane.b32.xlu0 %v704, 32
  %v706 = vpop.permute.xlu0 %705
  %vm707 = vcmask 261120
  %s708 = scalar_lea.vmem %s1, 451
  %709 = vst.msk [vmem:[%s708] ss:$4 sm:$0xff] %vm707, %v706
  %s710 = scalar_lea.vmem %s0, 120
  %v711 = vld [vmem:[%s710] sm:$0xff]
  %712 = vrot.lane.b32.xlu0 %v711, 32
  %v713 = vpop.permute.xlu0 %712
  %vm714 = vcmask 261120
  %s715 = scalar_lea.vmem %s1, 483
  %716 = vst.msk [vmem:[%s715] ss:$4 sm:$0xff] %vm714, %v713
  %s717 = scalar_lea.vmem %s0, 128
  %v718 = vld [vmem:[%s717] sm:$0xff]
  %719 = vrot.lane.b32.xlu0 %v718, 32
  %v720 = vpop.permute.xlu0 %719
  %vm721 = vcmask 261120
  %s722 = scalar_lea.vmem %s1, 515
  %723 = vst.msk [vmem:[%s722] ss:$4 sm:$0xff] %vm721, %v720
  %s724 = scalar_lea.vmem %s0, 136
  %v725 = vld [vmem:[%s724] sm:$0xff]
  %726 = vrot.lane.b32.xlu0 %v725, 32
  %v727 = vpop.permute.xlu0 %726
  %vm728 = vcmask 261120
  %s729 = scalar_lea.vmem %s1, 547
  %730 = vst.msk [vmem:[%s729] ss:$4 sm:$0xff] %vm728, %v727
  %s731 = scalar_lea.vmem %s0, 144
  %v732 = vld [vmem:[%s731] sm:$0xff]
  %733 = vrot.lane.b32.xlu0 %v732, 32
  %v734 = vpop.permute.xlu0 %733
  %vm735 = vcmask 261120
  %s736 = scalar_lea.vmem %s1, 579
  %737 = vst.msk [vmem:[%s736] ss:$4 sm:$0xff] %vm735, %v734
  %s738 = scalar_lea.vmem %s0, 152
  %v739 = vld [vmem:[%s738] sm:$0xff]
  %740 = vrot.lane.b32.xlu0 %v739, 32
  %v741 = vpop.permute.xlu0 %740
  %vm742 = vcmask 261120
  %s743 = scalar_lea.vmem %s1, 611
  %744 = vst.msk [vmem:[%s743] ss:$4 sm:$0xff] %vm742, %v741
  %s745 = scalar_lea.vmem %s0, 160
  %v746 = vld [vmem:[%s745] sm:$0xff]
  %747 = vrot.lane.b32.xlu0 %v746, 32
  %v748 = vpop.permute.xlu0 %747
  %vm749 = vcmask 261120
  %s750 = scalar_lea.vmem %s1, 643
  %751 = vst.msk [vmem:[%s750] ss:$4 sm:$0xff] %vm749, %v748
  %s752 = scalar_lea.vmem %s0, 168
  %v753 = vld [vmem:[%s752] sm:$0xff]
  %754 = vrot.lane.b32.xlu0 %v753, 32
  %v755 = vpop.permute.xlu0 %754
  %vm756 = vcmask 261120
  %s757 = scalar_lea.vmem %s1, 675
  %758 = vst.msk [vmem:[%s757] ss:$4 sm:$0xff] %vm756, %v755
  %s759 = scalar_lea.vmem %s0, 176
  %v760 = vld [vmem:[%s759] sm:$0xff]
  %761 = vrot.lane.b32.xlu0 %v760, 32
  %v762 = vpop.permute.xlu0 %761
  %vm763 = vcmask 261120
  %s764 = scalar_lea.vmem %s1, 707
  %765 = vst.msk [vmem:[%s764] ss:$4 sm:$0xff] %vm763, %v762
  %s766 = scalar_lea.vmem %s0, 184
  %v767 = vld [vmem:[%s766] sm:$0xff]
  %768 = vrot.lane.b32.xlu0 %v767, 32
  %v769 = vpop.permute.xlu0 %768
  %vm770 = vcmask 261120
  %s771 = scalar_lea.vmem %s1, 739
  %772 = vst.msk [vmem:[%s771] ss:$4 sm:$0xff] %vm770, %v769
  %s773 = scalar_lea.vmem %s0, 192
  %v774 = vld [vmem:[%s773] sm:$0xff]
  %775 = vrot.lane.b32.xlu0 %v774, 32
  %v776 = vpop.permute.xlu0 %775
  %vm777 = vcmask 261120
  %s778 = scalar_lea.vmem %s1, 771
  %779 = vst.msk [vmem:[%s778] ss:$4 sm:$0xff] %vm777, %v776
  %s780 = scalar_lea.vmem %s0, 200
  %v781 = vld [vmem:[%s780] sm:$0xff]
  %782 = vrot.lane.b32.xlu0 %v781, 32
  %v783 = vpop.permute.xlu0 %782
  %vm784 = vcmask 261120
  %s785 = scalar_lea.vmem %s1, 803
  %786 = vst.msk [vmem:[%s785] ss:$4 sm:$0xff] %vm784, %v783
  %s787 = scalar_lea.vmem %s0, 208
  %v788 = vld [vmem:[%s787] sm:$0xff]
  %789 = vrot.lane.b32.xlu0 %v788, 32
  %v790 = vpop.permute.xlu0 %789
  %vm791 = vcmask 261120
  %s792 = scalar_lea.vmem %s1, 835
  %793 = vst.msk [vmem:[%s792] ss:$4 sm:$0xff] %vm791, %v790
  %s794 = scalar_lea.vmem %s0, 216
  %v795 = vld [vmem:[%s794] sm:$0xff]
  %796 = vrot.lane.b32.xlu0 %v795, 32
  %v797 = vpop.permute.xlu0 %796
  %vm798 = vcmask 261120
  %s799 = scalar_lea.vmem %s1, 867
  %800 = vst.msk [vmem:[%s799] ss:$4 sm:$0xff] %vm798, %v797
  %s801 = scalar_lea.vmem %s0, 224
  %v802 = vld [vmem:[%s801] sm:$0xff]
  %803 = vrot.lane.b32.xlu0 %v802, 32
  %v804 = vpop.permute.xlu0 %803
  %vm805 = vcmask 261120
  %s806 = scalar_lea.vmem %s1, 899
  %807 = vst.msk [vmem:[%s806] ss:$4 sm:$0xff] %vm805, %v804
  %s808 = scalar_lea.vmem %s0, 232
  %v809 = vld [vmem:[%s808] sm:$0xff]
  %810 = vrot.lane.b32.xlu0 %v809, 32
  %v811 = vpop.permute.xlu0 %810
  %vm812 = vcmask 261120
  %s813 = scalar_lea.vmem %s1, 931
  %814 = vst.msk [vmem:[%s813] ss:$4 sm:$0xff] %vm812, %v811
  %s815 = scalar_lea.vmem %s0, 240
  %v816 = vld [vmem:[%s815] sm:$0xff]
  %817 = vrot.lane.b32.xlu0 %v816, 32
  %v818 = vpop.permute.xlu0 %817
  %vm819 = vcmask 261120
  %s820 = scalar_lea.vmem %s1, 963
  %821 = vst.msk [vmem:[%s820] ss:$4 sm:$0xff] %vm819, %v818
  %s822 = scalar_lea.vmem %s0, 248
  %v823 = vld [vmem:[%s822] sm:$0xff]
  %824 = vrot.lane.b32.xlu0 %v823, 32
  %v825 = vpop.permute.xlu0 %824
  %vm826 = vcmask 261120
  %s827 = scalar_lea.vmem %s1, 995
  %828 = vst.msk [vmem:[%s827] ss:$4 sm:$0xff] %vm826, %v825

</llo_original>
